<compile_context>
chip_gen: v7x
topology: tpu7x:2x2x1
jax: 0.10.0
libtpu: 0.0.40
codegen_flags: <defaults>
</compile_context>

<pallas_src>
import functools

import jax
import jax.numpy as jnp
from jax import lax
from jax.experimental import pallas as pl
from jax.experimental.pallas import tpu as pltpu

NUM_CONVS = 2
DIM = 32          # logical feature width
PAD = 128         # lane-padded feature width (full vreg lane dimension)
LN_EPS = 1e-5


def _round_up(x, m):
    return (x + m - 1) // m * m


# ----------------------------------------------------------------------------
# Fused processor kernel (all layers, both graphs, one launch)
# ----------------------------------------------------------------------------
def _make_processor_kernel(*, num_convs, dim, pad,
                           n_atm, n_atm_pad, e_g, e_g_pad, e_a, e_a_pad):
    f32 = jnp.float32
    bf16 = jnp.bfloat16
    inv_dim = 1.0 / float(dim)

    def onehot_bf16(cmp):
        # bool -> f32 -> bf16 (both conversions are known-good Mosaic lowerings)
        return jnp.where(cmp, 1.0, 0.0).astype(bf16)

    def kernel(srcG_c, dstG_c, dstG_r, srcA_c, dstA_c, dstA_r,   # VMEM int32 indices
               h_atm_in, h_bnd_in, h_ang_in,                     # VMEM f32 activations
               g_w_ref, g_v_ref, a_w_ref, a_v_ref,               # packed params
               h_atm_ref, h_bnd_ref, h_ang_ref):                 # outputs (state)
        lane_mask = (lax.broadcasted_iota(jnp.int32, (1, pad), 1) < dim).astype(f32)

        def layer_norm(h, gamma, beta):
            # LayerNorm over the logical `dim` features only (lanes >= dim are zero).
            mu = jnp.sum(h, axis=-1, keepdims=True) * inv_dim
            c = (h - mu) * lane_mask
            var = jnp.sum(c * c, axis=-1, keepdims=True) * inv_dim
            return c * lax.rsqrt(var + LN_EPS) * gamma + beta

        # Graph state lives in the (HBM-aliased) output refs for the whole
        # processor; one tiny VMEM->VMEM copy initializes it.
        h_atm_ref[...] = h_atm_in[...]
        h_bnd_ref[...] = h_bnd_in[...]
        h_ang_ref[...] = h_ang_in[...]

        def mgn_conv(x_ref, e_ref, src_c, dst_c, dst_r,
                     n_nodes, n_nodes_pad, n_edges, n_edges_pad,
                     w_ref, v_ref, layer):
            # ---- packed parameters for this conv / layer ----
            w = w_ref[layer]                              # [7*pad, pad] bf16
            vv = v_ref[layer]                             # [8, pad]     f32
            w1s = w[0 * pad:1 * pad]
            w1d = w[1 * pad:2 * pad]
            w1e = w[2 * pad:3 * pad]
            w2 = w[3 * pad:4 * pad]
            v1x = w[4 * pad:5 * pad]
            v1a = w[5 * pad:6 * pad]
            v2 = w[6 * pad:7 * pad]
            b1, b2 = vv[0:1], vv[1:2]
            ln_e_g, ln_e_b = vv[2:3], vv[3:4]
            c1, c2 = vv[4:5], vv[5:6]
            ln_n_g, ln_n_b = vv[6:7], vv[7:8]

            x = x_ref[...]                                # [N_pad, 128] f32
            e = e_ref[...]                                # [E_pad, 128] f32
            x_bf = x.astype(bf16)

            # ---- one-hot gather / scatter operators (consumed by the MXU) ----
            node_iota_l = lax.broadcasted_iota(jnp.int32, (n_edges_pad, n_nodes_pad), 1)
            oh_src = onehot_bf16(src_c[...] == node_iota_l)   # [E_pad, N_pad]
            oh_dst = onehot_bf16(dst_c[...] == node_iota_l)   # [E_pad, N_pad]
            node_iota_s = lax.broadcasted_iota(jnp.int32, (n_nodes_pad, n_edges_pad), 0)
            oh_agg = onehot_bf16(node_iota_s == dst_r[...])   # [N_pad, E_pad]

            # ---- edge MLP: W1 blocks applied at node level, then gathered ----
            # (gather(x) @ W1s == gather(x @ W1s); avoids K=384 padded contraction)
            xs_proj = jnp.dot(x_bf, w1s, preferred_element_type=f32)   # [N_pad,128]
            xd_proj = jnp.dot(x_bf, w1d, preferred_element_type=f32)   # [N_pad,128]
            h = (jnp.dot(oh_src, xs_proj.astype(bf16), preferred_element_type=f32)
                 + jnp.dot(oh_dst, xd_proj.astype(bf16), preferred_element_type=f32)
                 + jnp.dot(e.astype(bf16), w1e, preferred_element_type=f32)
                 + b1)
            h = jnp.maximum(h, 0.0)
            h = jnp.dot(h.astype(bf16), w2, preferred_element_type=f32) + b2
            h = layer_norm(h, ln_e_g, ln_e_b)
            # keep padding edge rows exactly zero
            e_mask = (lax.broadcasted_iota(jnp.int32, (n_edges_pad, 1), 0)
                      < n_edges).astype(f32)
            e_new = e + h * e_mask                        # residual edge update
            e_ref[...] = e_new

            # ---- aggregation ('add' scatter over dst) as one MXU pass ----
            agg = jnp.dot(oh_agg, e_new.astype(bf16),
                          preferred_element_type=f32)     # [N_pad, 128]

            # ---- node MLP ----
            g = (jnp.dot(x_bf, v1x, preferred_element_type=f32)
                 + jnp.dot(agg.astype(bf16), v1a, preferred_element_type=f32)
                 + c1)
            g = jnp.maximum(g, 0.0)
            g = jnp.dot(g.astype(bf16), v2, preferred_element_type=f32) + c2
            g = layer_norm(g, ln_n_g, ln_n_b)
            n_mask = (lax.broadcasted_iota(jnp.int32, (n_nodes_pad, 1), 0)
                      < n_nodes).astype(f32)
            x_ref[...] = x + g * n_mask                   # residual node update

        # Unrolled over layers; all activations stay on-chip between convs.
        for layer in range(num_convs):
            # angle-graph conv: nodes = h_bnd, edges = h_ang
            mgn_conv(h_bnd_ref, h_ang_ref, srcA_c, dstA_c, dstA_r,
                     e_g, e_g_pad, e_a, e_a_pad, a_w_ref, a_v_ref, layer)
            # atom-graph conv: nodes = h_atm, edges = h_bnd
            mgn_conv(h_atm_ref, h_bnd_ref, srcG_c, dstG_c, dstG_r,
                     n_atm, n_atm_pad, e_g, e_g_pad, g_w_ref, g_v_ref, layer)

    return kernel


# ----------------------------------------------------------------------------
# Parameter packing: logical [dim,*] params -> padded bf16/f32 slabs
# ----------------------------------------------------------------------------
def _pack_conv_params(p, dim=DIM, pad=PAD):
    f32 = jnp.float32

    def blk(m):  # [dim, dim] -> zero-padded [pad, pad]
        return jnp.zeros((pad, pad), f32).at[:dim, :dim].set(m)

    # rows: w1s, w1d, w1e, w2, v1x, v1a, v2  (each a [128,128] block)
    w_slab = jnp.concatenate(
        [blk(p["w1s"]), blk(p["w1d"]), blk(p["w1e"]), blk(p["w2"]),
         blk(p["v1x"]), blk(p["v1a"]), blk(p["v2"])], axis=0).astype(jnp.bfloat16)

    def padvec(v):
        return jnp.zeros((1, pad), f32).at[:, :dim].set(v)

    v_slab = jnp.concatenate(
        [padvec(p["b1"]), padvec(p["b2"]),
         padvec(p["ln_e_g"]), padvec(p["ln_e_b"]),
         padvec(p["c1"]), padvec(p["c2"]),
         padvec(p["ln_n_g"]), padvec(p["ln_n_b"])],
        axis=0)                                           # [8, 128] f32
    return w_slab, v_slab


def init_mgn_params(key, dim):
    """Deterministic PyTorch-Linear-style init for one MeshGraphNetsConv."""
    ks = jax.random.split(key, 10)

    def lin(k, fan_in, shape):
        bound = 1.0 / jnp.sqrt(float(fan_in))
        return jax.random.uniform(k, shape, jnp.float32, -bound, bound)

    return {
        "w1s": lin(ks[0], 3 * dim, (dim, dim)),
        "w1d": lin(ks[1], 3 * dim, (dim, dim)),
        "w1e": lin(ks[2], 3 * dim, (dim, dim)),
        "b1": lin(ks[3], 3 * dim, (1, dim)),
        "w2": lin(ks[4], dim, (dim, dim)),
        "b2": lin(ks[5], dim, (1, dim)),
        "ln_e_g": jnp.ones((1, dim), jnp.float32),
        "ln_e_b": jnp.zeros((1, dim), jnp.float32),
        "v1x": lin(ks[6], 2 * dim, (dim, dim)),
        "v1a": lin(ks[7], 2 * dim, (dim, dim)),
        "c1": lin(ks[8], 2 * dim, (1, dim)),
        "v2": lin(ks[9], dim, (dim, dim)),
        "c2": jnp.zeros((1, dim), jnp.float32),
        "ln_n_g": jnp.ones((1, dim), jnp.float32),
        "ln_n_b": jnp.zeros((1, dim), jnp.float32),
    }


# ----------------------------------------------------------------------------
# Processor forward: one pallas_call for the full num_convs loop
# ----------------------------------------------------------------------------
@functools.partial(jax.jit, static_argnames=("num_convs",))
def processor_forward(h_atm, h_bnd, h_ang, edge_index_G, edge_index_A,
                      g_params, a_params, num_convs):
    n_atm, dim = h_atm.shape
    e_g = h_bnd.shape[0]
    e_a = h_ang.shape[0]
    n_atm_pad = _round_up(n_atm, 8)
    e_g_pad = _round_up(e_g, 8)
    e_a_pad = _round_up(e_a, 8)

    def pad2(x, rows):
        return jnp.zeros((rows, PAD), jnp.float32).at[:x.shape[0], :x.shape[1]].set(x)

    h_atm_p = pad2(h_atm, n_atm_pad)
    h_bnd_p = pad2(h_bnd, e_g_pad)
    h_ang_p = pad2(h_ang, e_a_pad)

    g_packed = [_pack_conv_params(p, dim, PAD) for p in g_params]
    a_packed = [_pack_conv_params(p, dim, PAD) for p in a_params]
    g_w = jnp.stack([w for w, _ in g_packed])          # [num_convs, 896, 128] bf16
    g_v = jnp.stack([v for _, v in g_packed])          # [num_convs,   8, 128] f32
    a_w = jnp.stack([w for w, _ in a_packed])
    a_v = jnp.stack([v for _, v in a_packed])

    def idx_col(idx, rows):   # [E] -> zero-padded [rows, 1] int32 (VMEM column)
        return jnp.zeros((rows, 1), jnp.int32).at[:idx.shape[0], 0].set(
            idx.astype(jnp.int32))

    def idx_row(idx, cols):   # [E] -> zero-padded [1, cols] int32 (VMEM row)
        return jnp.zeros((1, cols), jnp.int32).at[0, :idx.shape[0]].set(
            idx.astype(jnp.int32))

    srcG_c = idx_col(edge_index_G[0], e_g_pad)
    dstG_c = idx_col(edge_index_G[1], e_g_pad)
    dstG_r = idx_row(edge_index_G[1], e_g_pad)
    srcA_c = idx_col(edge_index_A[0], e_a_pad)
    dstA_c = idx_col(edge_index_A[1], e_a_pad)
    dstA_r = idx_row(edge_index_A[1], e_a_pad)

    kernel = _make_processor_kernel(
        num_convs=num_convs, dim=dim, pad=PAD,
        n_atm=n_atm, n_atm_pad=n_atm_pad,
        e_g=e_g, e_g_pad=e_g_pad, e_a=e_a, e_a_pad=e_a_pad)

    vmem = pl.BlockSpec(memory_space=pltpu.MemorySpace.VMEM)

    h_atm_o, h_bnd_o, h_ang_o = pl.pallas_call(
        kernel,
        out_shape=(
            jax.ShapeDtypeStruct((n_atm_pad, PAD), jnp.float32),
            jax.ShapeDtypeStruct((e_g_pad, PAD), jnp.float32),
            jax.ShapeDtypeStruct((e_a_pad, PAD), jnp.float32),
        ),
        in_specs=[vmem] * 13,
        out_specs=(vmem, vmem, vmem),
        # h_atm_p / h_bnd_p / h_ang_p (operands 6,7,8) alias the three outputs:
        # no duplicate HBM output buffers, in-place state update semantics.
        input_output_aliases={6: 0, 7: 1, 8: 2},
    )(srcG_c, dstG_c, dstG_r, srcA_c, dstA_c, dstA_r,
      h_atm_p, h_bnd_p, h_ang_p, g_w, g_v, a_w, a_v)

    return (h_atm_o[:n_atm, :dim], h_bnd_o[:e_g, :dim], h_ang_o[:e_a, :dim])


# ----------------------------------------------------------------------------
# Pure-JAX f32 reference (same assumed MGN formulation)
# ----------------------------------------------------------------------------
def _reference_layernorm(h, gamma, beta):
    mu = jnp.mean(h, axis=-1, keepdims=True)
    var = jnp.mean((h - mu) ** 2, axis=-1, keepdims=True)
    return (h - mu) * lax.rsqrt(var + LN_EPS) * gamma + beta


def _reference_mgn_conv(x, edge_index, e, p):
    src, dst = edge_index[0], edge_index[1]
    h = x[src] @ p["w1s"] + x[dst] @ p["w1d"] + e @ p["w1e"] + p["b1"]
    h = jnp.maximum(h, 0.0)
    h = h @ p["w2"] + p["b2"]
    e_new = e + _reference_layernorm(h, p["ln_e_g"], p["ln_e_b"])
    agg = jax.ops.segment_sum(e_new, dst, num_segments=x.shape[0])
    g = x @ p["v1x"] + agg @ p["v1a"] + p["c1"]
    g = jnp.maximum(g, 0.0)
    g = g @ p["v2"] + p["c2"]
    x_new = x + _reference_layernorm(g, p["ln_n_g"], p["ln_n_b"])
    return x_new, e_new


def _reference_processor(h_atm, h_bnd, h_ang, eiG, eiA, g_params, a_params, num_convs):
    for i in range(num_convs):
        h_bnd, h_ang = _reference_mgn_conv(h_bnd, eiA, h_ang, a_params[i])
        h_atm, h_bnd = _reference_mgn_conv(h_atm, eiG, h_bnd, g_params[i])
    return h_atm, h_bnd, h_ang


if __name__ == "__main__":
    key = jax.random.PRNGKey(0)
    k_data, k_gparams, k_aparams = jax.random.split(key, 3)

    N_ATM, E_G, E_A = 16, 32, 48  # atoms, bonds (= angle-graph nodes), angles

    kd = jax.random.split(k_data, 5)
    h_atm = jax.random.normal(kd[0], (N_ATM, DIM), jnp.float32)
    h_bnd = jax.random.normal(kd[1], (E_G, DIM), jnp.float32)
    h_ang = jax.random.normal(kd[2], (E_A, DIM), jnp.float32)
    edge_index_G = jax.random.randint(kd[3], (2, E_G), 0, N_ATM, jnp.int32)
    edge_index_A = jax.random.randint(kd[4], (2, E_A), 0, E_G, jnp.int32)

    g_params = tuple(init_mgn_params(k, DIM) for k in jax.random.split(k_gparams, NUM_CONVS))
    a_params = tuple(init_mgn_params(k, DIM) for k in jax.random.split(k_aparams, NUM_CONVS))

    out = processor_forward(h_atm, h_bnd, h_ang, edge_index_G, edge_index_A,
                            g_params, a_params, num_convs=NUM_CONVS)
    out = jax.block_until_ready(out)

    ref = _reference_processor(h_atm, h_bnd, h_ang, edge_index_G, edge_index_A,
                               g_params, a_params, NUM_CONVS)
    ref = jax.block_until_ready(ref)
    # bf16 MXU matmuls vs f32 reference -> loose absolute tolerance (smoke test).
    for o, r in zip(out, ref):
        assert bool(jnp.max(jnp.abs(o - r)) < 0.5), "kernel mismatch vs f32 reference"

    print("KERNEL_OK")
</pallas_src>

<mosaic_0001>
module attributes {stable_mosaic.version = 11 : i64} {
  func.func @kernel(%arg0: memref<32x1xi32, #tpu.memory_space<vmem>>, %arg1: memref<32x1xi32, #tpu.memory_space<vmem>>, %arg2: memref<1x32xi32, #tpu.memory_space<vmem>>, %arg3: memref<48x1xi32, #tpu.memory_space<vmem>>, %arg4: memref<48x1xi32, #tpu.memory_space<vmem>>, %arg5: memref<1x48xi32, #tpu.memory_space<vmem>>, %arg6: memref<16x128xf32, #tpu.memory_space<vmem>>, %arg7: memref<32x128xf32, #tpu.memory_space<vmem>>, %arg8: memref<48x128xf32, #tpu.memory_space<vmem>>, %arg9: memref<2x896x128xbf16, #tpu.memory_space<vmem>>, %arg10: memref<2x8x128xf32, #tpu.memory_space<vmem>>, %arg11: memref<2x896x128xbf16, #tpu.memory_space<vmem>>, %arg12: memref<2x8x128xf32, #tpu.memory_space<vmem>>, %arg13: memref<16x128xf32, #tpu.memory_space<vmem>>, %arg14: memref<32x128xf32, #tpu.memory_space<vmem>>, %arg15: memref<48x128xf32, #tpu.memory_space<vmem>>) attributes {dimension_semantics = [], scalar_prefetch = 0 : i64, scratch_operands = 0 : i64, tpu.core_type = #tpu.core_type<tc>} {
    %0 = tpu.iota {dimensions = array<i32: 1>} : vector<1x128xi32>
    %c32_i32 = arith.constant 32 : i32
    %1 = vector.broadcast %c32_i32 : i32 to vector<1x128xi32>
    %2 = arith.cmpi slt, %0, %1 : vector<1x128xi32>
    %3 = arith.extui %2 : vector<1x128xi1> to vector<1x128xi32>
    %4 = arith.sitofp %3 : vector<1x128xi32> to vector<1x128xf32>
    %c0 = arith.constant 0 : index
    %c0_0 = arith.constant 0 : index
    %5 = vector.load %arg6[%c0, %c0_0] : memref<16x128xf32, #tpu.memory_space<vmem>>, vector<16x128xf32>
    %c0_1 = arith.constant 0 : index
    %c0_2 = arith.constant 0 : index
    %6 = vector.load %arg13[%c0_1, %c0_2] : memref<16x128xf32, #tpu.memory_space<vmem>>, vector<16x128xf32>
    tpu.vector_store %arg13[%c0_1, %c0_2], %5 {strides = array<i32>} : memref<16x128xf32, #tpu.memory_space<vmem>>, vector<16x128xf32>,
    %c0_3 = arith.constant 0 : index
    %c0_4 = arith.constant 0 : index
    %7 = vector.load %arg7[%c0_3, %c0_4] : memref<32x128xf32, #tpu.memory_space<vmem>>, vector<32x128xf32>
    %c0_5 = arith.constant 0 : index
    %c0_6 = arith.constant 0 : index
    %8 = vector.load %arg14[%c0_5, %c0_6] : memref<32x128xf32, #tpu.memory_space<vmem>>, vector<32x128xf32>
    tpu.vector_store %arg14[%c0_5, %c0_6], %7 {strides = array<i32>} : memref<32x128xf32, #tpu.memory_space<vmem>>, vector<32x128xf32>,
    %c0_7 = arith.constant 0 : index
    %c0_8 = arith.constant 0 : index
    %9 = vector.load %arg8[%c0_7, %c0_8] : memref<48x128xf32, #tpu.memory_space<vmem>>, vector<48x128xf32>
    %c0_9 = arith.constant 0 : index
    %c0_10 = arith.constant 0 : index
    %10 = vector.load %arg15[%c0_9, %c0_10] : memref<48x128xf32, #tpu.memory_space<vmem>>, vector<48x128xf32>
    tpu.vector_store %arg15[%c0_9, %c0_10], %9 {strides = array<i32>} : memref<48x128xf32, #tpu.memory_space<vmem>>, vector<48x128xf32>,
    %c0_11 = arith.constant 0 : index
    %c0_12 = arith.constant 0 : index
    %c0_13 = arith.constant 0 : index
    %11 = vector.load %arg11[%c0_11, %c0_12, %c0_13] : memref<2x896x128xbf16, #tpu.memory_space<vmem>>, vector<1x896x128xbf16>
    %12 = vector.shape_cast %11 : vector<1x896x128xbf16> to vector<896x128xbf16>
    %c0_14 = arith.constant 0 : index
    %c0_15 = arith.constant 0 : index
    %c0_16 = arith.constant 0 : index
    %13 = vector.load %arg12[%c0_14, %c0_15, %c0_16] : memref<2x8x128xf32, #tpu.memory_space<vmem>>, vector<1x8x128xf32>
    %14 = vector.shape_cast %13 : vector<1x8x128xf32> to vector<8x128xf32>
    %15 = vector.extract_strided_slice %12 {offsets = [0, 0], sizes = [128, 128], strides = [1, 1]} : vector<896x128xbf16> to vector<128x128xbf16>
    %16 = vector.extract_strided_slice %12 {offsets = [128, 0], sizes = [128, 128], strides = [1, 1]} : vector<896x128xbf16> to vector<128x128xbf16>
    %17 = vector.extract_strided_slice %12 {offsets = [256, 0], sizes = [128, 128], strides = [1, 1]} : vector<896x128xbf16> to vector<128x128xbf16>
    %18 = vector.extract_strided_slice %12 {offsets = [384, 0], sizes = [128, 128], strides = [1, 1]} : vector<896x128xbf16> to vector<128x128xbf16>
    %19 = vector.extract_strided_slice %12 {offsets = [512, 0], sizes = [128, 128], strides = [1, 1]} : vector<896x128xbf16> to vector<128x128xbf16>
    %20 = vector.extract_strided_slice %12 {offsets = [640, 0], sizes = [128, 128], strides = [1, 1]} : vector<896x128xbf16> to vector<128x128xbf16>
    %21 = vector.extract_strided_slice %12 {offsets = [768, 0], sizes = [128, 128], strides = [1, 1]} : vector<896x128xbf16> to vector<128x128xbf16>
    %22 = vector.extract_strided_slice %14 {offsets = [0, 0], sizes = [1, 128], strides = [1, 1]} : vector<8x128xf32> to vector<1x128xf32>
    %23 = vector.extract_strided_slice %14 {offsets = [1, 0], sizes = [1, 128], strides = [1, 1]} : vector<8x128xf32> to vector<1x128xf32>
    %24 = vector.extract_strided_slice %14 {offsets = [2, 0], sizes = [1, 128], strides = [1, 1]} : vector<8x128xf32> to vector<1x128xf32>
    %25 = vector.extract_strided_slice %14 {offsets = [3, 0], sizes = [1, 128], strides = [1, 1]} : vector<8x128xf32> to vector<1x128xf32>
    %26 = vector.extract_strided_slice %14 {offsets = [4, 0], sizes = [1, 128], strides = [1, 1]} : vector<8x128xf32> to vector<1x128xf32>
    %27 = vector.extract_strided_slice %14 {offsets = [5, 0], sizes = [1, 128], strides = [1, 1]} : vector<8x128xf32> to vector<1x128xf32>
    %28 = vector.extract_strided_slice %14 {offsets = [6, 0], sizes = [1, 128], strides = [1, 1]} : vector<8x128xf32> to vector<1x128xf32>
    %29 = vector.extract_strided_slice %14 {offsets = [7, 0], sizes = [1, 128], strides = [1, 1]} : vector<8x128xf32> to vector<1x128xf32>
    %c0_17 = arith.constant 0 : index
    %c0_18 = arith.constant 0 : index
    %30 = vector.load %arg14[%c0_17, %c0_18] : memref<32x128xf32, #tpu.memory_space<vmem>>, vector<32x128xf32>
    %c0_19 = arith.constant 0 : index
    %c0_20 = arith.constant 0 : index
    %31 = vector.load %arg15[%c0_19, %c0_20] : memref<48x128xf32, #tpu.memory_space<vmem>>, vector<48x128xf32>
    %32 = arith.truncf %30 : vector<32x128xf32> to vector<32x128xbf16>
    %33 = tpu.iota {dimensions = array<i32: 1>} : vector<48x32xi32>
    %c0_21 = arith.constant 0 : index
    %c0_22 = arith.constant 0 : index
    %34 = vector.load %arg3[%c0_21, %c0_22] : memref<48x1xi32, #tpu.memory_space<vmem>>, vector<48x1xi32>
    %35 = vector.broadcast %34 : vector<48x1xi32> to vector<48x32xi32>
    %36 = arith.cmpi eq, %35, %33 : vector<48x32xi32>
    %cst = arith.constant 1.000000e+00 : f32
    %cst_23 = arith.constant 0.000000e+00 : f32
    %37 = vector.broadcast %cst : f32 to vector<48x32xf32>
    %38 = vector.broadcast %cst_23 : f32 to vector<48x32xf32>
    %39 = arith.select %36, %37, %38 : vector<48x32xi1>, vector<48x32xf32>
    %40 = arith.truncf %39 : vector<48x32xf32> to vector<48x32xbf16>
    %c0_24 = arith.constant 0 : index
    %c0_25 = arith.constant 0 : index
    %41 = vector.load %arg4[%c0_24, %c0_25] : memref<48x1xi32, #tpu.memory_space<vmem>>, vector<48x1xi32>
    %42 = vector.broadcast %41 : vector<48x1xi32> to vector<48x32xi32>
    %43 = arith.cmpi eq, %42, %33 : vector<48x32xi32>
    %cst_26 = arith.constant 1.000000e+00 : f32
    %cst_27 = arith.constant 0.000000e+00 : f32
    %44 = vector.broadcast %cst_26 : f32 to vector<48x32xf32>
    %45 = vector.broadcast %cst_27 : f32 to vector<48x32xf32>
    %46 = arith.select %43, %44, %45 : vector<48x32xi1>, vector<48x32xf32>
    %47 = arith.truncf %46 : vector<48x32xf32> to vector<48x32xbf16>
    %48 = tpu.iota {dimensions = array<i32: 0>} : vector<32x48xi32>
    %c0_28 = arith.constant 0 : index
    %c0_29 = arith.constant 0 : index
    %49 = vector.load %arg5[%c0_28, %c0_29] : memref<1x48xi32, #tpu.memory_space<vmem>>, vector<1x48xi32>
    %50 = vector.broadcast %49 : vector<1x48xi32> to vector<32x48xi32>
    %51 = arith.cmpi eq, %48, %50 : vector<32x48xi32>
    %cst_30 = arith.constant 1.000000e+00 : f32
    %cst_31 = arith.constant 0.000000e+00 : f32
    %52 = vector.broadcast %cst_30 : f32 to vector<32x48xf32>
    %53 = vector.broadcast %cst_31 : f32 to vector<32x48xf32>
    %54 = arith.select %51, %52, %53 : vector<32x48xi1>, vector<32x48xf32>
    %55 = arith.truncf %54 : vector<32x48xf32> to vector<32x48xbf16>
    %cst_32 = arith.constant dense<0.000000e+00> : vector<32x128xf32>
    %56 = tpu.matmul %32, %15, %cst_32 {dimension_numbers = #tpu.dot_dimension_numbers<[1], [0], [0], [1], [0, 0, 1, 1], [], []>} : vector<32x128xbf16>, vector<128x128xbf16>, vector<32x128xf32> -> vector<32x128xf32>
    %cst_33 = arith.constant dense<0.000000e+00> : vector<32x128xf32>
    %57 = tpu.matmul %32, %16, %cst_33 {dimension_numbers = #tpu.dot_dimension_numbers<[1], [0], [0], [1], [0, 0, 1, 1], [], []>} : vector<32x128xbf16>, vector<128x128xbf16>, vector<32x128xf32> -> vector<32x128xf32>
    %58 = arith.truncf %56 : vector<32x128xf32> to vector<32x128xbf16>
    %cst_34 = arith.constant dense<0.000000e+00> : vector<48x128xf32>
    %59 = tpu.matmul %40, %58, %cst_34 {dimension_numbers = #tpu.dot_dimension_numbers<[1], [0], [0], [1], [0, 0, 1, 1], [], []>} : vector<48x32xbf16>, vector<32x128xbf16>, vector<48x128xf32> -> vector<48x128xf32>
    %60 = arith.truncf %57 : vector<32x128xf32> to vector<32x128xbf16>
    %cst_35 = arith.constant dense<0.000000e+00> : vector<48x128xf32>
    %61 = tpu.matmul %47, %60, %cst_35 {dimension_numbers = #tpu.dot_dimension_numbers<[1], [0], [0], [1], [0, 0, 1, 1], [], []>} : vector<48x32xbf16>, vector<32x128xbf16>, vector<48x128xf32> -> vector<48x128xf32>
    %62 = arith.addf %59, %61 : vector<48x128xf32>
    %63 = arith.truncf %31 : vector<48x128xf32> to vector<48x128xbf16>
    %cst_36 = arith.constant dense<0.000000e+00> : vector<48x128xf32>
    %64 = tpu.matmul %63, %17, %cst_36 {dimension_numbers = #tpu.dot_dimension_numbers<[1], [0], [0], [1], [0, 0, 1, 1], [], []>} : vector<48x128xbf16>, vector<128x128xbf16>, vector<48x128xf32> -> vector<48x128xf32>
    %65 = arith.addf %62, %64 : vector<48x128xf32>
    %66 = vector.broadcast %22 : vector<1x128xf32> to vector<48x128xf32>
    %67 = arith.addf %65, %66 : vector<48x128xf32>
    %cst_37 = arith.constant 0.000000e+00 : f32
    %68 = vector.broadcast %cst_37 : f32 to vector<48x128xf32>
    %69 = arith.maximumf %67, %68 : vector<48x128xf32>
    %70 = arith.truncf %69 : vector<48x128xf32> to vector<48x128xbf16>
    %cst_38 = arith.constant dense<0.000000e+00> : vector<48x128xf32>
    %71 = tpu.matmul %70, %18, %cst_38 {dimension_numbers = #tpu.dot_dimension_numbers<[1], [0], [0], [1], [0, 0, 1, 1], [], []>} : vector<48x128xbf16>, vector<128x128xbf16>, vector<48x128xf32> -> vector<48x128xf32>
    %72 = vector.broadcast %23 : vector<1x128xf32> to vector<48x128xf32>
    %73 = arith.addf %71, %72 : vector<48x128xf32>
    %cst_39 = arith.constant dense<0.000000e+00> : vector<48xf32>
    %74 = vector.multi_reduction <add>, %73, %cst_39 [1] : vector<48x128xf32> to vector<48xf32>
    %75 = vector.shape_cast %74 : vector<48xf32> to vector<48x1xf32>
    %cst_40 = arith.constant 3.125000e-02 : f32
    %76 = vector.broadcast %cst_40 : f32 to vector<48x1xf32>
    %77 = arith.mulf %75, %76 : vector<48x1xf32>
    %78 = vector.broadcast %77 : vector<48x1xf32> to vector<48x128xf32>
    %79 = arith.subf %73, %78 : vector<48x128xf32>
    %80 = vector.broadcast %4 : vector<1x128xf32> to vector<48x128xf32>
    %81 = arith.mulf %79, %80 : vector<48x128xf32>
    %82 = arith.mulf %81, %81 : vector<48x128xf32>
    %cst_41 = arith.constant dense<0.000000e+00> : vector<48xf32>
    %83 = vector.multi_reduction <add>, %82, %cst_41 [1] : vector<48x128xf32> to vector<48xf32>
    %84 = vector.shape_cast %83 : vector<48xf32> to vector<48x1xf32>
    %cst_42 = arith.constant 3.125000e-02 : f32
    %85 = vector.broadcast %cst_42 : f32 to vector<48x1xf32>
    %86 = arith.mulf %84, %85 : vector<48x1xf32>
    %cst_43 = arith.constant 9.99999974E-6 : f32
    %87 = vector.broadcast %cst_43 : f32 to vector<48x1xf32>
    %88 = arith.addf %86, %87 : vector<48x1xf32>
    %89 = math.rsqrt %88 : vector<48x1xf32>
    %90 = vector.broadcast %89 : vector<48x1xf32> to vector<48x128xf32>
    %91 = arith.mulf %81, %90 : vector<48x128xf32>
    %92 = vector.broadcast %24 : vector<1x128xf32> to vector<48x128xf32>
    %93 = arith.mulf %91, %92 : vector<48x128xf32>
    %94 = vector.broadcast %25 : vector<1x128xf32> to vector<48x128xf32>
    %95 = arith.addf %93, %94 : vector<48x128xf32>
    %96 = tpu.iota {dimensions = array<i32: 0>} : vector<48x1xi32>
    %c48_i32 = arith.constant 48 : i32
    %97 = vector.broadcast %c48_i32 : i32 to vector<48x1xi32>
    %98 = arith.cmpi slt, %96, %97 : vector<48x1xi32>
    %99 = arith.extui %98 : vector<48x1xi1> to vector<48x1xi32>
    %100 = arith.sitofp %99 : vector<48x1xi32> to vector<48x1xf32>
    %101 = vector.broadcast %100 : vector<48x1xf32> to vector<48x128xf32>
    %102 = arith.mulf %95, %101 : vector<48x128xf32>
    %103 = arith.addf %31, %102 : vector<48x128xf32>
    %c0_44 = arith.constant 0 : index
    %c0_45 = arith.constant 0 : index
    %104 = vector.load %arg15[%c0_44, %c0_45] : memref<48x128xf32, #tpu.memory_space<vmem>>, vector<48x128xf32>
    tpu.vector_store %arg15[%c0_44, %c0_45], %103 {strides = array<i32>} : memref<48x128xf32, #tpu.memory_space<vmem>>, vector<48x128xf32>,
    %105 = arith.truncf %103 : vector<48x128xf32> to vector<48x128xbf16>
    %cst_46 = arith.constant dense<0.000000e+00> : vector<32x128xf32>
    %106 = tpu.matmul %55, %105, %cst_46 {dimension_numbers = #tpu.dot_dimension_numbers<[1], [0], [0], [1], [0, 0, 1, 1], [], []>} : vector<32x48xbf16>, vector<48x128xbf16>, vector<32x128xf32> -> vector<32x128xf32>
    %cst_47 = arith.constant dense<0.000000e+00> : vector<32x128xf32>
    %107 = tpu.matmul %32, %19, %cst_47 {dimension_numbers = #tpu.dot_dimension_numbers<[1], [0], [0], [1], [0, 0, 1, 1], [], []>} : vector<32x128xbf16>, vector<128x128xbf16>, vector<32x128xf32> -> vector<32x128xf32>
    %108 = arith.truncf %106 : vector<32x128xf32> to vector<32x128xbf16>
    %cst_48 = arith.constant dense<0.000000e+00> : vector<32x128xf32>
    %109 = tpu.matmul %108, %20, %cst_48 {dimension_numbers = #tpu.dot_dimension_numbers<[1], [0], [0], [1], [0, 0, 1, 1], [], []>} : vector<32x128xbf16>, vector<128x128xbf16>, vector<32x128xf32> -> vector<32x128xf32>
    %110 = arith.addf %107, %109 : vector<32x128xf32>
    %111 = vector.broadcast %26 : vector<1x128xf32> to vector<32x128xf32>
    %112 = arith.addf %110, %111 : vector<32x128xf32>
    %cst_49 = arith.constant 0.000000e+00 : f32
    %113 = vector.broadcast %cst_49 : f32 to vector<32x128xf32>
    %114 = arith.maximumf %112, %113 : vector<32x128xf32>
    %115 = arith.truncf %114 : vector<32x128xf32> to vector<32x128xbf16>
    %cst_50 = arith.constant dense<0.000000e+00> : vector<32x128xf32>
    %116 = tpu.matmul %115, %21, %cst_50 {dimension_numbers = #tpu.dot_dimension_numbers<[1], [0], [0], [1], [0, 0, 1, 1], [], []>} : vector<32x128xbf16>, vector<128x128xbf16>, vector<32x128xf32> -> vector<32x128xf32>
    %117 = vector.broadcast %27 : vector<1x128xf32> to vector<32x128xf32>
    %118 = arith.addf %116, %117 : vector<32x128xf32>
    %cst_51 = arith.constant dense<0.000000e+00> : vector<32xf32>
    %119 = vector.multi_reduction <add>, %118, %cst_51 [1] : vector<32x128xf32> to vector<32xf32>
    %120 = vector.shape_cast %119 : vector<32xf32> to vector<32x1xf32>
    %cst_52 = arith.constant 3.125000e-02 : f32
    %121 = vector.broadcast %cst_52 : f32 to vector<32x1xf32>
    %122 = arith.mulf %120, %121 : vector<32x1xf32>
    %123 = vector.broadcast %122 : vector<32x1xf32> to vector<32x128xf32>
    %124 = arith.subf %118, %123 : vector<32x128xf32>
    %125 = vector.broadcast %4 : vector<1x128xf32> to vector<32x128xf32>
    %126 = arith.mulf %124, %125 : vector<32x128xf32>
    %127 = arith.mulf %126, %126 : vector<32x128xf32>
    %cst_53 = arith.constant dense<0.000000e+00> : vector<32xf32>
    %128 = vector.multi_reduction <add>, %127, %cst_53 [1] : vector<32x128xf32> to vector<32xf32>
    %129 = vector.shape_cast %128 : vector<32xf32> to vector<32x1xf32>
    %cst_54 = arith.constant 3.125000e-02 : f32
    %130 = vector.broadcast %cst_54 : f32 to vector<32x1xf32>
    %131 = arith.mulf %129, %130 : vector<32x1xf32>
    %cst_55 = arith.constant 9.99999974E-6 : f32
    %132 = vector.broadcast %cst_55 : f32 to vector<32x1xf32>
    %133 = arith.addf %131, %132 : vector<32x1xf32>
    %134 = math.rsqrt %133 : vector<32x1xf32>
    %135 = vector.broadcast %134 : vector<32x1xf32> to vector<32x128xf32>
    %136 = arith.mulf %126, %135 : vector<32x128xf32>
    %137 = vector.broadcast %28 : vector<1x128xf32> to vector<32x128xf32>
    %138 = arith.mulf %136, %137 : vector<32x128xf32>
    %139 = vector.broadcast %29 : vector<1x128xf32> to vector<32x128xf32>
    %140 = arith.addf %138, %139 : vector<32x128xf32>
    %141 = tpu.iota {dimensions = array<i32: 0>} : vector<32x1xi32>
    %c32_i32_56 = arith.constant 32 : i32
    %142 = vector.broadcast %c32_i32_56 : i32 to vector<32x1xi32>
    %143 = arith.cmpi slt, %141, %142 : vector<32x1xi32>
    %144 = arith.extui %143 : vector<32x1xi1> to vector<32x1xi32>
    %145 = arith.sitofp %144 : vector<32x1xi32> to vector<32x1xf32>
    %146 = vector.broadcast %145 : vector<32x1xf32> to vector<32x128xf32>
    %147 = arith.mulf %140, %146 : vector<32x128xf32>
    %148 = arith.addf %30, %147 : vector<32x128xf32>
    %c0_57 = arith.constant 0 : index
    %c0_58 = arith.constant 0 : index
    %149 = vector.load %arg14[%c0_57, %c0_58] : memref<32x128xf32, #tpu.memory_space<vmem>>, vector<32x128xf32>
    tpu.vector_store %arg14[%c0_57, %c0_58], %148 {strides = array<i32>} : memref<32x128xf32, #tpu.memory_space<vmem>>, vector<32x128xf32>,
    %c0_59 = arith.constant 0 : index
    %c0_60 = arith.constant 0 : index
    %c0_61 = arith.constant 0 : index
    %150 = vector.load %arg9[%c0_59, %c0_60, %c0_61] : memref<2x896x128xbf16, #tpu.memory_space<vmem>>, vector<1x896x128xbf16>
    %151 = vector.shape_cast %150 : vector<1x896x128xbf16> to vector<896x128xbf16>
    %c0_62 = arith.constant 0 : index
    %c0_63 = arith.constant 0 : index
    %c0_64 = arith.constant 0 : index
    %152 = vector.load %arg10[%c0_62, %c0_63, %c0_64] : memref<2x8x128xf32, #tpu.memory_space<vmem>>, vector<1x8x128xf32>
    %153 = vector.shape_cast %152 : vector<1x8x128xf32> to vector<8x128xf32>
    %154 = vector.extract_strided_slice %151 {offsets = [0, 0], sizes = [128, 128], strides = [1, 1]} : vector<896x128xbf16> to vector<128x128xbf16>
    %155 = vector.extract_strided_slice %151 {offsets = [128, 0], sizes = [128, 128], strides = [1, 1]} : vector<896x128xbf16> to vector<128x128xbf16>
    %156 = vector.extract_strided_slice %151 {offsets = [256, 0], sizes = [128, 128], strides = [1, 1]} : vector<896x128xbf16> to vector<128x128xbf16>
    %157 = vector.extract_strided_slice %151 {offsets = [384, 0], sizes = [128, 128], strides = [1, 1]} : vector<896x128xbf16> to vector<128x128xbf16>
    %158 = vector.extract_strided_slice %151 {offsets = [512, 0], sizes = [128, 128], strides = [1, 1]} : vector<896x128xbf16> to vector<128x128xbf16>
    %159 = vector.extract_strided_slice %151 {offsets = [640, 0], sizes = [128, 128], strides = [1, 1]} : vector<896x128xbf16> to vector<128x128xbf16>
    %160 = vector.extract_strided_slice %151 {offsets = [768, 0], sizes = [128, 128], strides = [1, 1]} : vector<896x128xbf16> to vector<128x128xbf16>
    %161 = vector.extract_strided_slice %153 {offsets = [0, 0], sizes = [1, 128], strides = [1, 1]} : vector<8x128xf32> to vector<1x128xf32>
    %162 = vector.extract_strided_slice %153 {offsets = [1, 0], sizes = [1, 128], strides = [1, 1]} : vector<8x128xf32> to vector<1x128xf32>
    %163 = vector.extract_strided_slice %153 {offsets = [2, 0], sizes = [1, 128], strides = [1, 1]} : vector<8x128xf32> to vector<1x128xf32>
    %164 = vector.extract_strided_slice %153 {offsets = [3, 0], sizes = [1, 128], strides = [1, 1]} : vector<8x128xf32> to vector<1x128xf32>
    %165 = vector.extract_strided_slice %153 {offsets = [4, 0], sizes = [1, 128], strides = [1, 1]} : vector<8x128xf32> to vector<1x128xf32>
    %166 = vector.extract_strided_slice %153 {offsets = [5, 0], sizes = [1, 128], strides = [1, 1]} : vector<8x128xf32> to vector<1x128xf32>
    %167 = vector.extract_strided_slice %153 {offsets = [6, 0], sizes = [1, 128], strides = [1, 1]} : vector<8x128xf32> to vector<1x128xf32>
    %168 = vector.extract_strided_slice %153 {offsets = [7, 0], sizes = [1, 128], strides = [1, 1]} : vector<8x128xf32> to vector<1x128xf32>
    %c0_65 = arith.constant 0 : index
    %c0_66 = arith.constant 0 : index
    %169 = vector.load %arg13[%c0_65, %c0_66] : memref<16x128xf32, #tpu.memory_space<vmem>>, vector<16x128xf32>
    %c0_67 = arith.constant 0 : index
    %c0_68 = arith.constant 0 : index
    %170 = vector.load %arg14[%c0_67, %c0_68] : memref<32x128xf32, #tpu.memory_space<vmem>>, vector<32x128xf32>
    %171 = arith.truncf %169 : vector<16x128xf32> to vector<16x128xbf16>
    %172 = tpu.iota {dimensions = array<i32: 1>} : vector<32x16xi32>
    %c0_69 = arith.constant 0 : index
    %c0_70 = arith.constant 0 : index
    %173 = vector.load %arg0[%c0_69, %c0_70] : memref<32x1xi32, #tpu.memory_space<vmem>>, vector<32x1xi32>
    %174 = vector.broadcast %173 : vector<32x1xi32> to vector<32x16xi32>
    %175 = arith.cmpi eq, %174, %172 : vector<32x16xi32>
    %cst_71 = arith.constant 1.000000e+00 : f32
    %cst_72 = arith.constant 0.000000e+00 : f32
    %176 = vector.broadcast %cst_71 : f32 to vector<32x16xf32>
    %177 = vector.broadcast %cst_72 : f32 to vector<32x16xf32>
    %178 = arith.select %175, %176, %177 : vector<32x16xi1>, vector<32x16xf32>
    %179 = arith.truncf %178 : vector<32x16xf32> to vector<32x16xbf16>
    %c0_73 = arith.constant 0 : index
    %c0_74 = arith.constant 0 : index
    %180 = vector.load %arg1[%c0_73, %c0_74] : memref<32x1xi32, #tpu.memory_space<vmem>>, vector<32x1xi32>
    %181 = vector.broadcast %180 : vector<32x1xi32> to vector<32x16xi32>
    %182 = arith.cmpi eq, %181, %172 : vector<32x16xi32>
    %cst_75 = arith.constant 1.000000e+00 : f32
    %cst_76 = arith.constant 0.000000e+00 : f32
    %183 = vector.broadcast %cst_75 : f32 to vector<32x16xf32>
    %184 = vector.broadcast %cst_76 : f32 to vector<32x16xf32>
    %185 = arith.select %182, %183, %184 : vector<32x16xi1>, vector<32x16xf32>
    %186 = arith.truncf %185 : vector<32x16xf32> to vector<32x16xbf16>
    %187 = tpu.iota {dimensions = array<i32: 0>} : vector<16x32xi32>
    %c0_77 = arith.constant 0 : index
    %c0_78 = arith.constant 0 : index
    %188 = vector.load %arg2[%c0_77, %c0_78] : memref<1x32xi32, #tpu.memory_space<vmem>>, vector<1x32xi32>
    %189 = vector.broadcast %188 : vector<1x32xi32> to vector<16x32xi32>
    %190 = arith.cmpi eq, %187, %189 : vector<16x32xi32>
    %cst_79 = arith.constant 1.000000e+00 : f32
    %cst_80 = arith.constant 0.000000e+00 : f32
    %191 = vector.broadcast %cst_79 : f32 to vector<16x32xf32>
    %192 = vector.broadcast %cst_80 : f32 to vector<16x32xf32>
    %193 = arith.select %190, %191, %192 : vector<16x32xi1>, vector<16x32xf32>
    %194 = arith.truncf %193 : vector<16x32xf32> to vector<16x32xbf16>
    %cst_81 = arith.constant dense<0.000000e+00> : vector<16x128xf32>
    %195 = tpu.matmul %171, %154, %cst_81 {dimension_numbers = #tpu.dot_dimension_numbers<[1], [0], [0], [1], [0, 0, 1, 1], [], []>} : vector<16x128xbf16>, vector<128x128xbf16>, vector<16x128xf32> -> vector<16x128xf32>
    %cst_82 = arith.constant dense<0.000000e+00> : vector<16x128xf32>
    %196 = tpu.matmul %171, %155, %cst_82 {dimension_numbers = #tpu.dot_dimension_numbers<[1], [0], [0], [1], [0, 0, 1, 1], [], []>} : vector<16x128xbf16>, vector<128x128xbf16>, vector<16x128xf32> -> vector<16x128xf32>
    %197 = arith.truncf %195 : vector<16x128xf32> to vector<16x128xbf16>
    %cst_83 = arith.constant dense<0.000000e+00> : vector<32x128xf32>
    %198 = tpu.matmul %179, %197, %cst_83 {dimension_numbers = #tpu.dot_dimension_numbers<[1], [0], [0], [1], [0, 0, 1, 1], [], []>} : vector<32x16xbf16>, vector<16x128xbf16>, vector<32x128xf32> -> vector<32x128xf32>
    %199 = arith.truncf %196 : vector<16x128xf32> to vector<16x128xbf16>
    %cst_84 = arith.constant dense<0.000000e+00> : vector<32x128xf32>
    %200 = tpu.matmul %186, %199, %cst_84 {dimension_numbers = #tpu.dot_dimension_numbers<[1], [0], [0], [1], [0, 0, 1, 1], [], []>} : vector<32x16xbf16>, vector<16x128xbf16>, vector<32x128xf32> -> vector<32x128xf32>
    %201 = arith.addf %198, %200 : vector<32x128xf32>
    %202 = arith.truncf %170 : vector<32x128xf32> to vector<32x128xbf16>
    %cst_85 = arith.constant dense<0.000000e+00> : vector<32x128xf32>
    %203 = tpu.matmul %202, %156, %cst_85 {dimension_numbers = #tpu.dot_dimension_numbers<[1], [0], [0], [1], [0, 0, 1, 1], [], []>} : vector<32x128xbf16>, vector<128x128xbf16>, vector<32x128xf32> -> vector<32x128xf32>
    %204 = arith.addf %201, %203 : vector<32x128xf32>
    %205 = vector.broadcast %161 : vector<1x128xf32> to vector<32x128xf32>
    %206 = arith.addf %204, %205 : vector<32x128xf32>
    %cst_86 = arith.constant 0.000000e+00 : f32
    %207 = vector.broadcast %cst_86 : f32 to vector<32x128xf32>
    %208 = arith.maximumf %206, %207 : vector<32x128xf32>
    %209 = arith.truncf %208 : vector<32x128xf32> to vector<32x128xbf16>
    %cst_87 = arith.constant dense<0.000000e+00> : vector<32x128xf32>
    %210 = tpu.matmul %209, %157, %cst_87 {dimension_numbers = #tpu.dot_dimension_numbers<[1], [0], [0], [1], [0, 0, 1, 1], [], []>} : vector<32x128xbf16>, vector<128x128xbf16>, vector<32x128xf32> -> vector<32x128xf32>
    %211 = vector.broadcast %162 : vector<1x128xf32> to vector<32x128xf32>
    %212 = arith.addf %210, %211 : vector<32x128xf32>
    %cst_88 = arith.constant dense<0.000000e+00> : vector<32xf32>
    %213 = vector.multi_reduction <add>, %212, %cst_88 [1] : vector<32x128xf32> to vector<32xf32>
    %214 = vector.shape_cast %213 : vector<32xf32> to vector<32x1xf32>
    %cst_89 = arith.constant 3.125000e-02 : f32
    %215 = vector.broadcast %cst_89 : f32 to vector<32x1xf32>
    %216 = arith.mulf %214, %215 : vector<32x1xf32>
    %217 = vector.broadcast %216 : vector<32x1xf32> to vector<32x128xf32>
    %218 = arith.subf %212, %217 : vector<32x128xf32>
    %219 = vector.broadcast %4 : vector<1x128xf32> to vector<32x128xf32>
    %220 = arith.mulf %218, %219 : vector<32x128xf32>
    %221 = arith.mulf %220, %220 : vector<32x128xf32>
    %cst_90 = arith.constant dense<0.000000e+00> : vector<32xf32>
    %222 = vector.multi_reduction <add>, %221, %cst_90 [1] : vector<32x128xf32> to vector<32xf32>
    %223 = vector.shape_cast %222 : vector<32xf32> to vector<32x1xf32>
    %cst_91 = arith.constant 3.125000e-02 : f32
    %224 = vector.broadcast %cst_91 : f32 to vector<32x1xf32>
    %225 = arith.mulf %223, %224 : vector<32x1xf32>
    %cst_92 = arith.constant 9.99999974E-6 : f32
    %226 = vector.broadcast %cst_92 : f32 to vector<32x1xf32>
    %227 = arith.addf %225, %226 : vector<32x1xf32>
    %228 = math.rsqrt %227 : vector<32x1xf32>
    %229 = vector.broadcast %228 : vector<32x1xf32> to vector<32x128xf32>
    %230 = arith.mulf %220, %229 : vector<32x128xf32>
    %231 = vector.broadcast %163 : vector<1x128xf32> to vector<32x128xf32>
    %232 = arith.mulf %230, %231 : vector<32x128xf32>
    %233 = vector.broadcast %164 : vector<1x128xf32> to vector<32x128xf32>
    %234 = arith.addf %232, %233 : vector<32x128xf32>
    %235 = tpu.iota {dimensions = array<i32: 0>} : vector<32x1xi32>
    %c32_i32_93 = arith.constant 32 : i32
    %236 = vector.broadcast %c32_i32_93 : i32 to vector<32x1xi32>
    %237 = arith.cmpi slt, %235, %236 : vector<32x1xi32>
    %238 = arith.extui %237 : vector<32x1xi1> to vector<32x1xi32>
    %239 = arith.sitofp %238 : vector<32x1xi32> to vector<32x1xf32>
    %240 = vector.broadcast %239 : vector<32x1xf32> to vector<32x128xf32>
    %241 = arith.mulf %234, %240 : vector<32x128xf32>
    %242 = arith.addf %170, %241 : vector<32x128xf32>
    %c0_94 = arith.constant 0 : index
    %c0_95 = arith.constant 0 : index
    %243 = vector.load %arg14[%c0_94, %c0_95] : memref<32x128xf32, #tpu.memory_space<vmem>>, vector<32x128xf32>
    tpu.vector_store %arg14[%c0_94, %c0_95], %242 {strides = array<i32>} : memref<32x128xf32, #tpu.memory_space<vmem>>, vector<32x128xf32>,
    %244 = arith.truncf %242 : vector<32x128xf32> to vector<32x128xbf16>
    %cst_96 = arith.constant dense<0.000000e+00> : vector<16x128xf32>
    %245 = tpu.matmul %194, %244, %cst_96 {dimension_numbers = #tpu.dot_dimension_numbers<[1], [0], [0], [1], [0, 0, 1, 1], [], []>} : vector<16x32xbf16>, vector<32x128xbf16>, vector<16x128xf32> -> vector<16x128xf32>
    %cst_97 = arith.constant dense<0.000000e+00> : vector<16x128xf32>
    %246 = tpu.matmul %171, %158, %cst_97 {dimension_numbers = #tpu.dot_dimension_numbers<[1], [0], [0], [1], [0, 0, 1, 1], [], []>} : vector<16x128xbf16>, vector<128x128xbf16>, vector<16x128xf32> -> vector<16x128xf32>
    %247 = arith.truncf %245 : vector<16x128xf32> to vector<16x128xbf16>
    %cst_98 = arith.constant dense<0.000000e+00> : vector<16x128xf32>
    %248 = tpu.matmul %247, %159, %cst_98 {dimension_numbers = #tpu.dot_dimension_numbers<[1], [0], [0], [1], [0, 0, 1, 1], [], []>} : vector<16x128xbf16>, vector<128x128xbf16>, vector<16x128xf32> -> vector<16x128xf32>
    %249 = arith.addf %246, %248 : vector<16x128xf32>
    %250 = vector.broadcast %165 : vector<1x128xf32> to vector<16x128xf32>
    %251 = arith.addf %249, %250 : vector<16x128xf32>
    %cst_99 = arith.constant 0.000000e+00 : f32
    %252 = vector.broadcast %cst_99 : f32 to vector<16x128xf32>
    %253 = arith.maximumf %251, %252 : vector<16x128xf32>
    %254 = arith.truncf %253 : vector<16x128xf32> to vector<16x128xbf16>
    %cst_100 = arith.constant dense<0.000000e+00> : vector<16x128xf32>
    %255 = tpu.matmul %254, %160, %cst_100 {dimension_numbers = #tpu.dot_dimension_numbers<[1], [0], [0], [1], [0, 0, 1, 1], [], []>} : vector<16x128xbf16>, vector<128x128xbf16>, vector<16x128xf32> -> vector<16x128xf32>
    %256 = vector.broadcast %166 : vector<1x128xf32> to vector<16x128xf32>
    %257 = arith.addf %255, %256 : vector<16x128xf32>
    %cst_101 = arith.constant dense<0.000000e+00> : vector<16xf32>
    %258 = vector.multi_reduction <add>, %257, %cst_101 [1] : vector<16x128xf32> to vector<16xf32>
    %259 = vector.shape_cast %258 : vector<16xf32> to vector<16x1xf32>
    %cst_102 = arith.constant 3.125000e-02 : f32
    %260 = vector.broadcast %cst_102 : f32 to vector<16x1xf32>
    %261 = arith.mulf %259, %260 : vector<16x1xf32>
    %262 = vector.broadcast %261 : vector<16x1xf32> to vector<16x128xf32>
    %263 = arith.subf %257, %262 : vector<16x128xf32>
    %264 = vector.broadcast %4 : vector<1x128xf32> to vector<16x128xf32>
    %265 = arith.mulf %263, %264 : vector<16x128xf32>
    %266 = arith.mulf %265, %265 : vector<16x128xf32>
    %cst_103 = arith.constant dense<0.000000e+00> : vector<16xf32>
    %267 = vector.multi_reduction <add>, %266, %cst_103 [1] : vector<16x128xf32> to vector<16xf32>
    %268 = vector.shape_cast %267 : vector<16xf32> to vector<16x1xf32>
    %cst_104 = arith.constant 3.125000e-02 : f32
    %269 = vector.broadcast %cst_104 : f32 to vector<16x1xf32>
    %270 = arith.mulf %268, %269 : vector<16x1xf32>
    %cst_105 = arith.constant 9.99999974E-6 : f32
    %271 = vector.broadcast %cst_105 : f32 to vector<16x1xf32>
    %272 = arith.addf %270, %271 : vector<16x1xf32>
    %273 = math.rsqrt %272 : vector<16x1xf32>
    %274 = vector.broadcast %273 : vector<16x1xf32> to vector<16x128xf32>
    %275 = arith.mulf %265, %274 : vector<16x128xf32>
    %276 = vector.broadcast %167 : vector<1x128xf32> to vector<16x128xf32>
    %277 = arith.mulf %275, %276 : vector<16x128xf32>
    %278 = vector.broadcast %168 : vector<1x128xf32> to vector<16x128xf32>
    %279 = arith.addf %277, %278 : vector<16x128xf32>
    %280 = tpu.iota {dimensions = array<i32: 0>} : vector<16x1xi32>
    %c16_i32 = arith.constant 16 : i32
    %281 = vector.broadcast %c16_i32 : i32 to vector<16x1xi32>
    %282 = arith.cmpi slt, %280, %281 : vector<16x1xi32>
    %283 = arith.extui %282 : vector<16x1xi1> to vector<16x1xi32>
    %284 = arith.sitofp %283 : vector<16x1xi32> to vector<16x1xf32>
    %285 = vector.broadcast %284 : vector<16x1xf32> to vector<16x128xf32>
    %286 = arith.mulf %279, %285 : vector<16x128xf32>
    %287 = arith.addf %169, %286 : vector<16x128xf32>
    %c0_106 = arith.constant 0 : index
    %c0_107 = arith.constant 0 : index
    %288 = vector.load %arg13[%c0_106, %c0_107] : memref<16x128xf32, #tpu.memory_space<vmem>>, vector<16x128xf32>
    tpu.vector_store %arg13[%c0_106, %c0_107], %287 {strides = array<i32>} : memref<16x128xf32, #tpu.memory_space<vmem>>, vector<16x128xf32>,
    %c1 = arith.constant 1 : index
    %c0_108 = arith.constant 0 : index
    %c0_109 = arith.constant 0 : index
    %289 = vector.load %arg11[%c1, %c0_108, %c0_109] : memref<2x896x128xbf16, #tpu.memory_space<vmem>>, vector<1x896x128xbf16>
    %290 = vector.shape_cast %289 : vector<1x896x128xbf16> to vector<896x128xbf16>
    %c1_110 = arith.constant 1 : index
    %c0_111 = arith.constant 0 : index
    %c0_112 = arith.constant 0 : index
    %291 = vector.load %arg12[%c1_110, %c0_111, %c0_112] : memref<2x8x128xf32, #tpu.memory_space<vmem>>, vector<1x8x128xf32>
    %292 = vector.shape_cast %291 : vector<1x8x128xf32> to vector<8x128xf32>
    %293 = vector.extract_strided_slice %290 {offsets = [0, 0], sizes = [128, 128], strides = [1, 1]} : vector<896x128xbf16> to vector<128x128xbf16>
    %294 = vector.extract_strided_slice %290 {offsets = [128, 0], sizes = [128, 128], strides = [1, 1]} : vector<896x128xbf16> to vector<128x128xbf16>
    %295 = vector.extract_strided_slice %290 {offsets = [256, 0], sizes = [128, 128], strides = [1, 1]} : vector<896x128xbf16> to vector<128x128xbf16>
    %296 = vector.extract_strided_slice %290 {offsets = [384, 0], sizes = [128, 128], strides = [1, 1]} : vector<896x128xbf16> to vector<128x128xbf16>
    %297 = vector.extract_strided_slice %290 {offsets = [512, 0], sizes = [128, 128], strides = [1, 1]} : vector<896x128xbf16> to vector<128x128xbf16>
    %298 = vector.extract_strided_slice %290 {offsets = [640, 0], sizes = [128, 128], strides = [1, 1]} : vector<896x128xbf16> to vector<128x128xbf16>
    %299 = vector.extract_strided_slice %290 {offsets = [768, 0], sizes = [128, 128], strides = [1, 1]} : vector<896x128xbf16> to vector<128x128xbf16>
    %300 = vector.extract_strided_slice %292 {offsets = [0, 0], sizes = [1, 128], strides = [1, 1]} : vector<8x128xf32> to vector<1x128xf32>
    %301 = vector.extract_strided_slice %292 {offsets = [1, 0], sizes = [1, 128], strides = [1, 1]} : vector<8x128xf32> to vector<1x128xf32>
    %302 = vector.extract_strided_slice %292 {offsets = [2, 0], sizes = [1, 128], strides = [1, 1]} : vector<8x128xf32> to vector<1x128xf32>
    %303 = vector.extract_strided_slice %292 {offsets = [3, 0], sizes = [1, 128], strides = [1, 1]} : vector<8x128xf32> to vector<1x128xf32>
    %304 = vector.extract_strided_slice %292 {offsets = [4, 0], sizes = [1, 128], strides = [1, 1]} : vector<8x128xf32> to vector<1x128xf32>
    %305 = vector.extract_strided_slice %292 {offsets = [5, 0], sizes = [1, 128], strides = [1, 1]} : vector<8x128xf32> to vector<1x128xf32>
    %306 = vector.extract_strided_slice %292 {offsets = [6, 0], sizes = [1, 128], strides = [1, 1]} : vector<8x128xf32> to vector<1x128xf32>
    %307 = vector.extract_strided_slice %292 {offsets = [7, 0], sizes = [1, 128], strides = [1, 1]} : vector<8x128xf32> to vector<1x128xf32>
    %c0_113 = arith.constant 0 : index
    %c0_114 = arith.constant 0 : index
    %308 = vector.load %arg14[%c0_113, %c0_114] : memref<32x128xf32, #tpu.memory_space<vmem>>, vector<32x128xf32>
    %c0_115 = arith.constant 0 : index
    %c0_116 = arith.constant 0 : index
    %309 = vector.load %arg15[%c0_115, %c0_116] : memref<48x128xf32, #tpu.memory_space<vmem>>, vector<48x128xf32>
    %310 = arith.truncf %308 : vector<32x128xf32> to vector<32x128xbf16>
    %311 = tpu.iota {dimensions = array<i32: 1>} : vector<48x32xi32>
    %c0_117 = arith.constant 0 : index
    %c0_118 = arith.constant 0 : index
    %312 = vector.load %arg3[%c0_117, %c0_118] : memref<48x1xi32, #tpu.memory_space<vmem>>, vector<48x1xi32>
    %313 = vector.broadcast %312 : vector<48x1xi32> to vector<48x32xi32>
    %314 = arith.cmpi eq, %313, %311 : vector<48x32xi32>
    %cst_119 = arith.constant 1.000000e+00 : f32
    %cst_120 = arith.constant 0.000000e+00 : f32
    %315 = vector.broadcast %cst_119 : f32 to vector<48x32xf32>
    %316 = vector.broadcast %cst_120 : f32 to vector<48x32xf32>
    %317 = arith.select %314, %315, %316 : vector<48x32xi1>, vector<48x32xf32>
    %318 = arith.truncf %317 : vector<48x32xf32> to vector<48x32xbf16>
    %c0_121 = arith.constant 0 : index
    %c0_122 = arith.constant 0 : index
    %319 = vector.load %arg4[%c0_121, %c0_122] : memref<48x1xi32, #tpu.memory_space<vmem>>, vector<48x1xi32>
    %320 = vector.broadcast %319 : vector<48x1xi32> to vector<48x32xi32>
    %321 = arith.cmpi eq, %320, %311 : vector<48x32xi32>
    %cst_123 = arith.constant 1.000000e+00 : f32
    %cst_124 = arith.constant 0.000000e+00 : f32
    %322 = vector.broadcast %cst_123 : f32 to vector<48x32xf32>
    %323 = vector.broadcast %cst_124 : f32 to vector<48x32xf32>
    %324 = arith.select %321, %322, %323 : vector<48x32xi1>, vector<48x32xf32>
    %325 = arith.truncf %324 : vector<48x32xf32> to vector<48x32xbf16>
    %326 = tpu.iota {dimensions = array<i32: 0>} : vector<32x48xi32>
    %c0_125 = arith.constant 0 : index
    %c0_126 = arith.constant 0 : index
    %327 = vector.load %arg5[%c0_125, %c0_126] : memref<1x48xi32, #tpu.memory_space<vmem>>, vector<1x48xi32>
    %328 = vector.broadcast %327 : vector<1x48xi32> to vector<32x48xi32>
    %329 = arith.cmpi eq, %326, %328 : vector<32x48xi32>
    %cst_127 = arith.constant 1.000000e+00 : f32
    %cst_128 = arith.constant 0.000000e+00 : f32
    %330 = vector.broadcast %cst_127 : f32 to vector<32x48xf32>
    %331 = vector.broadcast %cst_128 : f32 to vector<32x48xf32>
    %332 = arith.select %329, %330, %331 : vector<32x48xi1>, vector<32x48xf32>
    %333 = arith.truncf %332 : vector<32x48xf32> to vector<32x48xbf16>
    %cst_129 = arith.constant dense<0.000000e+00> : vector<32x128xf32>
    %334 = tpu.matmul %310, %293, %cst_129 {dimension_numbers = #tpu.dot_dimension_numbers<[1], [0], [0], [1], [0, 0, 1, 1], [], []>} : vector<32x128xbf16>, vector<128x128xbf16>, vector<32x128xf32> -> vector<32x128xf32>
    %cst_130 = arith.constant dense<0.000000e+00> : vector<32x128xf32>
    %335 = tpu.matmul %310, %294, %cst_130 {dimension_numbers = #tpu.dot_dimension_numbers<[1], [0], [0], [1], [0, 0, 1, 1], [], []>} : vector<32x128xbf16>, vector<128x128xbf16>, vector<32x128xf32> -> vector<32x128xf32>
    %336 = arith.truncf %334 : vector<32x128xf32> to vector<32x128xbf16>
    %cst_131 = arith.constant dense<0.000000e+00> : vector<48x128xf32>
    %337 = tpu.matmul %318, %336, %cst_131 {dimension_numbers = #tpu.dot_dimension_numbers<[1], [0], [0], [1], [0, 0, 1, 1], [], []>} : vector<48x32xbf16>, vector<32x128xbf16>, vector<48x128xf32> -> vector<48x128xf32>
    %338 = arith.truncf %335 : vector<32x128xf32> to vector<32x128xbf16>
    %cst_132 = arith.constant dense<0.000000e+00> : vector<48x128xf32>
    %339 = tpu.matmul %325, %338, %cst_132 {dimension_numbers = #tpu.dot_dimension_numbers<[1], [0], [0], [1], [0, 0, 1, 1], [], []>} : vector<48x32xbf16>, vector<32x128xbf16>, vector<48x128xf32> -> vector<48x128xf32>
    %340 = arith.addf %337, %339 : vector<48x128xf32>
    %341 = arith.truncf %309 : vector<48x128xf32> to vector<48x128xbf16>
    %cst_133 = arith.constant dense<0.000000e+00> : vector<48x128xf32>
    %342 = tpu.matmul %341, %295, %cst_133 {dimension_numbers = #tpu.dot_dimension_numbers<[1], [0], [0], [1], [0, 0, 1, 1], [], []>} : vector<48x128xbf16>, vector<128x128xbf16>, vector<48x128xf32> -> vector<48x128xf32>
    %343 = arith.addf %340, %342 : vector<48x128xf32>
    %344 = vector.broadcast %300 : vector<1x128xf32> to vector<48x128xf32>
    %345 = arith.addf %343, %344 : vector<48x128xf32>
    %cst_134 = arith.constant 0.000000e+00 : f32
    %346 = vector.broadcast %cst_134 : f32 to vector<48x128xf32>
    %347 = arith.maximumf %345, %346 : vector<48x128xf32>
    %348 = arith.truncf %347 : vector<48x128xf32> to vector<48x128xbf16>
    %cst_135 = arith.constant dense<0.000000e+00> : vector<48x128xf32>
    %349 = tpu.matmul %348, %296, %cst_135 {dimension_numbers = #tpu.dot_dimension_numbers<[1], [0], [0], [1], [0, 0, 1, 1], [], []>} : vector<48x128xbf16>, vector<128x128xbf16>, vector<48x128xf32> -> vector<48x128xf32>
    %350 = vector.broadcast %301 : vector<1x128xf32> to vector<48x128xf32>
    %351 = arith.addf %349, %350 : vector<48x128xf32>
    %cst_136 = arith.constant dense<0.000000e+00> : vector<48xf32>
    %352 = vector.multi_reduction <add>, %351, %cst_136 [1] : vector<48x128xf32> to vector<48xf32>
    %353 = vector.shape_cast %352 : vector<48xf32> to vector<48x1xf32>
    %cst_137 = arith.constant 3.125000e-02 : f32
    %354 = vector.broadcast %cst_137 : f32 to vector<48x1xf32>
    %355 = arith.mulf %353, %354 : vector<48x1xf32>
    %356 = vector.broadcast %355 : vector<48x1xf32> to vector<48x128xf32>
    %357 = arith.subf %351, %356 : vector<48x128xf32>
    %358 = vector.broadcast %4 : vector<1x128xf32> to vector<48x128xf32>
    %359 = arith.mulf %357, %358 : vector<48x128xf32>
    %360 = arith.mulf %359, %359 : vector<48x128xf32>
    %cst_138 = arith.constant dense<0.000000e+00> : vector<48xf32>
    %361 = vector.multi_reduction <add>, %360, %cst_138 [1] : vector<48x128xf32> to vector<48xf32>
    %362 = vector.shape_cast %361 : vector<48xf32> to vector<48x1xf32>
    %cst_139 = arith.constant 3.125000e-02 : f32
    %363 = vector.broadcast %cst_139 : f32 to vector<48x1xf32>
    %364 = arith.mulf %362, %363 : vector<48x1xf32>
    %cst_140 = arith.constant 9.99999974E-6 : f32
    %365 = vector.broadcast %cst_140 : f32 to vector<48x1xf32>
    %366 = arith.addf %364, %365 : vector<48x1xf32>
    %367 = math.rsqrt %366 : vector<48x1xf32>
    %368 = vector.broadcast %367 : vector<48x1xf32> to vector<48x128xf32>
    %369 = arith.mulf %359, %368 : vector<48x128xf32>
    %370 = vector.broadcast %302 : vector<1x128xf32> to vector<48x128xf32>
    %371 = arith.mulf %369, %370 : vector<48x128xf32>
    %372 = vector.broadcast %303 : vector<1x128xf32> to vector<48x128xf32>
    %373 = arith.addf %371, %372 : vector<48x128xf32>
    %374 = tpu.iota {dimensions = array<i32: 0>} : vector<48x1xi32>
    %c48_i32_141 = arith.constant 48 : i32
    %375 = vector.broadcast %c48_i32_141 : i32 to vector<48x1xi32>
    %376 = arith.cmpi slt, %374, %375 : vector<48x1xi32>
    %377 = arith.extui %376 : vector<48x1xi1> to vector<48x1xi32>
    %378 = arith.sitofp %377 : vector<48x1xi32> to vector<48x1xf32>
    %379 = vector.broadcast %378 : vector<48x1xf32> to vector<48x128xf32>
    %380 = arith.mulf %373, %379 : vector<48x128xf32>
    %381 = arith.addf %309, %380 : vector<48x128xf32>
    %c0_142 = arith.constant 0 : index
    %c0_143 = arith.constant 0 : index
    %382 = vector.load %arg15[%c0_142, %c0_143] : memref<48x128xf32, #tpu.memory_space<vmem>>, vector<48x128xf32>
    tpu.vector_store %arg15[%c0_142, %c0_143], %381 {strides = array<i32>} : memref<48x128xf32, #tpu.memory_space<vmem>>, vector<48x128xf32>,
    %383 = arith.truncf %381 : vector<48x128xf32> to vector<48x128xbf16>
    %cst_144 = arith.constant dense<0.000000e+00> : vector<32x128xf32>
    %384 = tpu.matmul %333, %383, %cst_144 {dimension_numbers = #tpu.dot_dimension_numbers<[1], [0], [0], [1], [0, 0, 1, 1], [], []>} : vector<32x48xbf16>, vector<48x128xbf16>, vector<32x128xf32> -> vector<32x128xf32>
    %cst_145 = arith.constant dense<0.000000e+00> : vector<32x128xf32>
    %385 = tpu.matmul %310, %297, %cst_145 {dimension_numbers = #tpu.dot_dimension_numbers<[1], [0], [0], [1], [0, 0, 1, 1], [], []>} : vector<32x128xbf16>, vector<128x128xbf16>, vector<32x128xf32> -> vector<32x128xf32>
    %386 = arith.truncf %384 : vector<32x128xf32> to vector<32x128xbf16>
    %cst_146 = arith.constant dense<0.000000e+00> : vector<32x128xf32>
    %387 = tpu.matmul %386, %298, %cst_146 {dimension_numbers = #tpu.dot_dimension_numbers<[1], [0], [0], [1], [0, 0, 1, 1], [], []>} : vector<32x128xbf16>, vector<128x128xbf16>, vector<32x128xf32> -> vector<32x128xf32>
    %388 = arith.addf %385, %387 : vector<32x128xf32>
    %389 = vector.broadcast %304 : vector<1x128xf32> to vector<32x128xf32>
    %390 = arith.addf %388, %389 : vector<32x128xf32>
    %cst_147 = arith.constant 0.000000e+00 : f32
    %391 = vector.broadcast %cst_147 : f32 to vector<32x128xf32>
    %392 = arith.maximumf %390, %391 : vector<32x128xf32>
    %393 = arith.truncf %392 : vector<32x128xf32> to vector<32x128xbf16>
    %cst_148 = arith.constant dense<0.000000e+00> : vector<32x128xf32>
    %394 = tpu.matmul %393, %299, %cst_148 {dimension_numbers = #tpu.dot_dimension_numbers<[1], [0], [0], [1], [0, 0, 1, 1], [], []>} : vector<32x128xbf16>, vector<128x128xbf16>, vector<32x128xf32> -> vector<32x128xf32>
    %395 = vector.broadcast %305 : vector<1x128xf32> to vector<32x128xf32>
    %396 = arith.addf %394, %395 : vector<32x128xf32>
    %cst_149 = arith.constant dense<0.000000e+00> : vector<32xf32>
    %397 = vector.multi_reduction <add>, %396, %cst_149 [1] : vector<32x128xf32> to vector<32xf32>
    %398 = vector.shape_cast %397 : vector<32xf32> to vector<32x1xf32>
    %cst_150 = arith.constant 3.125000e-02 : f32
    %399 = vector.broadcast %cst_150 : f32 to vector<32x1xf32>
    %400 = arith.mulf %398, %399 : vector<32x1xf32>
    %401 = vector.broadcast %400 : vector<32x1xf32> to vector<32x128xf32>
    %402 = arith.subf %396, %401 : vector<32x128xf32>
    %403 = vector.broadcast %4 : vector<1x128xf32> to vector<32x128xf32>
    %404 = arith.mulf %402, %403 : vector<32x128xf32>
    %405 = arith.mulf %404, %404 : vector<32x128xf32>
    %cst_151 = arith.constant dense<0.000000e+00> : vector<32xf32>
    %406 = vector.multi_reduction <add>, %405, %cst_151 [1] : vector<32x128xf32> to vector<32xf32>
    %407 = vector.shape_cast %406 : vector<32xf32> to vector<32x1xf32>
    %cst_152 = arith.constant 3.125000e-02 : f32
    %408 = vector.broadcast %cst_152 : f32 to vector<32x1xf32>
    %409 = arith.mulf %407, %408 : vector<32x1xf32>
    %cst_153 = arith.constant 9.99999974E-6 : f32
    %410 = vector.broadcast %cst_153 : f32 to vector<32x1xf32>
    %411 = arith.addf %409, %410 : vector<32x1xf32>
    %412 = math.rsqrt %411 : vector<32x1xf32>
    %413 = vector.broadcast %412 : vector<32x1xf32> to vector<32x128xf32>
    %414 = arith.mulf %404, %413 : vector<32x128xf32>
    %415 = vector.broadcast %306 : vector<1x128xf32> to vector<32x128xf32>
    %416 = arith.mulf %414, %415 : vector<32x128xf32>
    %417 = vector.broadcast %307 : vector<1x128xf32> to vector<32x128xf32>
    %418 = arith.addf %416, %417 : vector<32x128xf32>
    %419 = tpu.iota {dimensions = array<i32: 0>} : vector<32x1xi32>
    %c32_i32_154 = arith.constant 32 : i32
    %420 = vector.broadcast %c32_i32_154 : i32 to vector<32x1xi32>
    %421 = arith.cmpi slt, %419, %420 : vector<32x1xi32>
    %422 = arith.extui %421 : vector<32x1xi1> to vector<32x1xi32>
    %423 = arith.sitofp %422 : vector<32x1xi32> to vector<32x1xf32>
    %424 = vector.broadcast %423 : vector<32x1xf32> to vector<32x128xf32>
    %425 = arith.mulf %418, %424 : vector<32x128xf32>
    %426 = arith.addf %308, %425 : vector<32x128xf32>
    %c0_155 = arith.constant 0 : index
    %c0_156 = arith.constant 0 : index
    %427 = vector.load %arg14[%c0_155, %c0_156] : memref<32x128xf32, #tpu.memory_space<vmem>>, vector<32x128xf32>
    tpu.vector_store %arg14[%c0_155, %c0_156], %426 {strides = array<i32>} : memref<32x128xf32, #tpu.memory_space<vmem>>, vector<32x128xf32>,
    %c1_157 = arith.constant 1 : index
    %c0_158 = arith.constant 0 : index
    %c0_159 = arith.constant 0 : index
    %428 = vector.load %arg9[%c1_157, %c0_158, %c0_159] : memref<2x896x128xbf16, #tpu.memory_space<vmem>>, vector<1x896x128xbf16>
    %429 = vector.shape_cast %428 : vector<1x896x128xbf16> to vector<896x128xbf16>
    %c1_160 = arith.constant 1 : index
    %c0_161 = arith.constant 0 : index
    %c0_162 = arith.constant 0 : index
    %430 = vector.load %arg10[%c1_160, %c0_161, %c0_162] : memref<2x8x128xf32, #tpu.memory_space<vmem>>, vector<1x8x128xf32>
    %431 = vector.shape_cast %430 : vector<1x8x128xf32> to vector<8x128xf32>
    %432 = vector.extract_strided_slice %429 {offsets = [0, 0], sizes = [128, 128], strides = [1, 1]} : vector<896x128xbf16> to vector<128x128xbf16>
    %433 = vector.extract_strided_slice %429 {offsets = [128, 0], sizes = [128, 128], strides = [1, 1]} : vector<896x128xbf16> to vector<128x128xbf16>
    %434 = vector.extract_strided_slice %429 {offsets = [256, 0], sizes = [128, 128], strides = [1, 1]} : vector<896x128xbf16> to vector<128x128xbf16>
    %435 = vector.extract_strided_slice %429 {offsets = [384, 0], sizes = [128, 128], strides = [1, 1]} : vector<896x128xbf16> to vector<128x128xbf16>
    %436 = vector.extract_strided_slice %429 {offsets = [512, 0], sizes = [128, 128], strides = [1, 1]} : vector<896x128xbf16> to vector<128x128xbf16>
    %437 = vector.extract_strided_slice %429 {offsets = [640, 0], sizes = [128, 128], strides = [1, 1]} : vector<896x128xbf16> to vector<128x128xbf16>
    %438 = vector.extract_strided_slice %429 {offsets = [768, 0], sizes = [128, 128], strides = [1, 1]} : vector<896x128xbf16> to vector<128x128xbf16>
    %439 = vector.extract_strided_slice %431 {offsets = [0, 0], sizes = [1, 128], strides = [1, 1]} : vector<8x128xf32> to vector<1x128xf32>
    %440 = vector.extract_strided_slice %431 {offsets = [1, 0], sizes = [1, 128], strides = [1, 1]} : vector<8x128xf32> to vector<1x128xf32>
    %441 = vector.extract_strided_slice %431 {offsets = [2, 0], sizes = [1, 128], strides = [1, 1]} : vector<8x128xf32> to vector<1x128xf32>
    %442 = vector.extract_strided_slice %431 {offsets = [3, 0], sizes = [1, 128], strides = [1, 1]} : vector<8x128xf32> to vector<1x128xf32>
    %443 = vector.extract_strided_slice %431 {offsets = [4, 0], sizes = [1, 128], strides = [1, 1]} : vector<8x128xf32> to vector<1x128xf32>
    %444 = vector.extract_strided_slice %431 {offsets = [5, 0], sizes = [1, 128], strides = [1, 1]} : vector<8x128xf32> to vector<1x128xf32>
    %445 = vector.extract_strided_slice %431 {offsets = [6, 0], sizes = [1, 128], strides = [1, 1]} : vector<8x128xf32> to vector<1x128xf32>
    %446 = vector.extract_strided_slice %431 {offsets = [7, 0], sizes = [1, 128], strides = [1, 1]} : vector<8x128xf32> to vector<1x128xf32>
    %c0_163 = arith.constant 0 : index
    %c0_164 = arith.constant 0 : index
    %447 = vector.load %arg13[%c0_163, %c0_164] : memref<16x128xf32, #tpu.memory_space<vmem>>, vector<16x128xf32>
    %c0_165 = arith.constant 0 : index
    %c0_166 = arith.constant 0 : index
    %448 = vector.load %arg14[%c0_165, %c0_166] : memref<32x128xf32, #tpu.memory_space<vmem>>, vector<32x128xf32>
    %449 = arith.truncf %447 : vector<16x128xf32> to vector<16x128xbf16>
    %450 = tpu.iota {dimensions = array<i32: 1>} : vector<32x16xi32>
    %c0_167 = arith.constant 0 : index
    %c0_168 = arith.constant 0 : index
    %451 = vector.load %arg0[%c0_167, %c0_168] : memref<32x1xi32, #tpu.memory_space<vmem>>, vector<32x1xi32>
    %452 = vector.broadcast %451 : vector<32x1xi32> to vector<32x16xi32>
    %453 = arith.cmpi eq, %452, %450 : vector<32x16xi32>
    %cst_169 = arith.constant 1.000000e+00 : f32
    %cst_170 = arith.constant 0.000000e+00 : f32
    %454 = vector.broadcast %cst_169 : f32 to vector<32x16xf32>
    %455 = vector.broadcast %cst_170 : f32 to vector<32x16xf32>
    %456 = arith.select %453, %454, %455 : vector<32x16xi1>, vector<32x16xf32>
    %457 = arith.truncf %456 : vector<32x16xf32> to vector<32x16xbf16>
    %c0_171 = arith.constant 0 : index
    %c0_172 = arith.constant 0 : index
    %458 = vector.load %arg1[%c0_171, %c0_172] : memref<32x1xi32, #tpu.memory_space<vmem>>, vector<32x1xi32>
    %459 = vector.broadcast %458 : vector<32x1xi32> to vector<32x16xi32>
    %460 = arith.cmpi eq, %459, %450 : vector<32x16xi32>
    %cst_173 = arith.constant 1.000000e+00 : f32
    %cst_174 = arith.constant 0.000000e+00 : f32
    %461 = vector.broadcast %cst_173 : f32 to vector<32x16xf32>
    %462 = vector.broadcast %cst_174 : f32 to vector<32x16xf32>
    %463 = arith.select %460, %461, %462 : vector<32x16xi1>, vector<32x16xf32>
    %464 = arith.truncf %463 : vector<32x16xf32> to vector<32x16xbf16>
    %465 = tpu.iota {dimensions = array<i32: 0>} : vector<16x32xi32>
    %c0_175 = arith.constant 0 : index
    %c0_176 = arith.constant 0 : index
    %466 = vector.load %arg2[%c0_175, %c0_176] : memref<1x32xi32, #tpu.memory_space<vmem>>, vector<1x32xi32>
    %467 = vector.broadcast %466 : vector<1x32xi32> to vector<16x32xi32>
    %468 = arith.cmpi eq, %465, %467 : vector<16x32xi32>
    %cst_177 = arith.constant 1.000000e+00 : f32
    %cst_178 = arith.constant 0.000000e+00 : f32
    %469 = vector.broadcast %cst_177 : f32 to vector<16x32xf32>
    %470 = vector.broadcast %cst_178 : f32 to vector<16x32xf32>
    %471 = arith.select %468, %469, %470 : vector<16x32xi1>, vector<16x32xf32>
    %472 = arith.truncf %471 : vector<16x32xf32> to vector<16x32xbf16>
    %cst_179 = arith.constant dense<0.000000e+00> : vector<16x128xf32>
    %473 = tpu.matmul %449, %432, %cst_179 {dimension_numbers = #tpu.dot_dimension_numbers<[1], [0], [0], [1], [0, 0, 1, 1], [], []>} : vector<16x128xbf16>, vector<128x128xbf16>, vector<16x128xf32> -> vector<16x128xf32>
    %cst_180 = arith.constant dense<0.000000e+00> : vector<16x128xf32>
    %474 = tpu.matmul %449, %433, %cst_180 {dimension_numbers = #tpu.dot_dimension_numbers<[1], [0], [0], [1], [0, 0, 1, 1], [], []>} : vector<16x128xbf16>, vector<128x128xbf16>, vector<16x128xf32> -> vector<16x128xf32>
    %475 = arith.truncf %473 : vector<16x128xf32> to vector<16x128xbf16>
    %cst_181 = arith.constant dense<0.000000e+00> : vector<32x128xf32>
    %476 = tpu.matmul %457, %475, %cst_181 {dimension_numbers = #tpu.dot_dimension_numbers<[1], [0], [0], [1], [0, 0, 1, 1], [], []>} : vector<32x16xbf16>, vector<16x128xbf16>, vector<32x128xf32> -> vector<32x128xf32>
    %477 = arith.truncf %474 : vector<16x128xf32> to vector<16x128xbf16>
    %cst_182 = arith.constant dense<0.000000e+00> : vector<32x128xf32>
    %478 = tpu.matmul %464, %477, %cst_182 {dimension_numbers = #tpu.dot_dimension_numbers<[1], [0], [0], [1], [0, 0, 1, 1], [], []>} : vector<32x16xbf16>, vector<16x128xbf16>, vector<32x128xf32> -> vector<32x128xf32>
    %479 = arith.addf %476, %478 : vector<32x128xf32>
    %480 = arith.truncf %448 : vector<32x128xf32> to vector<32x128xbf16>
    %cst_183 = arith.constant dense<0.000000e+00> : vector<32x128xf32>
    %481 = tpu.matmul %480, %434, %cst_183 {dimension_numbers = #tpu.dot_dimension_numbers<[1], [0], [0], [1], [0, 0, 1, 1], [], []>} : vector<32x128xbf16>, vector<128x128xbf16>, vector<32x128xf32> -> vector<32x128xf32>
    %482 = arith.addf %479, %481 : vector<32x128xf32>
    %483 = vector.broadcast %439 : vector<1x128xf32> to vector<32x128xf32>
    %484 = arith.addf %482, %483 : vector<32x128xf32>
    %cst_184 = arith.constant 0.000000e+00 : f32
    %485 = vector.broadcast %cst_184 : f32 to vector<32x128xf32>
    %486 = arith.maximumf %484, %485 : vector<32x128xf32>
    %487 = arith.truncf %486 : vector<32x128xf32> to vector<32x128xbf16>
    %cst_185 = arith.constant dense<0.000000e+00> : vector<32x128xf32>
    %488 = tpu.matmul %487, %435, %cst_185 {dimension_numbers = #tpu.dot_dimension_numbers<[1], [0], [0], [1], [0, 0, 1, 1], [], []>} : vector<32x128xbf16>, vector<128x128xbf16>, vector<32x128xf32> -> vector<32x128xf32>
    %489 = vector.broadcast %440 : vector<1x128xf32> to vector<32x128xf32>
    %490 = arith.addf %488, %489 : vector<32x128xf32>
    %cst_186 = arith.constant dense<0.000000e+00> : vector<32xf32>
    %491 = vector.multi_reduction <add>, %490, %cst_186 [1] : vector<32x128xf32> to vector<32xf32>
    %492 = vector.shape_cast %491 : vector<32xf32> to vector<32x1xf32>
    %cst_187 = arith.constant 3.125000e-02 : f32
    %493 = vector.broadcast %cst_187 : f32 to vector<32x1xf32>
    %494 = arith.mulf %492, %493 : vector<32x1xf32>
    %495 = vector.broadcast %494 : vector<32x1xf32> to vector<32x128xf32>
    %496 = arith.subf %490, %495 : vector<32x128xf32>
    %497 = vector.broadcast %4 : vector<1x128xf32> to vector<32x128xf32>
    %498 = arith.mulf %496, %497 : vector<32x128xf32>
    %499 = arith.mulf %498, %498 : vector<32x128xf32>
    %cst_188 = arith.constant dense<0.000000e+00> : vector<32xf32>
    %500 = vector.multi_reduction <add>, %499, %cst_188 [1] : vector<32x128xf32> to vector<32xf32>
    %501 = vector.shape_cast %500 : vector<32xf32> to vector<32x1xf32>
    %cst_189 = arith.constant 3.125000e-02 : f32
    %502 = vector.broadcast %cst_189 : f32 to vector<32x1xf32>
    %503 = arith.mulf %501, %502 : vector<32x1xf32>
    %cst_190 = arith.constant 9.99999974E-6 : f32
    %504 = vector.broadcast %cst_190 : f32 to vector<32x1xf32>
    %505 = arith.addf %503, %504 : vector<32x1xf32>
    %506 = math.rsqrt %505 : vector<32x1xf32>
    %507 = vector.broadcast %506 : vector<32x1xf32> to vector<32x128xf32>
    %508 = arith.mulf %498, %507 : vector<32x128xf32>
    %509 = vector.broadcast %441 : vector<1x128xf32> to vector<32x128xf32>
    %510 = arith.mulf %508, %509 : vector<32x128xf32>
    %511 = vector.broadcast %442 : vector<1x128xf32> to vector<32x128xf32>
    %512 = arith.addf %510, %511 : vector<32x128xf32>
    %513 = tpu.iota {dimensions = array<i32: 0>} : vector<32x1xi32>
    %c32_i32_191 = arith.constant 32 : i32
    %514 = vector.broadcast %c32_i32_191 : i32 to vector<32x1xi32>
    %515 = arith.cmpi slt, %513, %514 : vector<32x1xi32>
    %516 = arith.extui %515 : vector<32x1xi1> to vector<32x1xi32>
    %517 = arith.sitofp %516 : vector<32x1xi32> to vector<32x1xf32>
    %518 = vector.broadcast %517 : vector<32x1xf32> to vector<32x128xf32>
    %519 = arith.mulf %512, %518 : vector<32x128xf32>
    %520 = arith.addf %448, %519 : vector<32x128xf32>
    %c0_192 = arith.constant 0 : index
    %c0_193 = arith.constant 0 : index
    %521 = vector.load %arg14[%c0_192, %c0_193] : memref<32x128xf32, #tpu.memory_space<vmem>>, vector<32x128xf32>
    tpu.vector_store %arg14[%c0_192, %c0_193], %520 {strides = array<i32>} : memref<32x128xf32, #tpu.memory_space<vmem>>, vector<32x128xf32>,
    %522 = arith.truncf %520 : vector<32x128xf32> to vector<32x128xbf16>
    %cst_194 = arith.constant dense<0.000000e+00> : vector<16x128xf32>
    %523 = tpu.matmul %472, %522, %cst_194 {dimension_numbers = #tpu.dot_dimension_numbers<[1], [0], [0], [1], [0, 0, 1, 1], [], []>} : vector<16x32xbf16>, vector<32x128xbf16>, vector<16x128xf32> -> vector<16x128xf32>
    %cst_195 = arith.constant dense<0.000000e+00> : vector<16x128xf32>
    %524 = tpu.matmul %449, %436, %cst_195 {dimension_numbers = #tpu.dot_dimension_numbers<[1], [0], [0], [1], [0, 0, 1, 1], [], []>} : vector<16x128xbf16>, vector<128x128xbf16>, vector<16x128xf32> -> vector<16x128xf32>
    %525 = arith.truncf %523 : vector<16x128xf32> to vector<16x128xbf16>
    %cst_196 = arith.constant dense<0.000000e+00> : vector<16x128xf32>
    %526 = tpu.matmul %525, %437, %cst_196 {dimension_numbers = #tpu.dot_dimension_numbers<[1], [0], [0], [1], [0, 0, 1, 1], [], []>} : vector<16x128xbf16>, vector<128x128xbf16>, vector<16x128xf32> -> vector<16x128xf32>
    %527 = arith.addf %524, %526 : vector<16x128xf32>
    %528 = vector.broadcast %443 : vector<1x128xf32> to vector<16x128xf32>
    %529 = arith.addf %527, %528 : vector<16x128xf32>
    %cst_197 = arith.constant 0.000000e+00 : f32
    %530 = vector.broadcast %cst_197 : f32 to vector<16x128xf32>
    %531 = arith.maximumf %529, %530 : vector<16x128xf32>
    %532 = arith.truncf %531 : vector<16x128xf32> to vector<16x128xbf16>
    %cst_198 = arith.constant dense<0.000000e+00> : vector<16x128xf32>
    %533 = tpu.matmul %532, %438, %cst_198 {dimension_numbers = #tpu.dot_dimension_numbers<[1], [0], [0], [1], [0, 0, 1, 1], [], []>} : vector<16x128xbf16>, vector<128x128xbf16>, vector<16x128xf32> -> vector<16x128xf32>
    %534 = vector.broadcast %444 : vector<1x128xf32> to vector<16x128xf32>
    %535 = arith.addf %533, %534 : vector<16x128xf32>
    %cst_199 = arith.constant dense<0.000000e+00> : vector<16xf32>
    %536 = vector.multi_reduction <add>, %535, %cst_199 [1] : vector<16x128xf32> to vector<16xf32>
    %537 = vector.shape_cast %536 : vector<16xf32> to vector<16x1xf32>
    %cst_200 = arith.constant 3.125000e-02 : f32
    %538 = vector.broadcast %cst_200 : f32 to vector<16x1xf32>
    %539 = arith.mulf %537, %538 : vector<16x1xf32>
    %540 = vector.broadcast %539 : vector<16x1xf32> to vector<16x128xf32>
    %541 = arith.subf %535, %540 : vector<16x128xf32>
    %542 = vector.broadcast %4 : vector<1x128xf32> to vector<16x128xf32>
    %543 = arith.mulf %541, %542 : vector<16x128xf32>
    %544 = arith.mulf %543, %543 : vector<16x128xf32>
    %cst_201 = arith.constant dense<0.000000e+00> : vector<16xf32>
    %545 = vector.multi_reduction <add>, %544, %cst_201 [1] : vector<16x128xf32> to vector<16xf32>
    %546 = vector.shape_cast %545 : vector<16xf32> to vector<16x1xf32>
    %cst_202 = arith.constant 3.125000e-02 : f32
    %547 = vector.broadcast %cst_202 : f32 to vector<16x1xf32>
    %548 = arith.mulf %546, %547 : vector<16x1xf32>
    %cst_203 = arith.constant 9.99999974E-6 : f32
    %549 = vector.broadcast %cst_203 : f32 to vector<16x1xf32>
    %550 = arith.addf %548, %549 : vector<16x1xf32>
    %551 = math.rsqrt %550 : vector<16x1xf32>
    %552 = vector.broadcast %551 : vector<16x1xf32> to vector<16x128xf32>
    %553 = arith.mulf %543, %552 : vector<16x128xf32>
    %554 = vector.broadcast %445 : vector<1x128xf32> to vector<16x128xf32>
    %555 = arith.mulf %553, %554 : vector<16x128xf32>
    %556 = vector.broadcast %446 : vector<1x128xf32> to vector<16x128xf32>
    %557 = arith.addf %555, %556 : vector<16x128xf32>
    %558 = tpu.iota {dimensions = array<i32: 0>} : vector<16x1xi32>
    %c16_i32_204 = arith.constant 16 : i32
    %559 = vector.broadcast %c16_i32_204 : i32 to vector<16x1xi32>
    %560 = arith.cmpi slt, %558, %559 : vector<16x1xi32>
    %561 = arith.extui %560 : vector<16x1xi1> to vector<16x1xi32>
    %562 = arith.sitofp %561 : vector<16x1xi32> to vector<16x1xf32>
    %563 = vector.broadcast %562 : vector<16x1xf32> to vector<16x128xf32>
    %564 = arith.mulf %557, %563 : vector<16x128xf32>
    %565 = arith.addf %447, %564 : vector<16x128xf32>
    %c0_205 = arith.constant 0 : index
    %c0_206 = arith.constant 0 : index
    %566 = vector.load %arg13[%c0_205, %c0_206] : memref<16x128xf32, #tpu.memory_space<vmem>>, vector<16x128xf32>
    tpu.vector_store %arg13[%c0_205, %c0_206], %565 {strides = array<i32>} : memref<16x128xf32, #tpu.memory_space<vmem>>, vector<16x128xf32>,
    return
  }
}

</mosaic_0001>

<llo_original>
// kernel: processor_forward.1
$region0: #{processor_forward.1}
  #allocation0 [shape = 'u32[]', space=smem, size = 0x4, offset = 0x4, fixed_abs, tag = 'smem constant byte address 0x4 - core index']
  #allocation1 [shape = 'u32[144,128]{1,0:T(1,128)}', space=vmem, size = 0x12000, scoped, tag = 'internal scratch']
  %s0 = inlined_call_operand.vmem [shape: s32[32,1], index: 0, kind: input, shape index: {}]
  %s1 = inlined_call_operand.vmem [shape: s32[32,1], index: 1, kind: input, shape index: {}]
  %s2 = inlined_call_operand.vmem [shape: s32[1,32], index: 2, kind: input, shape index: {}]
  %s3 = inlined_call_operand.vmem [shape: s32[48,1], index: 3, kind: input, shape index: {}]
  %s4 = inlined_call_operand.vmem [shape: s32[48,1], index: 4, kind: input, shape index: {}]
  %s5 = inlined_call_operand.vmem [shape: s32[1,48], index: 5, kind: input, shape index: {}]
  %s6 = inlined_call_operand.vmem [shape: f32[16,128], index: 6, kind: input, shape index: {}, may-alias: {6,13}]
  %s7 = inlined_call_operand.vmem [shape: f32[32,128], index: 7, kind: input, shape index: {}, may-alias: {7,14}]
  %s8 = inlined_call_operand.vmem [shape: f32[48,128], index: 8, kind: input, shape index: {}, may-alias: {8,15}]
  %s9 = inlined_call_operand.vmem [shape: bf16[2,896,128], index: 9, kind: input, shape index: {}]
  %s10 = inlined_call_operand.vmem [shape: f32[2,8,128], index: 10, kind: input, shape index: {}]
  %s11 = inlined_call_operand.vmem [shape: bf16[2,896,128], index: 11, kind: input, shape index: {}]
  %s12 = inlined_call_operand.vmem [shape: f32[2,8,128], index: 12, kind: input, shape index: {}]
  %s13 = inlined_call_operand.vmem [shape: f32[16,128], index: 13, kind: output, shape index: {0}, may-alias: {6,13}]
  %s14 = inlined_call_operand.vmem [shape: f32[32,128], index: 14, kind: output, shape index: {1}, may-alias: {7,14}]
  %s15 = inlined_call_operand.vmem [shape: f32[48,128], index: 15, kind: output, shape index: {2}, may-alias: {8,15}]
  %16 = xla_tuple %s13, %s14, %s15
  %s17 = sld [smem:[#allocation0]]
  $region78: #{processor_forward.1} parent=0
    _
  %s19 = ssub.s32 1, %s17
  %s20 = scalar_select 0, %s19, %s17
  // Predicated region
  $region2: #{processor_forward.1} parent=0 // pred_check
    _
  $region3: #{processor_forward.1} parent=0 // pred_check_branch
    %22 = sbr.rel (0) target = $region5
  $region4: #{processor_forward.1} parent=0 // pred_region
    _
  $region5: #{processor_forward.1} parent=0 // pred_fallthru
    _
  // Predicated region
  $region6: #{processor_forward.1} parent=0 // pred_check
    _
  $region7: #{processor_forward.1} parent=0 // pred_check_branch
    %24 = sbr.rel (0) target = $region9
  $region8: #{processor_forward.1} parent=0 // pred_region
    _
  $region9: #{processor_forward.1} parent=0 // pred_fallthru
    _
  // Predicated region
  $region10: #{processor_forward.1} parent=0 // pred_check
    _
  $region11: #{processor_forward.1} parent=0 // pred_check_branch
    %26 = sbr.rel (0) target = $region13
  $region12: #{processor_forward.1} parent=0 // pred_region
    _
  $region13: #{processor_forward.1} parent=0 // pred_fallthru
    _
  // Predicated region
  $region14: #{processor_forward.1} parent=0 // pred_check
    _
  $region15: #{processor_forward.1} parent=0 // pred_check_branch
    %28 = sbr.rel (0) target = $region17
  $region16: #{processor_forward.1} parent=0 // pred_region
    _
  $region17: #{processor_forward.1} parent=0 // pred_fallthru
    _
  // Predicated region
  $region18: #{processor_forward.1} parent=0 // pred_check
    _
  $region19: #{processor_forward.1} parent=0 // pred_check_branch
    %30 = sbr.rel (0) target = $region21
  $region20: #{processor_forward.1} parent=0 // pred_region
    _
  $region21: #{processor_forward.1} parent=0 // pred_fallthru
    _
  // Predicated region
  $region22: #{processor_forward.1} parent=0 // pred_check
    _
  $region23: #{processor_forward.1} parent=0 // pred_check_branch
    %32 = sbr.rel (0) target = $region25
  $region24: #{processor_forward.1} parent=0 // pred_region
    _
  $region25: #{processor_forward.1} parent=0 // pred_fallthru
    _
  // Predicated region
  $region26: #{processor_forward.1} parent=0 // pred_check
    _
  $region27: #{processor_forward.1} parent=0 // pred_check_branch
    %34 = sbr.rel (0) target = $region29
  $region28: #{processor_forward.1} parent=0 // pred_region
    _
  $region29: #{processor_forward.1} parent=0 // pred_fallthru
    _
  // Predicated region
  $region30: #{processor_forward.1} parent=0 // pred_check
    _
  $region31: #{processor_forward.1} parent=0 // pred_check_branch
    %36 = sbr.rel (0) target = $region33
  $region32: #{processor_forward.1} parent=0 // pred_region
    _
  $region33: #{processor_forward.1} parent=0 // pred_fallthru
    _
  // Predicated region
  $region34: #{processor_forward.1} parent=0 // pred_check
    _
  $region35: #{processor_forward.1} parent=0 // pred_check_branch
    %38 = sbr.rel (0) target = $region37
  $region36: #{processor_forward.1} parent=0 // pred_region
    _
  $region37: #{processor_forward.1} parent=0 // pred_fallthru
    _
  // Predicated region
  $region38: #{processor_forward.1} parent=0 // pred_check
    _
  $region39: #{processor_forward.1} parent=0 // pred_check_branch
    %40 = sbr.rel (0) target = $region41
  $region40: #{processor_forward.1} parent=0 // pred_region
    _
  $region41: #{processor_forward.1} parent=0 // pred_fallthru
    _
  // Predicated region
  $region42: #{processor_forward.1} parent=0 // pred_check
    _
  $region43: #{processor_forward.1} parent=0 // pred_check_branch
    %42 = sbr.rel (0) target = $region45
  $region44: #{processor_forward.1} parent=0 // pred_region
    _
  $region45: #{processor_forward.1} parent=0 // pred_fallthru
    _
  // Predicated region
  $region46: #{processor_forward.1} parent=0 // pred_check
    _
  $region47: #{processor_forward.1} parent=0 // pred_check_branch
    %44 = sbr.rel (0) target = $region49
  $region48: #{processor_forward.1} parent=0 // pred_region
    _
  $region49: #{processor_forward.1} parent=0 // pred_fallthru
    _
  // Predicated region
  $region50: #{processor_forward.1} parent=0 // pred_check
    _
  $region51: #{processor_forward.1} parent=0 // pred_check_branch
    %46 = sbr.rel (0) target = $region53
  $region52: #{processor_forward.1} parent=0 // pred_region
    _
  $region53: #{processor_forward.1} parent=0 // pred_fallthru
    _
  %v48 = vlaneseq
  %v49 = vand.u32 %v48, 127
  %vm50 = vcmp.lt.s32.totalorder %v49, 32
  %v51 = vsel %vm50, 1, 0
  %v52 = vcvt.s32.f32 %v51
  %v53 = vld [vmem:[%s6] sm:$0xff]
  %v54 = vld [vmem:[%s6 + $0x8] sm:$0xff]
  %55 = vst [vmem:[%s13] sm:$0xff] %v53
  %56 = vst [vmem:[%s13 + $0x8] sm:$0xff] %v54
  %v57 = vld [vmem:[%s7] sm:$0xff]
  %v58 = vld [vmem:[%s7 + $0x8] sm:$0xff]
  %v59 = vld [vmem:[%s7 + $0x10] sm:$0xff]
  %v60 = vld [vmem:[%s7 + $0x18] sm:$0xff]
  %61 = vst [vmem:[%s14] sm:$0xff] %v57
  %62 = vst [vmem:[%s14 + $0x8] sm:$0xff] %v58
  %63 = vst [vmem:[%s14 + $0x10] sm:$0xff] %v59
  %64 = vst [vmem:[%s14 + $0x18] sm:$0xff] %v60
  %v65 = vld [vmem:[%s8] sm:$0xff]
  %v66 = vld [vmem:[%s8 + $0x8] sm:$0xff]
  %v67 = vld [vmem:[%s8 + $0x10] sm:$0xff]
  %v68 = vld [vmem:[%s8 + $0x18] sm:$0xff]
  %v69 = vld [vmem:[%s8 + $0x20] sm:$0xff]
  %v70 = vld [vmem:[%s8 + $0x28] sm:$0xff]
  %71 = vst [vmem:[%s15] sm:$0xff] %v65
  %72 = vst [vmem:[%s15 + $0x8] sm:$0xff] %v66
  %73 = vst [vmem:[%s15 + $0x10] sm:$0xff] %v67
  %74 = vst [vmem:[%s15 + $0x18] sm:$0xff] %v68
  %75 = vst [vmem:[%s15 + $0x20] sm:$0xff] %v69
  %76 = vst [vmem:[%s15 + $0x28] sm:$0xff] %v70
  %v77 = vld [vmem:[%s11] sm:$0xf]
  %v78 = vld [vmem:[%s11 + $0x4] sm:$0xf]
  %v79 = vld [vmem:[%s11 + $0x8] sm:$0xf]
  %v80 = vld [vmem:[%s11 + $0xc] sm:$0xf]
  %v81 = vld [vmem:[%s11 + $0x10] sm:$0xf]
  %v82 = vld [vmem:[%s11 + $0x14] sm:$0xf]
  %v83 = vld [vmem:[%s11 + $0x18] sm:$0xf]
  %v84 = vld [vmem:[%s11 + $0x1c] sm:$0xf]
  %v85 = vld [vmem:[%s11 + $0x20] sm:$0xf]
  %v86 = vld [vmem:[%s11 + $0x24] sm:$0xf]
  %v87 = vld [vmem:[%s11 + $0x28] sm:$0xf]
  %v88 = vld [vmem:[%s11 + $0x2c] sm:$0xf]
  %v89 = vld [vmem:[%s11 + $0x30] sm:$0xf]
  %v90 = vld [vmem:[%s11 + $0x34] sm:$0xf]
  %v91 = vld [vmem:[%s11 + $0x38] sm:$0xf]
  %v92 = vld [vmem:[%s11 + $0x3c] sm:$0xf]
  %v93 = vld [vmem:[%s11 + $0x40] sm:$0xf]
  %v94 = vld [vmem:[%s11 + $0x44] sm:$0xf]
  %v95 = vld [vmem:[%s11 + $0x48] sm:$0xf]
  %v96 = vld [vmem:[%s11 + $0x4c] sm:$0xf]
  %v97 = vld [vmem:[%s11 + $0x50] sm:$0xf]
  %v98 = vld [vmem:[%s11 + $0x54] sm:$0xf]
  %v99 = vld [vmem:[%s11 + $0x58] sm:$0xf]
  %v100 = vld [vmem:[%s11 + $0x5c] sm:$0xf]
  %v101 = vld [vmem:[%s11 + $0x60] sm:$0xf]
  %v102 = vld [vmem:[%s11 + $0x64] sm:$0xf]
  %v103 = vld [vmem:[%s11 + $0x68] sm:$0xf]
  %v104 = vld [vmem:[%s11 + $0x6c] sm:$0xf]
  %v105 = vld [vmem:[%s11 + $0x70] sm:$0xf]
  %v106 = vld [vmem:[%s11 + $0x74] sm:$0xf]
  %v107 = vld [vmem:[%s11 + $0x78] sm:$0xf]
  %v108 = vld [vmem:[%s11 + $0x7c] sm:$0xf]
  %v109 = vld [vmem:[%s11 + $0x80] sm:$0xf]
  %v110 = vld [vmem:[%s11 + $0x84] sm:$0xf]
  %v111 = vld [vmem:[%s11 + $0x88] sm:$0xf]
  %v112 = vld [vmem:[%s11 + $0x8c] sm:$0xf]
  %v113 = vld [vmem:[%s11 + $0x90] sm:$0xf]
  %v114 = vld [vmem:[%s11 + $0x94] sm:$0xf]
  %v115 = vld [vmem:[%s11 + $0x98] sm:$0xf]
  %v116 = vld [vmem:[%s11 + $0x9c] sm:$0xf]
  %v117 = vld [vmem:[%s11 + $0xa0] sm:$0xf]
  %v118 = vld [vmem:[%s11 + $0xa4] sm:$0xf]
  %v119 = vld [vmem:[%s11 + $0xa8] sm:$0xf]
  %v120 = vld [vmem:[%s11 + $0xac] sm:$0xf]
  %v121 = vld [vmem:[%s11 + $0xb0] sm:$0xf]
  %v122 = vld [vmem:[%s11 + $0xb4] sm:$0xf]
  %v123 = vld [vmem:[%s11 + $0xb8] sm:$0xf]
  %v124 = vld [vmem:[%s11 + $0xbc] sm:$0xf]
  %v125 = vld [vmem:[%s11 + $0xc0] sm:$0xf]
  %v126 = vld [vmem:[%s11 + $0xc4] sm:$0xf]
  %v127 = vld [vmem:[%s11 + $0xc8] sm:$0xf]
  %v128 = vld [vmem:[%s11 + $0xcc] sm:$0xf]
  %v129 = vld [vmem:[%s11 + $0xd0] sm:$0xf]
  %v130 = vld [vmem:[%s11 + $0xd4] sm:$0xf]
  %v131 = vld [vmem:[%s11 + $0xd8] sm:$0xf]
  %v132 = vld [vmem:[%s11 + $0xdc] sm:$0xf]
  %v133 = vld [vmem:[%s11 + $0xe0] sm:$0xf]
  %v134 = vld [vmem:[%s11 + $0xe4] sm:$0xf]
  %v135 = vld [vmem:[%s11 + $0xe8] sm:$0xf]
  %v136 = vld [vmem:[%s11 + $0xec] sm:$0xf]
  %v137 = vld [vmem:[%s11 + $0xf0] sm:$0xf]
  %v138 = vld [vmem:[%s11 + $0xf4] sm:$0xf]
  %v139 = vld [vmem:[%s11 + $0xf8] sm:$0xf]
  %v140 = vld [vmem:[%s11 + $0xfc] sm:$0xf]
  %v141 = vld [vmem:[%s11 + $0x100] sm:$0xf]
  %v142 = vld [vmem:[%s11 + $0x104] sm:$0xf]
  %v143 = vld [vmem:[%s11 + $0x108] sm:$0xf]
  %v144 = vld [vmem:[%s11 + $0x10c] sm:$0xf]
  %v145 = vld [vmem:[%s11 + $0x110] sm:$0xf]
  %v146 = vld [vmem:[%s11 + $0x114] sm:$0xf]
  %v147 = vld [vmem:[%s11 + $0x118] sm:$0xf]
  %v148 = vld [vmem:[%s11 + $0x11c] sm:$0xf]
  %v149 = vld [vmem:[%s11 + $0x120] sm:$0xf]
  %v150 = vld [vmem:[%s11 + $0x124] sm:$0xf]
  %v151 = vld [vmem:[%s11 + $0x128] sm:$0xf]
  %v152 = vld [vmem:[%s11 + $0x12c] sm:$0xf]
  %v153 = vld [vmem:[%s11 + $0x130] sm:$0xf]
  %v154 = vld [vmem:[%s11 + $0x134] sm:$0xf]
  %v155 = vld [vmem:[%s11 + $0x138] sm:$0xf]
  %v156 = vld [vmem:[%s11 + $0x13c] sm:$0xf]
  %v157 = vld [vmem:[%s11 + $0x140] sm:$0xf]
  %v158 = vld [vmem:[%s11 + $0x144] sm:$0xf]
  %v159 = vld [vmem:[%s11 + $0x148] sm:$0xf]
  %v160 = vld [vmem:[%s11 + $0x14c] sm:$0xf]
  %v161 = vld [vmem:[%s11 + $0x150] sm:$0xf]
  %v162 = vld [vmem:[%s11 + $0x154] sm:$0xf]
  %v163 = vld [vmem:[%s11 + $0x158] sm:$0xf]
  %v164 = vld [vmem:[%s11 + $0x15c] sm:$0xf]
  %v165 = vld [vmem:[%s11 + $0x160] sm:$0xf]
  %v166 = vld [vmem:[%s11 + $0x164] sm:$0xf]
  %v167 = vld [vmem:[%s11 + $0x168] sm:$0xf]
  %v168 = vld [vmem:[%s11 + $0x16c] sm:$0xf]
  %v169 = vld [vmem:[%s11 + $0x170] sm:$0xf]
  %v170 = vld [vmem:[%s11 + $0x174] sm:$0xf]
  %v171 = vld [vmem:[%s11 + $0x178] sm:$0xf]
  %v172 = vld [vmem:[%s11 + $0x17c] sm:$0xf]
  %v173 = vld [vmem:[%s11 + $0x180] sm:$0xf]
  %v174 = vld [vmem:[%s11 + $0x184] sm:$0xf]
  %v175 = vld [vmem:[%s11 + $0x188] sm:$0xf]
  %v176 = vld [vmem:[%s11 + $0x18c] sm:$0xf]
  %v177 = vld [vmem:[%s11 + $0x190] sm:$0xf]
  %v178 = vld [vmem:[%s11 + $0x194] sm:$0xf]
  %v179 = vld [vmem:[%s11 + $0x198] sm:$0xf]
  %v180 = vld [vmem:[%s11 + $0x19c] sm:$0xf]
  %v181 = vld [vmem:[%s11 + $0x1a0] sm:$0xf]
  %v182 = vld [vmem:[%s11 + $0x1a4] sm:$0xf]
  %v183 = vld [vmem:[%s11 + $0x1a8] sm:$0xf]
  %v184 = vld [vmem:[%s11 + $0x1ac] sm:$0xf]
  %v185 = vld [vmem:[%s11 + $0x1b0] sm:$0xf]
  %v186 = vld [vmem:[%s11 + $0x1b4] sm:$0xf]
  %v187 = vld [vmem:[%s11 + $0x1b8] sm:$0xf]
  %v188 = vld [vmem:[%s11 + $0x1bc] sm:$0xf]
  %v189 = vld [vmem:[%s12] sm:$0xff]
  %v190 = vld [vmem:[%s14] sm:$0xff]
  %v191 = vld [vmem:[%s14 + $0x8] sm:$0xff]
  %v192 = vld [vmem:[%s14 + $0x10] sm:$0xff]
  %v193 = vld [vmem:[%s14 + $0x18] sm:$0xff]
  %v194 = vld [vmem:[%s15] sm:$0xff]
  %v195 = vld [vmem:[%s15 + $0x8] sm:$0xff]
  %v196 = vld [vmem:[%s15 + $0x10] sm:$0xff]
  %v197 = vld [vmem:[%s15 + $0x18] sm:$0xff]
  %v198 = vld [vmem:[%s15 + $0x20] sm:$0xff]
  %v199 = vld [vmem:[%s15 + $0x28] sm:$0xff]
  %v200 = vpack.c.bf16 %v191, %v190
  %v201 = vpack.c.bf16 %v193, %v192
  %v202 = vld [vmem:[%s3] sm:$0xff]
  %v203 = vld [vmem:[%s3 + $0x8] sm:$0xff]
  %v204 = vld [vmem:[%s3 + $0x10] sm:$0xff]
  %v205 = vld [vmem:[%s3 + $0x18] sm:$0xff]
  %v206 = vld [vmem:[%s3 + $0x20] sm:$0xff]
  %v207 = vld [vmem:[%s3 + $0x28] sm:$0xff]
  %208 = vset.pattern.permute.xlu0 0
  %209 = vperm.xlu0 %208, %v202
  %v210 = vpop.permute.xlu0 %209
  %211 = vset.pattern.permute.xlu0 0
  %212 = vperm.xlu0 %211, %v203
  %v213 = vpop.permute.xlu0 %212
  %214 = vset.pattern.permute.xlu0 0
  %215 = vperm.xlu0 %214, %v204
  %v216 = vpop.permute.xlu0 %215
  %217 = vset.pattern.permute.xlu0 0
  %218 = vperm.xlu0 %217, %v205
  %v219 = vpop.permute.xlu0 %218
  %220 = vset.pattern.permute.xlu0 0
  %221 = vperm.xlu0 %220, %v206
  %v222 = vpop.permute.xlu0 %221
  %223 = vset.pattern.permute.xlu0 0
  %224 = vperm.xlu0 %223, %v207
  %v225 = vpop.permute.xlu0 %224
  %vm226 = vcmp.eq.s32.totalorder %v210, %v49
  %vm227 = vcmp.eq.s32.totalorder %v213, %v49
  %vm228 = vcmp.eq.s32.totalorder %v216, %v49
  %vm229 = vcmp.eq.s32.totalorder %v219, %v49
  %vm230 = vcmp.eq.s32.totalorder %v222, %v49
  %vm231 = vcmp.eq.s32.totalorder %v225, %v49
  %v232 = vsel %vm226, 1.0, 0.0
  %v233 = vsel %vm227, 1.0, 0.0
  %v234 = vsel %vm228, 1.0, 0.0
  %v235 = vsel %vm229, 1.0, 0.0
  %v236 = vsel %vm230, 1.0, 0.0
  %v237 = vsel %vm231, 1.0, 0.0
  %v238 = vpack.c.bf16 %v233, %v232
  %v239 = vpack.c.bf16 %v235, %v234
  %v240 = vpack.c.bf16 %v237, %v236
  %v241 = vld [vmem:[%s4] sm:$0xff]
  %v242 = vld [vmem:[%s4 + $0x8] sm:$0xff]
  %v243 = vld [vmem:[%s4 + $0x10] sm:$0xff]
  %v244 = vld [vmem:[%s4 + $0x18] sm:$0xff]
  %v245 = vld [vmem:[%s4 + $0x20] sm:$0xff]
  %v246 = vld [vmem:[%s4 + $0x28] sm:$0xff]
  %247 = vset.pattern.permute.xlu0 0
  %248 = vperm.xlu0 %247, %v241
  %v249 = vpop.permute.xlu0 %248
  %250 = vset.pattern.permute.xlu0 0
  %251 = vperm.xlu0 %250, %v242
  %v252 = vpop.permute.xlu0 %251
  %253 = vset.pattern.permute.xlu0 0
  %254 = vperm.xlu0 %253, %v243
  %v255 = vpop.permute.xlu0 %254
  %256 = vset.pattern.permute.xlu0 0
  %257 = vperm.xlu0 %256, %v244
  %v258 = vpop.permute.xlu0 %257
  %259 = vset.pattern.permute.xlu0 0
  %260 = vperm.xlu0 %259, %v245
  %v261 = vpop.permute.xlu0 %260
  %262 = vset.pattern.permute.xlu0 0
  %263 = vperm.xlu0 %262, %v246
  %v264 = vpop.permute.xlu0 %263
  %vm265 = vcmp.eq.s32.totalorder %v249, %v49
  %vm266 = vcmp.eq.s32.totalorder %v252, %v49
  %vm267 = vcmp.eq.s32.totalorder %v255, %v49
  %vm268 = vcmp.eq.s32.totalorder %v258, %v49
  %vm269 = vcmp.eq.s32.totalorder %v261, %v49
  %vm270 = vcmp.eq.s32.totalorder %v264, %v49
  %v271 = vsel %vm265, 1.0, 0.0
  %v272 = vsel %vm266, 1.0, 0.0
  %v273 = vsel %vm267, 1.0, 0.0
  %v274 = vsel %vm268, 1.0, 0.0
  %v275 = vsel %vm269, 1.0, 0.0
  %v276 = vsel %vm270, 1.0, 0.0
  %v277 = vpack.c.bf16 %v272, %v271
  %v278 = vpack.c.bf16 %v274, %v273
  %v279 = vpack.c.bf16 %v276, %v275
  %v280 = vlaneseq
  %v281 = vshrl.u32 %v280, 7
  %v282 = vadd.s32 %v281, 8
  %v283 = vadd.s32 %v281, 16
  %v284 = vadd.s32 %v281, 24
  %v285 = vld [vmem:[%s5] sm:$0x1]
  %v286 = vlaneseq
  %v287 = vshrl.u32 %v286, 7
  %v288 = vsub.s32 0, %v287
  %v289 = vrot.slane %v285, %v288
  %vm290 = vcmp.eq.s32.totalorder %v281, %v289
  %vm291 = vcmp.eq.s32.totalorder %v282, %v289
  %vm292 = vcmp.eq.s32.totalorder %v283, %v289
  %vm293 = vcmp.eq.s32.totalorder %v284, %v289
  %v294 = vsel %vm290, 1.0, 0.0
  %v295 = vsel %vm291, 1.0, 0.0
  %v296 = vsel %vm292, 1.0, 0.0
  %v297 = vsel %vm293, 1.0, 0.0
  %v298 = vpack.c.bf16 %v295, %v294
  %v299 = vpack.c.bf16 %v297, %v296
  %v316 = vunpack.c.l.b16 %v77
  %v317 = vunpack.c.l.b16 %v78
  %v318 = vunpack.c.l.b16 %v79
  %v319 = vunpack.c.l.b16 %v80
  %v320 = vunpack.c.l.b16 %v81
  %v321 = vunpack.c.l.b16 %v82
  %v322 = vunpack.c.l.b16 %v83
  %v323 = vunpack.c.l.b16 %v84
  %v324 = vunpack.c.l.b16 %v85
  %v325 = vunpack.c.l.b16 %v86
  %v326 = vunpack.c.l.b16 %v87
  %v327 = vunpack.c.l.b16 %v88
  %v328 = vunpack.c.l.b16 %v89
  %v329 = vunpack.c.l.b16 %v90
  %v330 = vunpack.c.l.b16 %v91
  %v331 = vunpack.c.l.b16 %v92
  %v332 = vpack.c.b16 %v317, %v316
  %v333 = vpack.c.b16 %v319, %v318
  %v334 = vpack.c.b16 %v321, %v320
  %v335 = vpack.c.b16 %v323, %v322
  %v336 = vpack.c.b16 %v325, %v324
  %v337 = vpack.c.b16 %v327, %v326
  %v338 = vpack.c.b16 %v329, %v328
  %v339 = vpack.c.b16 %v331, %v330
  %348 = vmatprep.subr.bf16.mxu0 0
  %349 = vmatpush1.bf16.msra.mxu0 %v332
  %350 = vmatprep.subr.bf16.mxu0 0
  %351 = vmatpush1.bf16.msra.mxu0 %v333
  %352 = vmatprep.subr.bf16.mxu0 0
  %353 = vmatpush1.bf16.msra.mxu0 %v334
  %354 = vmatprep.subr.bf16.mxu0 0
  %355 = vmatpush1.bf16.msra.mxu0 %v335
  %356 = vmatprep.subr.bf16.mxu0 0
  %357 = vmatpush1.bf16.msra.mxu0 %v336
  %358 = vmatprep.subr.bf16.mxu0 0
  %359 = vmatpush1.bf16.msra.mxu0 %v337
  %360 = vmatprep.subr.bf16.mxu0 0
  %361 = vmatpush1.bf16.msra.mxu0 %v338
  %362 = vmatprep.subr.bf16.mxu0 0
  %363 = vmatpush1.bf16.msra.mxu0 %v339
  %364 = vmatprep.subr.bf16.mxu0 0
  %365 = vmatpush1.bf16.msra.mxu0 0
  %366 = vmatprep.subr.bf16.mxu0 0
  %367 = vmatpush1.bf16.msra.mxu0 0
  %368 = vmatprep.subr.bf16.mxu0 0
  %369 = vmatpush1.bf16.msra.mxu0 0
  %370 = vmatprep.subr.bf16.mxu0 0
  %371 = vmatpush1.bf16.msra.mxu0 0
  %372 = vmatprep.subr.bf16.mxu0 0
  %373 = vmatpush1.bf16.msra.mxu0 0
  %374 = vmatprep.subr.bf16.mxu0 0
  %375 = vmatpush1.bf16.msra.mxu0 0
  %376 = vmatprep.subr.bf16.mxu0 0
  %377 = vmatpush1.bf16.msra.mxu0 0
  %378 = vmatprep.subr.bf16.mxu0 0
  %379 = vmatpush1.bf16.msra.mxu0 0
  %380 = vmatprep.mubr.bf16.mxu0 0
  %381 = vmatmul.mubr.bf16.gmra.mrb[0].mxu0 %v200
  %v382 = vpop.f32.mrb[0].mxu0
  %v383 = vadd.f32 0.0, %v382
  %v384 = vpop.f32.mrb[0].mxu0
  %v385 = vpop.f32.mrb[0].mxu0
  %v386 = vadd.f32 0.0, %v385
  %v387 = vpop.f32.mrb[0].mxu0
  %388 = vmatprep.mubr.bf16.mxu0 0
  %389 = vmatmul.mubr.bf16.gmra.mrb[0].mxu0 %v201
  %v390 = vpop.f32.mrb[0].mxu0
  %v391 = vadd.f32 0.0, %v390
  %v392 = vpop.f32.mrb[0].mxu0
  %v393 = vpop.f32.mrb[0].mxu0
  %v394 = vadd.f32 0.0, %v393
  %v395 = vpop.f32.mrb[0].mxu0
  %396 = vdwg.mxu0
  %v413 = vunpack.c.l.b16 %v93
  %v414 = vunpack.c.l.b16 %v94
  %v415 = vunpack.c.l.b16 %v95
  %v416 = vunpack.c.l.b16 %v96
  %v417 = vunpack.c.l.b16 %v97
  %v418 = vunpack.c.l.b16 %v98
  %v419 = vunpack.c.l.b16 %v99
  %v420 = vunpack.c.l.b16 %v100
  %v421 = vunpack.c.l.b16 %v101
  %v422 = vunpack.c.l.b16 %v102
  %v423 = vunpack.c.l.b16 %v103
  %v424 = vunpack.c.l.b16 %v104
  %v425 = vunpack.c.l.b16 %v105
  %v426 = vunpack.c.l.b16 %v106
  %v427 = vunpack.c.l.b16 %v107
  %v428 = vunpack.c.l.b16 %v108
  %v429 = vpack.c.b16 %v414, %v413
  %v430 = vpack.c.b16 %v416, %v415
  %v431 = vpack.c.b16 %v418, %v417
  %v432 = vpack.c.b16 %v420, %v419
  %v433 = vpack.c.b16 %v422, %v421
  %v434 = vpack.c.b16 %v424, %v423
  %v435 = vpack.c.b16 %v426, %v425
  %v436 = vpack.c.b16 %v428, %v427
  %445 = vmatprep.subr.bf16.mxu0 0
  %446 = vmatpush1.bf16.msra.mxu0 %v429
  %447 = vmatprep.subr.bf16.mxu0 0
  %448 = vmatpush1.bf16.msra.mxu0 %v430
  %449 = vmatprep.subr.bf16.mxu0 0
  %450 = vmatpush1.bf16.msra.mxu0 %v431
  %451 = vmatprep.subr.bf16.mxu0 0
  %452 = vmatpush1.bf16.msra.mxu0 %v432
  %453 = vmatprep.subr.bf16.mxu0 0
  %454 = vmatpush1.bf16.msra.mxu0 %v433
  %455 = vmatprep.subr.bf16.mxu0 0
  %456 = vmatpush1.bf16.msra.mxu0 %v434
  %457 = vmatprep.subr.bf16.mxu0 0
  %458 = vmatpush1.bf16.msra.mxu0 %v435
  %459 = vmatprep.subr.bf16.mxu0 0
  %460 = vmatpush1.bf16.msra.mxu0 %v436
  %461 = vmatprep.subr.bf16.mxu0 0
  %462 = vmatpush1.bf16.msra.mxu0 0
  %463 = vmatprep.subr.bf16.mxu0 0
  %464 = vmatpush1.bf16.msra.mxu0 0
  %465 = vmatprep.subr.bf16.mxu0 0
  %466 = vmatpush1.bf16.msra.mxu0 0
  %467 = vmatprep.subr.bf16.mxu0 0
  %468 = vmatpush1.bf16.msra.mxu0 0
  %469 = vmatprep.subr.bf16.mxu0 0
  %470 = vmatpush1.bf16.msra.mxu0 0
  %471 = vmatprep.subr.bf16.mxu0 0
  %472 = vmatpush1.bf16.msra.mxu0 0
  %473 = vmatprep.subr.bf16.mxu0 0
  %474 = vmatpush1.bf16.msra.mxu0 0
  %475 = vmatprep.subr.bf16.mxu0 0
  %476 = vmatpush1.bf16.msra.mxu0 0
  %477 = vmatprep.mubr.bf16.mxu0 0
  %478 = vmatmul.mubr.bf16.gmra.mrb[0].mxu0 %v200
  %v479 = vpop.f32.mrb[0].mxu0
  %v480 = vadd.f32 0.0, %v479
  %v481 = vpop.f32.mrb[0].mxu0
  %v482 = vpop.f32.mrb[0].mxu0
  %v483 = vadd.f32 0.0, %v482
  %v484 = vpop.f32.mrb[0].mxu0
  %485 = vmatprep.mubr.bf16.mxu0 0
  %486 = vmatmul.mubr.bf16.gmra.mrb[0].mxu0 %v201
  %v487 = vpop.f32.mrb[0].mxu0
  %v488 = vadd.f32 0.0, %v487
  %v489 = vpop.f32.mrb[0].mxu0
  %v490 = vpop.f32.mrb[0].mxu0
  %v491 = vadd.f32 0.0, %v490
  %v492 = vpop.f32.mrb[0].mxu0
  %493 = vdwg.mxu0
  %v494 = vpack.c.bf16 %v386, %v383
  %v495 = vpack.c.bf16 %v394, %v391
  %v496 = vpack.c.bf16 %v483, %v480
  %v497 = vpack.c.bf16 %v491, %v488
  %vm498 = vcmask 261120
  %v500 = vsel %vm498, %v277, 0
  %v503 = vsel %vm498, %v278, 0
  %v506 = vsel %vm498, %v279, 0
  %508 = vmatprep.subr.bf16.mxu0 0
  %509 = vmatpush1.bf16.msra.mxu0 %v496
  %510 = vmatprep.subr.bf16.mxu0 0
  %511 = vmatpush1.bf16.msra.mxu0 %v497
  %512 = vmatprep.subr.bf16.mxu0 0
  %513 = vmatpush1.bf16.msra.mxu0 0
  %514 = vmatprep.subr.bf16.mxu0 0
  %515 = vmatpush1.bf16.msra.mxu0 0
  %516 = vmatprep.subr.bf16.mxu0 0
  %517 = vmatpush1.bf16.msra.mxu0 0
  %518 = vmatprep.subr.bf16.mxu0 0
  %519 = vmatpush1.bf16.msra.mxu0 0
  %520 = vmatprep.subr.bf16.mxu0 0
  %521 = vmatpush1.bf16.msra.mxu0 0
  %522 = vmatprep.subr.bf16.mxu0 0
  %523 = vmatpush1.bf16.msra.mxu0 0
  %524 = vmatprep.subr.bf16.mxu0 0
  %525 = vmatpush1.bf16.msra.mxu0 0
  %526 = vmatprep.subr.bf16.mxu0 0
  %527 = vmatpush1.bf16.msra.mxu0 0
  %528 = vmatprep.subr.bf16.mxu0 0
  %529 = vmatpush1.bf16.msra.mxu0 0
  %530 = vmatprep.subr.bf16.mxu0 0
  %531 = vmatpush1.bf16.msra.mxu0 0
  %532 = vmatprep.subr.bf16.mxu0 0
  %533 = vmatpush1.bf16.msra.mxu0 0
  %534 = vmatprep.subr.bf16.mxu0 0
  %535 = vmatpush1.bf16.msra.mxu0 0
  %536 = vmatprep.subr.bf16.mxu0 0
  %537 = vmatpush1.bf16.msra.mxu0 0
  %538 = vmatprep.subr.bf16.mxu0 0
  %539 = vmatpush1.bf16.msra.mxu0 0
  %540 = vmatprep.mubr.bf16.mxu0 0
  %541 = vmatmul.mubr.bf16.gmra.mrb[0].mxu0 %v500
  %v542 = vpop.f32.mrb[0].mxu0
  %v543 = vadd.f32 0.0, %v542
  %v544 = vpop.f32.mrb[0].mxu0
  %v545 = vpop.f32.mrb[0].mxu0
  %v546 = vadd.f32 0.0, %v545
  %v547 = vpop.f32.mrb[0].mxu0
  %548 = vmatprep.mubr.bf16.mxu0 0
  %549 = vmatmul.mubr.bf16.gmra.mrb[0].mxu0 %v503
  %v550 = vpop.f32.mrb[0].mxu0
  %v551 = vadd.f32 0.0, %v550
  %v552 = vpop.f32.mrb[0].mxu0
  %v553 = vpop.f32.mrb[0].mxu0
  %v554 = vadd.f32 0.0, %v553
  %v555 = vpop.f32.mrb[0].mxu0
  %556 = vmatprep.mubr.bf16.mxu0 0
  %557 = vmatmul.mubr.bf16.gmra.mrb[0].mxu0 %v506
  %v558 = vpop.f32.mrb[0].mxu0
  %v559 = vadd.f32 0.0, %v558
  %v560 = vpop.f32.mrb[0].mxu0
  %v561 = vpop.f32.mrb[0].mxu0
  %v562 = vadd.f32 0.0, %v561
  %v563 = vpop.f32.mrb[0].mxu0
  %564 = vdwg.mxu0
  %v566 = vsel %vm498, %v238, 0
  %v569 = vsel %vm498, %v239, 0
  %v572 = vsel %vm498, %v240, 0
  %574 = vmatprep.subr.bf16.mxu0 0
  %575 = vmatpush1.bf16.msra.mxu0 %v494
  %576 = vmatprep.subr.bf16.mxu0 0
  %577 = vmatpush1.bf16.msra.mxu0 %v495
  %578 = vmatprep.subr.bf16.mxu0 0
  %579 = vmatpush1.bf16.msra.mxu0 0
  %580 = vmatprep.subr.bf16.mxu0 0
  %581 = vmatpush1.bf16.msra.mxu0 0
  %582 = vmatprep.subr.bf16.mxu0 0
  %583 = vmatpush1.bf16.msra.mxu0 0
  %584 = vmatprep.subr.bf16.mxu0 0
  %585 = vmatpush1.bf16.msra.mxu0 0
  %586 = vmatprep.subr.bf16.mxu0 0
  %587 = vmatpush1.bf16.msra.mxu0 0
  %588 = vmatprep.subr.bf16.mxu0 0
  %589 = vmatpush1.bf16.msra.mxu0 0
  %590 = vmatprep.subr.bf16.mxu0 0
  %591 = vmatpush1.bf16.msra.mxu0 0
  %592 = vmatprep.subr.bf16.mxu0 0
  %593 = vmatpush1.bf16.msra.mxu0 0
  %594 = vmatprep.subr.bf16.mxu0 0
  %595 = vmatpush1.bf16.msra.mxu0 0
  %596 = vmatprep.subr.bf16.mxu0 0
  %597 = vmatpush1.bf16.msra.mxu0 0
  %598 = vmatprep.subr.bf16.mxu0 0
  %599 = vmatpush1.bf16.msra.mxu0 0
  %600 = vmatprep.subr.bf16.mxu0 0
  %601 = vmatpush1.bf16.msra.mxu0 0
  %602 = vmatprep.subr.bf16.mxu0 0
  %603 = vmatpush1.bf16.msra.mxu0 0
  %604 = vmatprep.subr.bf16.mxu0 0
  %605 = vmatpush1.bf16.msra.mxu0 0
  %606 = vmatprep.mubr.bf16.mxu0 0
  %607 = vmatmul.mubr.bf16.gmra.mrb[0].mxu0 %v566
  %v608 = vpop.f32.mrb[0].mxu0
  %v609 = vadd.f32 %v543, %v608
  %v610 = vpop.f32.mrb[0].mxu0
  %v611 = vpop.f32.mrb[0].mxu0
  %v612 = vadd.f32 %v546, %v611
  %v613 = vpop.f32.mrb[0].mxu0
  %614 = vmatprep.mubr.bf16.mxu0 0
  %615 = vmatmul.mubr.bf16.gmra.mrb[0].mxu0 %v569
  %v616 = vpop.f32.mrb[0].mxu0
  %v617 = vadd.f32 %v551, %v616
  %v618 = vpop.f32.mrb[0].mxu0
  %v619 = vpop.f32.mrb[0].mxu0
  %v620 = vadd.f32 %v554, %v619
  %v621 = vpop.f32.mrb[0].mxu0
  %622 = vmatprep.mubr.bf16.mxu0 0
  %623 = vmatmul.mubr.bf16.gmra.mrb[0].mxu0 %v572
  %v624 = vpop.f32.mrb[0].mxu0
  %v625 = vadd.f32 %v559, %v624
  %v626 = vpop.f32.mrb[0].mxu0
  %v627 = vpop.f32.mrb[0].mxu0
  %v628 = vadd.f32 %v562, %v627
  %v629 = vpop.f32.mrb[0].mxu0
  %630 = vdwg.mxu0
  %v631 = vpack.c.bf16 %v195, %v194
  %v632 = vpack.c.bf16 %v197, %v196
  %v633 = vpack.c.bf16 %v199, %v198
  %v650 = vunpack.c.l.b16 %v109
  %v651 = vunpack.c.l.b16 %v110
  %v652 = vunpack.c.l.b16 %v111
  %v653 = vunpack.c.l.b16 %v112
  %v654 = vunpack.c.l.b16 %v113
  %v655 = vunpack.c.l.b16 %v114
  %v656 = vunpack.c.l.b16 %v115
  %v657 = vunpack.c.l.b16 %v116
  %v658 = vunpack.c.l.b16 %v117
  %v659 = vunpack.c.l.b16 %v118
  %v660 = vunpack.c.l.b16 %v119
  %v661 = vunpack.c.l.b16 %v120
  %v662 = vunpack.c.l.b16 %v121
  %v663 = vunpack.c.l.b16 %v122
  %v664 = vunpack.c.l.b16 %v123
  %v665 = vunpack.c.l.b16 %v124
  %v666 = vpack.c.b16 %v651, %v650
  %v667 = vpack.c.b16 %v653, %v652
  %v668 = vpack.c.b16 %v655, %v654
  %v669 = vpack.c.b16 %v657, %v656
  %v670 = vpack.c.b16 %v659, %v658
  %v671 = vpack.c.b16 %v661, %v660
  %v672 = vpack.c.b16 %v663, %v662
  %v673 = vpack.c.b16 %v665, %v664
  %682 = vmatprep.subr.bf16.mxu0 0
  %683 = vmatpush1.bf16.msra.mxu0 %v666
  %684 = vmatprep.subr.bf16.mxu0 0
  %685 = vmatpush1.bf16.msra.mxu0 %v667
  %686 = vmatprep.subr.bf16.mxu0 0
  %687 = vmatpush1.bf16.msra.mxu0 %v668
  %688 = vmatprep.subr.bf16.mxu0 0
  %689 = vmatpush1.bf16.msra.mxu0 %v669
  %690 = vmatprep.subr.bf16.mxu0 0
  %691 = vmatpush1.bf16.msra.mxu0 %v670
  %692 = vmatprep.subr.bf16.mxu0 0
  %693 = vmatpush1.bf16.msra.mxu0 %v671
  %694 = vmatprep.subr.bf16.mxu0 0
  %695 = vmatpush1.bf16.msra.mxu0 %v672
  %696 = vmatprep.subr.bf16.mxu0 0
  %697 = vmatpush1.bf16.msra.mxu0 %v673
  %698 = vmatprep.subr.bf16.mxu0 0
  %699 = vmatpush1.bf16.msra.mxu0 0
  %700 = vmatprep.subr.bf16.mxu0 0
  %701 = vmatpush1.bf16.msra.mxu0 0
  %702 = vmatprep.subr.bf16.mxu0 0
  %703 = vmatpush1.bf16.msra.mxu0 0
  %704 = vmatprep.subr.bf16.mxu0 0
  %705 = vmatpush1.bf16.msra.mxu0 0
  %706 = vmatprep.subr.bf16.mxu0 0
  %707 = vmatpush1.bf16.msra.mxu0 0
  %708 = vmatprep.subr.bf16.mxu0 0
  %709 = vmatpush1.bf16.msra.mxu0 0
  %710 = vmatprep.subr.bf16.mxu0 0
  %711 = vmatpush1.bf16.msra.mxu0 0
  %712 = vmatprep.subr.bf16.mxu0 0
  %713 = vmatpush1.bf16.msra.mxu0 0
  %714 = vmatprep.mubr.bf16.mxu0 0
  %715 = vmatmul.mubr.bf16.gmra.mrb[0].mxu0 %v631
  %v716 = vpop.f32.mrb[0].mxu0
  %v717 = vadd.f32 0.0, %v716
  %v718 = vpop.f32.mrb[0].mxu0
  %v719 = vpop.f32.mrb[0].mxu0
  %v720 = vadd.f32 0.0, %v719
  %v721 = vpop.f32.mrb[0].mxu0
  %722 = vmatprep.mubr.bf16.mxu0 0
  %723 = vmatmul.mubr.bf16.gmra.mrb[0].mxu0 %v632
  %v724 = vpop.f32.mrb[0].mxu0
  %v725 = vadd.f32 0.0, %v724
  %v726 = vpop.f32.mrb[0].mxu0
  %v727 = vpop.f32.mrb[0].mxu0
  %v728 = vadd.f32 0.0, %v727
  %v729 = vpop.f32.mrb[0].mxu0
  %730 = vmatprep.mubr.bf16.mxu0 0
  %731 = vmatmul.mubr.bf16.gmra.mrb[0].mxu0 %v633
  %v732 = vpop.f32.mrb[0].mxu0
  %v733 = vadd.f32 0.0, %v732
  %v734 = vpop.f32.mrb[0].mxu0
  %v735 = vpop.f32.mrb[0].mxu0
  %v736 = vadd.f32 0.0, %v735
  %v737 = vpop.f32.mrb[0].mxu0
  %738 = vdwg.mxu0
  %v739 = vadd.f32 %v609, %v717
  %v740 = vadd.f32 %v612, %v720
  %v741 = vadd.f32 %v617, %v725
  %v742 = vadd.f32 %v620, %v728
  %v743 = vadd.f32 %v625, %v733
  %v744 = vadd.f32 %v628, %v736
  %v745 = vlaneseq
  %v746 = vshrl.u32 %v745, 7
  %v747 = vsub.s32 0, %v746
  %v748 = vrot.slane %v189, %v747
  %v749 = vadd.f32 %v739, %v748
  %v750 = vadd.f32 %v740, %v748
  %v751 = vadd.f32 %v741, %v748
  %v752 = vadd.f32 %v742, %v748
  %v753 = vadd.f32 %v743, %v748
  %v754 = vadd.f32 %v744, %v748
  %v755 = vmax.f32 %v749, 0.0
  %v756 = vmax.f32 %v750, 0.0
  %v757 = vmax.f32 %v751, 0.0
  %v758 = vmax.f32 %v752, 0.0
  %v759 = vmax.f32 %v753, 0.0
  %v760 = vmax.f32 %v754, 0.0
  %v761 = vpack.c.bf16 %v756, %v755
  %v762 = vpack.c.bf16 %v758, %v757
  %v763 = vpack.c.bf16 %v760, %v759
  %v764 = vlaneseq
  %v765 = vshrl.u32 %v764, 7
  %v766 = vsub.s32 1, %v765
  %v767 = vrot.slane %v189, %v766
  %v784 = vunpack.c.l.b16 %v125
  %v785 = vunpack.c.l.b16 %v126
  %v786 = vunpack.c.l.b16 %v127
  %v787 = vunpack.c.l.b16 %v128
  %v788 = vunpack.c.l.b16 %v129
  %v789 = vunpack.c.l.b16 %v130
  %v790 = vunpack.c.l.b16 %v131
  %v791 = vunpack.c.l.b16 %v132
  %v792 = vunpack.c.l.b16 %v133
  %v793 = vunpack.c.l.b16 %v134
  %v794 = vunpack.c.l.b16 %v135
  %v795 = vunpack.c.l.b16 %v136
  %v796 = vunpack.c.l.b16 %v137
  %v797 = vunpack.c.l.b16 %v138
  %v798 = vunpack.c.l.b16 %v139
  %v799 = vunpack.c.l.b16 %v140
  %v800 = vpack.c.b16 %v785, %v784
  %v801 = vpack.c.b16 %v787, %v786
  %v802 = vpack.c.b16 %v789, %v788
  %v803 = vpack.c.b16 %v791, %v790
  %v804 = vpack.c.b16 %v793, %v792
  %v805 = vpack.c.b16 %v795, %v794
  %v806 = vpack.c.b16 %v797, %v796
  %v807 = vpack.c.b16 %v799, %v798
  %816 = vmatprep.subr.bf16.mxu0 0
  %817 = vmatpush1.bf16.msra.mxu0 %v800
  %818 = vmatprep.subr.bf16.mxu0 0
  %819 = vmatpush1.bf16.msra.mxu0 %v801
  %820 = vmatprep.subr.bf16.mxu0 0
  %821 = vmatpush1.bf16.msra.mxu0 %v802
  %822 = vmatprep.subr.bf16.mxu0 0
  %823 = vmatpush1.bf16.msra.mxu0 %v803
  %824 = vmatprep.subr.bf16.mxu0 0
  %825 = vmatpush1.bf16.msra.mxu0 %v804
  %826 = vmatprep.subr.bf16.mxu0 0
  %827 = vmatpush1.bf16.msra.mxu0 %v805
  %828 = vmatprep.subr.bf16.mxu0 0
  %829 = vmatpush1.bf16.msra.mxu0 %v806
  %830 = vmatprep.subr.bf16.mxu0 0
  %831 = vmatpush1.bf16.msra.mxu0 %v807
  %832 = vmatprep.subr.bf16.mxu0 0
  %833 = vmatpush1.bf16.msra.mxu0 0
  %834 = vmatprep.subr.bf16.mxu0 0
  %835 = vmatpush1.bf16.msra.mxu0 0
  %836 = vmatprep.subr.bf16.mxu0 0
  %837 = vmatpush1.bf16.msra.mxu0 0
  %838 = vmatprep.subr.bf16.mxu0 0
  %839 = vmatpush1.bf16.msra.mxu0 0
  %840 = vmatprep.subr.bf16.mxu0 0
  %841 = vmatpush1.bf16.msra.mxu0 0
  %842 = vmatprep.subr.bf16.mxu0 0
  %843 = vmatpush1.bf16.msra.mxu0 0
  %844 = vmatprep.subr.bf16.mxu0 0
  %845 = vmatpush1.bf16.msra.mxu0 0
  %846 = vmatprep.subr.bf16.mxu0 0
  %847 = vmatpush1.bf16.msra.mxu0 0
  %848 = vmatprep.mubr.bf16.mxu0 0
  %849 = vmatmul.mubr.bf16.gmra.mrb[0].mxu0 %v761
  %v850 = vpop.f32.mrb[0].mxu0
  %v851 = vadd.f32 %v767, %v850
  %v852 = vpop.f32.mrb[0].mxu0
  %v853 = vpop.f32.mrb[0].mxu0
  %v854 = vadd.f32 %v767, %v853
  %v855 = vpop.f32.mrb[0].mxu0
  %856 = vmatprep.mubr.bf16.mxu0 0
  %857 = vmatmul.mubr.bf16.gmra.mrb[0].mxu0 %v762
  %v858 = vpop.f32.mrb[0].mxu0
  %v859 = vadd.f32 %v767, %v858
  %v860 = vpop.f32.mrb[0].mxu0
  %v861 = vpop.f32.mrb[0].mxu0
  %v862 = vadd.f32 %v767, %v861
  %v863 = vpop.f32.mrb[0].mxu0
  %864 = vmatprep.mubr.bf16.mxu0 0
  %865 = vmatmul.mubr.bf16.gmra.mrb[0].mxu0 %v763
  %v866 = vpop.f32.mrb[0].mxu0
  %v867 = vadd.f32 %v767, %v866
  %v868 = vpop.f32.mrb[0].mxu0
  %v869 = vpop.f32.mrb[0].mxu0
  %v870 = vadd.f32 %v767, %v869
  %v871 = vpop.f32.mrb[0].mxu0
  %872 = vdwg.mxu0
  %873 = vadd.xlane.f32.xlu0 %v851
  %v874 = vpop.xlane.xlu0 %873
  %875 = vadd.xlane.f32.xlu0 %v854
  %v876 = vpop.xlane.xlu0 %875
  %877 = vadd.xlane.f32.xlu0 %v859
  %v878 = vpop.xlane.xlu0 %877
  %879 = vadd.xlane.f32.xlu0 %v862
  %v880 = vpop.xlane.xlu0 %879
  %881 = vadd.xlane.f32.xlu0 %v867
  %v882 = vpop.xlane.xlu0 %881
  %883 = vadd.xlane.f32.xlu0 %v870
  %v884 = vpop.xlane.xlu0 %883
  %v885 = vmul.f32 %v874, 0.03125
  %v886 = vmul.f32 %v876, 0.03125
  %v887 = vmul.f32 %v878, 0.03125
  %v888 = vmul.f32 %v880, 0.03125
  %v889 = vmul.f32 %v882, 0.03125
  %v890 = vmul.f32 %v884, 0.03125
  %v891 = vsub.f32 %v851, %v885
  %v892 = vsub.f32 %v854, %v886
  %v893 = vsub.f32 %v859, %v887
  %v894 = vsub.f32 %v862, %v888
  %v895 = vsub.f32 %v867, %v889
  %v896 = vsub.f32 %v870, %v890
  %v897 = vmul.f32 %v891, %v52
  %v898 = vmul.f32 %v892, %v52
  %v899 = vmul.f32 %v893, %v52
  %v900 = vmul.f32 %v894, %v52
  %v901 = vmul.f32 %v895, %v52
  %v902 = vmul.f32 %v896, %v52
  %v903 = vmul.f32 %v897, %v897
  %v904 = vmul.f32 %v898, %v898
  %v905 = vmul.f32 %v899, %v899
  %v906 = vmul.f32 %v900, %v900
  %v907 = vmul.f32 %v901, %v901
  %v908 = vmul.f32 %v902, %v902
  %909 = vadd.xlane.f32.xlu0 %v903
  %v910 = vpop.xlane.xlu0 %909
  %911 = vadd.xlane.f32.xlu0 %v904
  %v912 = vpop.xlane.xlu0 %911
  %913 = vadd.xlane.f32.xlu0 %v905
  %v914 = vpop.xlane.xlu0 %913
  %915 = vadd.xlane.f32.xlu0 %v906
  %v916 = vpop.xlane.xlu0 %915
  %917 = vadd.xlane.f32.xlu0 %v907
  %v918 = vpop.xlane.xlu0 %917
  %919 = vadd.xlane.f32.xlu0 %v908
  %v920 = vpop.xlane.xlu0 %919
  %v921 = vmul.f32 %v910, 0.03125
  %v922 = vmul.f32 %v912, 0.03125
  %v923 = vmul.f32 %v914, 0.03125
  %v924 = vmul.f32 %v916, 0.03125
  %v925 = vmul.f32 %v918, 0.03125
  %v926 = vmul.f32 %v920, 0.03125
  %v927 = vadd.f32 %v921, 1e-05
  %v928 = vadd.f32 %v922, 1e-05
  %v929 = vadd.f32 %v923, 1e-05
  %v930 = vadd.f32 %v924, 1e-05
  %v931 = vadd.f32 %v925, 1e-05
  %v932 = vadd.f32 %v926, 1e-05
  %v933 = vrsqrt.pop %v927
  %v934 = vrsqrt.pop %v928
  %v935 = vrsqrt.pop %v929
  %v936 = vrsqrt.pop %v930
  %v937 = vrsqrt.pop %v931
  %v938 = vrsqrt.pop %v932
  %v939 = vmul.f32 %v897, %v933
  %v940 = vmul.f32 %v898, %v934
  %v941 = vmul.f32 %v899, %v935
  %v942 = vmul.f32 %v900, %v936
  %v943 = vmul.f32 %v901, %v937
  %v944 = vmul.f32 %v902, %v938
  %v945 = vlaneseq
  %v946 = vshrl.u32 %v945, 7
  %v947 = vsub.s32 2, %v946
  %v948 = vrot.slane %v189, %v947
  %v949 = vmul.f32 %v939, %v948
  %v950 = vmul.f32 %v940, %v948
  %v951 = vmul.f32 %v941, %v948
  %v952 = vmul.f32 %v942, %v948
  %v953 = vmul.f32 %v943, %v948
  %v954 = vmul.f32 %v944, %v948
  %v955 = vlaneseq
  %v956 = vshrl.u32 %v955, 7
  %v957 = vsub.s32 3, %v956
  %v958 = vrot.slane %v189, %v957
  %v959 = vadd.f32 %v949, %v958
  %v960 = vadd.f32 %v950, %v958
  %v961 = vadd.f32 %v951, %v958
  %v962 = vadd.f32 %v952, %v958
  %v963 = vadd.f32 %v953, %v958
  %v964 = vadd.f32 %v954, %v958
  %v965 = vadd.s32 %v281, 32
  %v966 = vadd.s32 %v281, 40
  %vm967 = vcmp.lt.s32.totalorder %v281, 48
  %vm968 = vcmp.lt.s32.totalorder %v282, 48
  %vm969 = vcmp.lt.s32.totalorder %v283, 48
  %vm970 = vcmp.lt.s32.totalorder %v284, 48
  %vm971 = vcmp.lt.s32.totalorder %v965, 48
  %vm972 = vcmp.lt.s32.totalorder %v966, 48
  %v973 = vsel %vm967, 1, 0
  %v974 = vsel %vm968, 1, 0
  %v975 = vsel %vm969, 1, 0
  %v976 = vsel %vm970, 1, 0
  %v977 = vsel %vm971, 1, 0
  %v978 = vsel %vm972, 1, 0
  %v979 = vcvt.s32.f32 %v973
  %v980 = vcvt.s32.f32 %v974
  %v981 = vcvt.s32.f32 %v975
  %v982 = vcvt.s32.f32 %v976
  %v983 = vcvt.s32.f32 %v977
  %v984 = vcvt.s32.f32 %v978
  %v985 = vmul.f32 %v959, %v979
  %v986 = vmul.f32 %v960, %v980
  %v987 = vmul.f32 %v961, %v981
  %v988 = vmul.f32 %v962, %v982
  %v989 = vmul.f32 %v963, %v983
  %v990 = vmul.f32 %v964, %v984
  %v991 = vadd.f32 %v194, %v985
  %v992 = vadd.f32 %v195, %v986
  %v993 = vadd.f32 %v196, %v987
  %v994 = vadd.f32 %v197, %v988
  %v995 = vadd.f32 %v198, %v989
  %v996 = vadd.f32 %v199, %v990
  %997 = vst [vmem:[%s15] sm:$0xff] %v991
  %998 = vst [vmem:[%s15 + $0x8] sm:$0xff] %v992
  %999 = vst [vmem:[%s15 + $0x10] sm:$0xff] %v993
  %1000 = vst [vmem:[%s15 + $0x18] sm:$0xff] %v994
  %1001 = vst [vmem:[%s15 + $0x20] sm:$0xff] %v995
  %1002 = vst [vmem:[%s15 + $0x28] sm:$0xff] %v996
  %v1003 = vpack.c.bf16 %v992, %v991
  %v1004 = vpack.c.bf16 %v994, %v993
  %v1005 = vpack.c.bf16 %v996, %v995
  %vm1006 = vcmask 392192
  %v1008 = vsel %vm1006, %v298, 0
  %v1011 = vsel %vm1006, %v299, 0
  %1013 = vmatprep.subr.bf16.mxu0 0
  %1014 = vmatpush1.bf16.msra.mxu0 %v1003
  %1015 = vmatprep.subr.bf16.mxu0 0
  %1016 = vmatpush1.bf16.msra.mxu0 %v1004
  %1017 = vmatprep.subr.bf16.mxu0 0
  %1018 = vmatpush1.bf16.msra.mxu0 %v1005
  %1019 = vmatprep.subr.bf16.mxu0 0
  %1020 = vmatpush1.bf16.msra.mxu0 0
  %1021 = vmatprep.subr.bf16.mxu0 0
  %1022 = vmatpush1.bf16.msra.mxu0 0
  %1023 = vmatprep.subr.bf16.mxu0 0
  %1024 = vmatpush1.bf16.msra.mxu0 0
  %1025 = vmatprep.subr.bf16.mxu0 0
  %1026 = vmatpush1.bf16.msra.mxu0 0
  %1027 = vmatprep.subr.bf16.mxu0 0
  %1028 = vmatpush1.bf16.msra.mxu0 0
  %1029 = vmatprep.subr.bf16.mxu0 0
  %1030 = vmatpush1.bf16.msra.mxu0 0
  %1031 = vmatprep.subr.bf16.mxu0 0
  %1032 = vmatpush1.bf16.msra.mxu0 0
  %1033 = vmatprep.subr.bf16.mxu0 0
  %1034 = vmatpush1.bf16.msra.mxu0 0
  %1035 = vmatprep.subr.bf16.mxu0 0
  %1036 = vmatpush1.bf16.msra.mxu0 0
  %1037 = vmatprep.subr.bf16.mxu0 0
  %1038 = vmatpush1.bf16.msra.mxu0 0
  %1039 = vmatprep.subr.bf16.mxu0 0
  %1040 = vmatpush1.bf16.msra.mxu0 0
  %1041 = vmatprep.subr.bf16.mxu0 0
  %1042 = vmatpush1.bf16.msra.mxu0 0
  %1043 = vmatprep.subr.bf16.mxu0 0
  %1044 = vmatpush1.bf16.msra.mxu0 0
  %1045 = vmatprep.mubr.bf16.mxu0 0
  %1046 = vmatmul.mubr.bf16.gmra.mrb[0].mxu0 %v1008
  %v1047 = vpop.f32.mrb[0].mxu0
  %v1048 = vadd.f32 0.0, %v1047
  %v1049 = vpop.f32.mrb[0].mxu0
  %v1050 = vpop.f32.mrb[0].mxu0
  %v1051 = vadd.f32 0.0, %v1050
  %v1052 = vpop.f32.mrb[0].mxu0
  %1053 = vmatprep.mubr.bf16.mxu0 0
  %1054 = vmatmul.mubr.bf16.gmra.mrb[0].mxu0 %v1011
  %v1055 = vpop.f32.mrb[0].mxu0
  %v1056 = vadd.f32 0.0, %v1055
  %v1057 = vpop.f32.mrb[0].mxu0
  %v1058 = vpop.f32.mrb[0].mxu0
  %v1059 = vadd.f32 0.0, %v1058
  %v1060 = vpop.f32.mrb[0].mxu0
  %1061 = vdwg.mxu0
  %v1062 = vpack.c.bf16 %v1051, %v1048
  %v1063 = vpack.c.bf16 %v1059, %v1056
  %v1080 = vunpack.c.l.b16 %v157
  %v1081 = vunpack.c.l.b16 %v158
  %v1082 = vunpack.c.l.b16 %v159
  %v1083 = vunpack.c.l.b16 %v160
  %v1084 = vunpack.c.l.b16 %v161
  %v1085 = vunpack.c.l.b16 %v162
  %v1086 = vunpack.c.l.b16 %v163
  %v1087 = vunpack.c.l.b16 %v164
  %v1088 = vunpack.c.l.b16 %v165
  %v1089 = vunpack.c.l.b16 %v166
  %v1090 = vunpack.c.l.b16 %v167
  %v1091 = vunpack.c.l.b16 %v168
  %v1092 = vunpack.c.l.b16 %v169
  %v1093 = vunpack.c.l.b16 %v170
  %v1094 = vunpack.c.l.b16 %v171
  %v1095 = vunpack.c.l.b16 %v172
  %v1096 = vpack.c.b16 %v1081, %v1080
  %v1097 = vpack.c.b16 %v1083, %v1082
  %v1098 = vpack.c.b16 %v1085, %v1084
  %v1099 = vpack.c.b16 %v1087, %v1086
  %v1100 = vpack.c.b16 %v1089, %v1088
  %v1101 = vpack.c.b16 %v1091, %v1090
  %v1102 = vpack.c.b16 %v1093, %v1092
  %v1103 = vpack.c.b16 %v1095, %v1094
  %1112 = vmatprep.subr.bf16.mxu0 0
  %1113 = vmatpush1.bf16.msra.mxu0 %v1096
  %1114 = vmatprep.subr.bf16.mxu0 0
  %1115 = vmatpush1.bf16.msra.mxu0 %v1097
  %1116 = vmatprep.subr.bf16.mxu0 0
  %1117 = vmatpush1.bf16.msra.mxu0 %v1098
  %1118 = vmatprep.subr.bf16.mxu0 0
  %1119 = vmatpush1.bf16.msra.mxu0 %v1099
  %1120 = vmatprep.subr.bf16.mxu0 0
  %1121 = vmatpush1.bf16.msra.mxu0 %v1100
  %1122 = vmatprep.subr.bf16.mxu0 0
  %1123 = vmatpush1.bf16.msra.mxu0 %v1101
  %1124 = vmatprep.subr.bf16.mxu0 0
  %1125 = vmatpush1.bf16.msra.mxu0 %v1102
  %1126 = vmatprep.subr.bf16.mxu0 0
  %1127 = vmatpush1.bf16.msra.mxu0 %v1103
  %1128 = vmatprep.subr.bf16.mxu0 0
  %1129 = vmatpush1.bf16.msra.mxu0 0
  %1130 = vmatprep.subr.bf16.mxu0 0
  %1131 = vmatpush1.bf16.msra.mxu0 0
  %1132 = vmatprep.subr.bf16.mxu0 0
  %1133 = vmatpush1.bf16.msra.mxu0 0
  %1134 = vmatprep.subr.bf16.mxu0 0
  %1135 = vmatpush1.bf16.msra.mxu0 0
  %1136 = vmatprep.subr.bf16.mxu0 0
  %1137 = vmatpush1.bf16.msra.mxu0 0
  %1138 = vmatprep.subr.bf16.mxu0 0
  %1139 = vmatpush1.bf16.msra.mxu0 0
  %1140 = vmatprep.subr.bf16.mxu0 0
  %1141 = vmatpush1.bf16.msra.mxu0 0
  %1142 = vmatprep.subr.bf16.mxu0 0
  %1143 = vmatpush1.bf16.msra.mxu0 0
  %1144 = vmatprep.mubr.bf16.mxu0 0
  %1145 = vmatmul.mubr.bf16.gmra.mrb[0].mxu0 %v1062
  %v1146 = vpop.f32.mrb[0].mxu0
  %v1147 = vadd.f32 0.0, %v1146
  %v1148 = vpop.f32.mrb[0].mxu0
  %v1149 = vpop.f32.mrb[0].mxu0
  %v1150 = vadd.f32 0.0, %v1149
  %v1151 = vpop.f32.mrb[0].mxu0
  %1152 = vmatprep.mubr.bf16.mxu0 0
  %1153 = vmatmul.mubr.bf16.gmra.mrb[0].mxu0 %v1063
  %v1154 = vpop.f32.mrb[0].mxu0
  %v1155 = vadd.f32 0.0, %v1154
  %v1156 = vpop.f32.mrb[0].mxu0
  %v1157 = vpop.f32.mrb[0].mxu0
  %v1158 = vadd.f32 0.0, %v1157
  %v1159 = vpop.f32.mrb[0].mxu0
  %1160 = vdwg.mxu0
  %v1177 = vunpack.c.l.b16 %v141
  %v1178 = vunpack.c.l.b16 %v142
  %v1179 = vunpack.c.l.b16 %v143
  %v1180 = vunpack.c.l.b16 %v144
  %v1181 = vunpack.c.l.b16 %v145
  %v1182 = vunpack.c.l.b16 %v146
  %v1183 = vunpack.c.l.b16 %v147
  %v1184 = vunpack.c.l.b16 %v148
  %v1185 = vunpack.c.l.b16 %v149
  %v1186 = vunpack.c.l.b16 %v150
  %v1187 = vunpack.c.l.b16 %v151
  %v1188 = vunpack.c.l.b16 %v152
  %v1189 = vunpack.c.l.b16 %v153
  %v1190 = vunpack.c.l.b16 %v154
  %v1191 = vunpack.c.l.b16 %v155
  %v1192 = vunpack.c.l.b16 %v156
  %v1193 = vpack.c.b16 %v1178, %v1177
  %v1194 = vpack.c.b16 %v1180, %v1179
  %v1195 = vpack.c.b16 %v1182, %v1181
  %v1196 = vpack.c.b16 %v1184, %v1183
  %v1197 = vpack.c.b16 %v1186, %v1185
  %v1198 = vpack.c.b16 %v1188, %v1187
  %v1199 = vpack.c.b16 %v1190, %v1189
  %v1200 = vpack.c.b16 %v1192, %v1191
  %1209 = vmatprep.subr.bf16.mxu0 0
  %1210 = vmatpush1.bf16.msra.mxu0 %v1193
  %1211 = vmatprep.subr.bf16.mxu0 0
  %1212 = vmatpush1.bf16.msra.mxu0 %v1194
  %1213 = vmatprep.subr.bf16.mxu0 0
  %1214 = vmatpush1.bf16.msra.mxu0 %v1195
  %1215 = vmatprep.subr.bf16.mxu0 0
  %1216 = vmatpush1.bf16.msra.mxu0 %v1196
  %1217 = vmatprep.subr.bf16.mxu0 0
  %1218 = vmatpush1.bf16.msra.mxu0 %v1197
  %1219 = vmatprep.subr.bf16.mxu0 0
  %1220 = vmatpush1.bf16.msra.mxu0 %v1198
  %1221 = vmatprep.subr.bf16.mxu0 0
  %1222 = vmatpush1.bf16.msra.mxu0 %v1199
  %1223 = vmatprep.subr.bf16.mxu0 0
  %1224 = vmatpush1.bf16.msra.mxu0 %v1200
  %1225 = vmatprep.subr.bf16.mxu0 0
  %1226 = vmatpush1.bf16.msra.mxu0 0
  %1227 = vmatprep.subr.bf16.mxu0 0
  %1228 = vmatpush1.bf16.msra.mxu0 0
  %1229 = vmatprep.subr.bf16.mxu0 0
  %1230 = vmatpush1.bf16.msra.mxu0 0
  %1231 = vmatprep.subr.bf16.mxu0 0
  %1232 = vmatpush1.bf16.msra.mxu0 0
  %1233 = vmatprep.subr.bf16.mxu0 0
  %1234 = vmatpush1.bf16.msra.mxu0 0
  %1235 = vmatprep.subr.bf16.mxu0 0
  %1236 = vmatpush1.bf16.msra.mxu0 0
  %1237 = vmatprep.subr.bf16.mxu0 0
  %1238 = vmatpush1.bf16.msra.mxu0 0
  %1239 = vmatprep.subr.bf16.mxu0 0
  %1240 = vmatpush1.bf16.msra.mxu0 0
  %1241 = vmatprep.mubr.bf16.mxu0 0
  %1242 = vmatmul.mubr.bf16.gmra.mrb[0].mxu0 %v200
  %v1243 = vpop.f32.mrb[0].mxu0
  %v1244 = vadd.f32 %v1147, %v1243
  %v1245 = vpop.f32.mrb[0].mxu0
  %v1246 = vpop.f32.mrb[0].mxu0
  %v1247 = vadd.f32 %v1150, %v1246
  %v1248 = vpop.f32.mrb[0].mxu0
  %1249 = vmatprep.mubr.bf16.mxu0 0
  %1250 = vmatmul.mubr.bf16.gmra.mrb[0].mxu0 %v201
  %v1251 = vpop.f32.mrb[0].mxu0
  %v1252 = vadd.f32 %v1155, %v1251
  %v1253 = vpop.f32.mrb[0].mxu0
  %v1254 = vpop.f32.mrb[0].mxu0
  %v1255 = vadd.f32 %v1158, %v1254
  %v1256 = vpop.f32.mrb[0].mxu0
  %1257 = vdwg.mxu0
  %v1258 = vlaneseq
  %v1259 = vshrl.u32 %v1258, 7
  %v1260 = vsub.s32 4, %v1259
  %v1261 = vrot.slane %v189, %v1260
  %v1262 = vadd.f32 %v1244, %v1261
  %v1263 = vadd.f32 %v1247, %v1261
  %v1264 = vadd.f32 %v1252, %v1261
  %v1265 = vadd.f32 %v1255, %v1261
  %v1266 = vmax.f32 %v1262, 0.0
  %v1267 = vmax.f32 %v1263, 0.0
  %v1268 = vmax.f32 %v1264, 0.0
  %v1269 = vmax.f32 %v1265, 0.0
  %v1270 = vpack.c.bf16 %v1267, %v1266
  %v1271 = vpack.c.bf16 %v1269, %v1268
  %v1272 = vlaneseq
  %v1273 = vshrl.u32 %v1272, 7
  %v1274 = vsub.s32 5, %v1273
  %v1275 = vrot.slane %v189, %v1274
  %v1292 = vunpack.c.l.b16 %v173
  %v1293 = vunpack.c.l.b16 %v174
  %v1294 = vunpack.c.l.b16 %v175
  %v1295 = vunpack.c.l.b16 %v176
  %v1296 = vunpack.c.l.b16 %v177
  %v1297 = vunpack.c.l.b16 %v178
  %v1298 = vunpack.c.l.b16 %v179
  %v1299 = vunpack.c.l.b16 %v180
  %v1300 = vunpack.c.l.b16 %v181
  %v1301 = vunpack.c.l.b16 %v182
  %v1302 = vunpack.c.l.b16 %v183
  %v1303 = vunpack.c.l.b16 %v184
  %v1304 = vunpack.c.l.b16 %v185
  %v1305 = vunpack.c.l.b16 %v186
  %v1306 = vunpack.c.l.b16 %v187
  %v1307 = vunpack.c.l.b16 %v188
  %v1308 = vpack.c.b16 %v1293, %v1292
  %v1309 = vpack.c.b16 %v1295, %v1294
  %v1310 = vpack.c.b16 %v1297, %v1296
  %v1311 = vpack.c.b16 %v1299, %v1298
  %v1312 = vpack.c.b16 %v1301, %v1300
  %v1313 = vpack.c.b16 %v1303, %v1302
  %v1314 = vpack.c.b16 %v1305, %v1304
  %v1315 = vpack.c.b16 %v1307, %v1306
  %1324 = vmatprep.subr.bf16.mxu0 0
  %1325 = vmatpush1.bf16.msra.mxu0 %v1308
  %1326 = vmatprep.subr.bf16.mxu0 0
  %1327 = vmatpush1.bf16.msra.mxu0 %v1309
  %1328 = vmatprep.subr.bf16.mxu0 0
  %1329 = vmatpush1.bf16.msra.mxu0 %v1310
  %1330 = vmatprep.subr.bf16.mxu0 0
  %1331 = vmatpush1.bf16.msra.mxu0 %v1311
  %1332 = vmatprep.subr.bf16.mxu0 0
  %1333 = vmatpush1.bf16.msra.mxu0 %v1312
  %1334 = vmatprep.subr.bf16.mxu0 0
  %1335 = vmatpush1.bf16.msra.mxu0 %v1313
  %1336 = vmatprep.subr.bf16.mxu0 0
  %1337 = vmatpush1.bf16.msra.mxu0 %v1314
  %1338 = vmatprep.subr.bf16.mxu0 0
  %1339 = vmatpush1.bf16.msra.mxu0 %v1315
  %1340 = vmatprep.subr.bf16.mxu0 0
  %1341 = vmatpush1.bf16.msra.mxu0 0
  %1342 = vmatprep.subr.bf16.mxu0 0
  %1343 = vmatpush1.bf16.msra.mxu0 0
  %1344 = vmatprep.subr.bf16.mxu0 0
  %1345 = vmatpush1.bf16.msra.mxu0 0
  %1346 = vmatprep.subr.bf16.mxu0 0
  %1347 = vmatpush1.bf16.msra.mxu0 0
  %1348 = vmatprep.subr.bf16.mxu0 0
  %1349 = vmatpush1.bf16.msra.mxu0 0
  %1350 = vmatprep.subr.bf16.mxu0 0
  %1351 = vmatpush1.bf16.msra.mxu0 0
  %1352 = vmatprep.subr.bf16.mxu0 0
  %1353 = vmatpush1.bf16.msra.mxu0 0
  %1354 = vmatprep.subr.bf16.mxu0 0
  %1355 = vmatpush1.bf16.msra.mxu0 0
  %1356 = vmatprep.mubr.bf16.mxu0 0
  %1357 = vmatmul.mubr.bf16.gmra.mrb[0].mxu0 %v1270
  %v1358 = vpop.f32.mrb[0].mxu0
  %v1359 = vadd.f32 %v1275, %v1358
  %v1360 = vpop.f32.mrb[0].mxu0
  %v1361 = vpop.f32.mrb[0].mxu0
  %v1362 = vadd.f32 %v1275, %v1361
  %v1363 = vpop.f32.mrb[0].mxu0
  %1364 = vmatprep.mubr.bf16.mxu0 0
  %1365 = vmatmul.mubr.bf16.gmra.mrb[0].mxu0 %v1271
  %v1366 = vpop.f32.mrb[0].mxu0
  %v1367 = vadd.f32 %v1275, %v1366
  %v1368 = vpop.f32.mrb[0].mxu0
  %v1369 = vpop.f32.mrb[0].mxu0
  %v1370 = vadd.f32 %v1275, %v1369
  %v1371 = vpop.f32.mrb[0].mxu0
  %1372 = vdwg.mxu0
  %1373 = vadd.xlane.f32.xlu0 %v1359
  %v1374 = vpop.xlane.xlu0 %1373
  %1375 = vadd.xlane.f32.xlu0 %v1362
  %v1376 = vpop.xlane.xlu0 %1375
  %1377 = vadd.xlane.f32.xlu0 %v1367
  %v1378 = vpop.xlane.xlu0 %1377
  %1379 = vadd.xlane.f32.xlu0 %v1370
  %v1380 = vpop.xlane.xlu0 %1379
  %v1381 = vmul.f32 %v1374, 0.03125
  %v1382 = vmul.f32 %v1376, 0.03125
  %v1383 = vmul.f32 %v1378, 0.03125
  %v1384 = vmul.f32 %v1380, 0.03125
  %v1385 = vsub.f32 %v1359, %v1381
  %v1386 = vsub.f32 %v1362, %v1382
  %v1387 = vsub.f32 %v1367, %v1383
  %v1388 = vsub.f32 %v1370, %v1384
  %v1389 = vmul.f32 %v1385, %v52
  %v1390 = vmul.f32 %v1386, %v52
  %v1391 = vmul.f32 %v1387, %v52
  %v1392 = vmul.f32 %v1388, %v52
  %v1393 = vmul.f32 %v1389, %v1389
  %v1394 = vmul.f32 %v1390, %v1390
  %v1395 = vmul.f32 %v1391, %v1391
  %v1396 = vmul.f32 %v1392, %v1392
  %1397 = vadd.xlane.f32.xlu0 %v1393
  %v1398 = vpop.xlane.xlu0 %1397
  %1399 = vadd.xlane.f32.xlu0 %v1394
  %v1400 = vpop.xlane.xlu0 %1399
  %1401 = vadd.xlane.f32.xlu0 %v1395
  %v1402 = vpop.xlane.xlu0 %1401
  %1403 = vadd.xlane.f32.xlu0 %v1396
  %v1404 = vpop.xlane.xlu0 %1403
  %v1405 = vmul.f32 %v1398, 0.03125
  %v1406 = vmul.f32 %v1400, 0.03125
  %v1407 = vmul.f32 %v1402, 0.03125
  %v1408 = vmul.f32 %v1404, 0.03125
  %v1409 = vadd.f32 %v1405, 1e-05
  %v1410 = vadd.f32 %v1406, 1e-05
  %v1411 = vadd.f32 %v1407, 1e-05
  %v1412 = vadd.f32 %v1408, 1e-05
  %v1413 = vrsqrt.pop %v1409
  %v1414 = vrsqrt.pop %v1410
  %v1415 = vrsqrt.pop %v1411
  %v1416 = vrsqrt.pop %v1412
  %v1417 = vmul.f32 %v1389, %v1413
  %v1418 = vmul.f32 %v1390, %v1414
  %v1419 = vmul.f32 %v1391, %v1415
  %v1420 = vmul.f32 %v1392, %v1416
  %v1421 = vlaneseq
  %v1422 = vshrl.u32 %v1421, 7
  %v1423 = vsub.s32 6, %v1422
  %v1424 = vrot.slane %v189, %v1423
  %v1425 = vmul.f32 %v1417, %v1424
  %v1426 = vmul.f32 %v1418, %v1424
  %v1427 = vmul.f32 %v1419, %v1424
  %v1428 = vmul.f32 %v1420, %v1424
  %v1429 = vlaneseq
  %v1430 = vshrl.u32 %v1429, 7
  %v1431 = vsub.s32 7, %v1430
  %v1432 = vrot.slane %v189, %v1431
  %v1433 = vadd.f32 %v1425, %v1432
  %v1434 = vadd.f32 %v1426, %v1432
  %v1435 = vadd.f32 %v1427, %v1432
  %v1436 = vadd.f32 %v1428, %v1432
  %vm1437 = vcmp.lt.s32.totalorder %v281, 32
  %vm1438 = vcmp.lt.s32.totalorder %v282, 32
  %vm1439 = vcmp.lt.s32.totalorder %v283, 32
  %vm1440 = vcmp.lt.s32.totalorder %v284, 32
  %v1441 = vsel %vm1437, 1, 0
  %v1442 = vsel %vm1438, 1, 0
  %v1443 = vsel %vm1439, 1, 0
  %v1444 = vsel %vm1440, 1, 0
  %v1445 = vcvt.s32.f32 %v1441
  %v1446 = vcvt.s32.f32 %v1442
  %v1447 = vcvt.s32.f32 %v1443
  %v1448 = vcvt.s32.f32 %v1444
  %v1449 = vmul.f32 %v1433, %v1445
  %v1450 = vmul.f32 %v1434, %v1446
  %v1451 = vmul.f32 %v1435, %v1447
  %v1452 = vmul.f32 %v1436, %v1448
  %v1453 = vadd.f32 %v190, %v1449
  %v1454 = vadd.f32 %v191, %v1450
  %v1455 = vadd.f32 %v192, %v1451
  %v1456 = vadd.f32 %v193, %v1452
  %1457 = vst [vmem:[%s14] sm:$0xff] %v1453
  %1458 = vst [vmem:[%s14 + $0x8] sm:$0xff] %v1454
  %1459 = vst [vmem:[%s14 + $0x10] sm:$0xff] %v1455
  %1460 = vst [vmem:[%s14 + $0x18] sm:$0xff] %v1456
  %v1461 = vld [vmem:[%s9] sm:$0xf]
  %v1462 = vld [vmem:[%s9 + $0x4] sm:$0xf]
  %v1463 = vld [vmem:[%s9 + $0x8] sm:$0xf]
  %v1464 = vld [vmem:[%s9 + $0xc] sm:$0xf]
  %v1465 = vld [vmem:[%s9 + $0x10] sm:$0xf]
  %v1466 = vld [vmem:[%s9 + $0x14] sm:$0xf]
  %v1467 = vld [vmem:[%s9 + $0x18] sm:$0xf]
  %v1468 = vld [vmem:[%s9 + $0x1c] sm:$0xf]
  %v1469 = vld [vmem:[%s9 + $0x20] sm:$0xf]
  %v1470 = vld [vmem:[%s9 + $0x24] sm:$0xf]
  %v1471 = vld [vmem:[%s9 + $0x28] sm:$0xf]
  %v1472 = vld [vmem:[%s9 + $0x2c] sm:$0xf]
  %v1473 = vld [vmem:[%s9 + $0x30] sm:$0xf]
  %v1474 = vld [vmem:[%s9 + $0x34] sm:$0xf]
  %v1475 = vld [vmem:[%s9 + $0x38] sm:$0xf]
  %v1476 = vld [vmem:[%s9 + $0x3c] sm:$0xf]
  %v1477 = vld [vmem:[%s9 + $0x40] sm:$0xf]
  %v1478 = vld [vmem:[%s9 + $0x44] sm:$0xf]
  %v1479 = vld [vmem:[%s9 + $0x48] sm:$0xf]
  %v1480 = vld [vmem:[%s9 + $0x4c] sm:$0xf]
  %v1481 = vld [vmem:[%s9 + $0x50] sm:$0xf]
  %v1482 = vld [vmem:[%s9 + $0x54] sm:$0xf]
  %v1483 = vld [vmem:[%s9 + $0x58] sm:$0xf]
  %v1484 = vld [vmem:[%s9 + $0x5c] sm:$0xf]
  %v1485 = vld [vmem:[%s9 + $0x60] sm:$0xf]
  %v1486 = vld [vmem:[%s9 + $0x64] sm:$0xf]
  %v1487 = vld [vmem:[%s9 + $0x68] sm:$0xf]
  %v1488 = vld [vmem:[%s9 + $0x6c] sm:$0xf]
  %v1489 = vld [vmem:[%s9 + $0x70] sm:$0xf]
  %v1490 = vld [vmem:[%s9 + $0x74] sm:$0xf]
  %v1491 = vld [vmem:[%s9 + $0x78] sm:$0xf]
  %v1492 = vld [vmem:[%s9 + $0x7c] sm:$0xf]
  %v1493 = vld [vmem:[%s9 + $0x80] sm:$0xf]
  %v1494 = vld [vmem:[%s9 + $0x84] sm:$0xf]
  %v1495 = vld [vmem:[%s9 + $0x88] sm:$0xf]
  %v1496 = vld [vmem:[%s9 + $0x8c] sm:$0xf]
  %v1497 = vld [vmem:[%s9 + $0x90] sm:$0xf]
  %v1498 = vld [vmem:[%s9 + $0x94] sm:$0xf]
  %v1499 = vld [vmem:[%s9 + $0x98] sm:$0xf]
  %v1500 = vld [vmem:[%s9 + $0x9c] sm:$0xf]
  %v1501 = vld [vmem:[%s9 + $0xa0] sm:$0xf]
  %v1502 = vld [vmem:[%s9 + $0xa4] sm:$0xf]
  %v1503 = vld [vmem:[%s9 + $0xa8] sm:$0xf]
  %v1504 = vld [vmem:[%s9 + $0xac] sm:$0xf]
  %v1505 = vld [vmem:[%s9 + $0xb0] sm:$0xf]
  %v1506 = vld [vmem:[%s9 + $0xb4] sm:$0xf]
  %v1507 = vld [vmem:[%s9 + $0xb8] sm:$0xf]
  %v1508 = vld [vmem:[%s9 + $0xbc] sm:$0xf]
  %v1509 = vld [vmem:[%s9 + $0xc0] sm:$0xf]
  %v1510 = vld [vmem:[%s9 + $0xc4] sm:$0xf]
  %v1511 = vld [vmem:[%s9 + $0xc8] sm:$0xf]
  %v1512 = vld [vmem:[%s9 + $0xcc] sm:$0xf]
  %v1513 = vld [vmem:[%s9 + $0xd0] sm:$0xf]
  %v1514 = vld [vmem:[%s9 + $0xd4] sm:$0xf]
  %v1515 = vld [vmem:[%s9 + $0xd8] sm:$0xf]
  %v1516 = vld [vmem:[%s9 + $0xdc] sm:$0xf]
  %v1517 = vld [vmem:[%s9 + $0xe0] sm:$0xf]
  %v1518 = vld [vmem:[%s9 + $0xe4] sm:$0xf]
  %v1519 = vld [vmem:[%s9 + $0xe8] sm:$0xf]
  %v1520 = vld [vmem:[%s9 + $0xec] sm:$0xf]
  %v1521 = vld [vmem:[%s9 + $0xf0] sm:$0xf]
  %v1522 = vld [vmem:[%s9 + $0xf4] sm:$0xf]
  %v1523 = vld [vmem:[%s9 + $0xf8] sm:$0xf]
  %v1524 = vld [vmem:[%s9 + $0xfc] sm:$0xf]
  %v1525 = vld [vmem:[%s9 + $0x100] sm:$0xf]
  %v1526 = vld [vmem:[%s9 + $0x104] sm:$0xf]
  %v1527 = vld [vmem:[%s9 + $0x108] sm:$0xf]
  %v1528 = vld [vmem:[%s9 + $0x10c] sm:$0xf]
  %v1529 = vld [vmem:[%s9 + $0x110] sm:$0xf]
  %v1530 = vld [vmem:[%s9 + $0x114] sm:$0xf]
  %v1531 = vld [vmem:[%s9 + $0x118] sm:$0xf]
  %v1532 = vld [vmem:[%s9 + $0x11c] sm:$0xf]
  %v1533 = vld [vmem:[%s9 + $0x120] sm:$0xf]
  %v1534 = vld [vmem:[%s9 + $0x124] sm:$0xf]
  %v1535 = vld [vmem:[%s9 + $0x128] sm:$0xf]
  %v1536 = vld [vmem:[%s9 + $0x12c] sm:$0xf]
  %v1537 = vld [vmem:[%s9 + $0x130] sm:$0xf]
  %v1538 = vld [vmem:[%s9 + $0x134] sm:$0xf]
  %v1539 = vld [vmem:[%s9 + $0x138] sm:$0xf]
  %v1540 = vld [vmem:[%s9 + $0x13c] sm:$0xf]
  %v1541 = vld [vmem:[%s9 + $0x140] sm:$0xf]
  %v1542 = vld [vmem:[%s9 + $0x144] sm:$0xf]
  %v1543 = vld [vmem:[%s9 + $0x148] sm:$0xf]
  %v1544 = vld [vmem:[%s9 + $0x14c] sm:$0xf]
  %v1545 = vld [vmem:[%s9 + $0x150] sm:$0xf]
  %v1546 = vld [vmem:[%s9 + $0x154] sm:$0xf]
  %v1547 = vld [vmem:[%s9 + $0x158] sm:$0xf]
  %v1548 = vld [vmem:[%s9 + $0x15c] sm:$0xf]
  %v1549 = vld [vmem:[%s9 + $0x160] sm:$0xf]
  %v1550 = vld [vmem:[%s9 + $0x164] sm:$0xf]
  %v1551 = vld [vmem:[%s9 + $0x168] sm:$0xf]
  %v1552 = vld [vmem:[%s9 + $0x16c] sm:$0xf]
  %v1553 = vld [vmem:[%s9 + $0x170] sm:$0xf]
  %v1554 = vld [vmem:[%s9 + $0x174] sm:$0xf]
  %v1555 = vld [vmem:[%s9 + $0x178] sm:$0xf]
  %v1556 = vld [vmem:[%s9 + $0x17c] sm:$0xf]
  %v1557 = vld [vmem:[%s9 + $0x180] sm:$0xf]
  %v1558 = vld [vmem:[%s9 + $0x184] sm:$0xf]
  %v1559 = vld [vmem:[%s9 + $0x188] sm:$0xf]
  %v1560 = vld [vmem:[%s9 + $0x18c] sm:$0xf]
  %v1561 = vld [vmem:[%s9 + $0x190] sm:$0xf]
  %v1562 = vld [vmem:[%s9 + $0x194] sm:$0xf]
  %v1563 = vld [vmem:[%s9 + $0x198] sm:$0xf]
  %v1564 = vld [vmem:[%s9 + $0x19c] sm:$0xf]
  %v1565 = vld [vmem:[%s9 + $0x1a0] sm:$0xf]
  %v1566 = vld [vmem:[%s9 + $0x1a4] sm:$0xf]
  %v1567 = vld [vmem:[%s9 + $0x1a8] sm:$0xf]
  %v1568 = vld [vmem:[%s9 + $0x1ac] sm:$0xf]
  %v1569 = vld [vmem:[%s9 + $0x1b0] sm:$0xf]
  %v1570 = vld [vmem:[%s9 + $0x1b4] sm:$0xf]
  %v1571 = vld [vmem:[%s9 + $0x1b8] sm:$0xf]
  %v1572 = vld [vmem:[%s9 + $0x1bc] sm:$0xf]
  %v1573 = vld [vmem:[%s10] sm:$0xff]
  %v1574 = vld [vmem:[%s13] sm:$0xff]
  %v1575 = vld [vmem:[%s13 + $0x8] sm:$0xff]
  %v1576 = vld [vmem:[%s14] sm:$0xff]
  %v1577 = vld [vmem:[%s14 + $0x8] sm:$0xff]
  %v1578 = vld [vmem:[%s14 + $0x10] sm:$0xff]
  %v1579 = vld [vmem:[%s14 + $0x18] sm:$0xff]
  %v1580 = vpack.c.bf16 %v1575, %v1574
  %v1581 = vld [vmem:[%s0] sm:$0xff]
  %v1582 = vld [vmem:[%s0 + $0x8] sm:$0xff]
  %v1583 = vld [vmem:[%s0 + $0x10] sm:$0xff]
  %v1584 = vld [vmem:[%s0 + $0x18] sm:$0xff]
  %1585 = vset.pattern.permute.xlu0 0
  %1586 = vperm.xlu0 %1585, %v1581
  %v1587 = vpop.permute.xlu0 %1586
  %1588 = vset.pattern.permute.xlu0 0
  %1589 = vperm.xlu0 %1588, %v1582
  %v1590 = vpop.permute.xlu0 %1589
  %1591 = vset.pattern.permute.xlu0 0
  %1592 = vperm.xlu0 %1591, %v1583
  %v1593 = vpop.permute.xlu0 %1592
  %1594 = vset.pattern.permute.xlu0 0
  %1595 = vperm.xlu0 %1594, %v1584
  %v1596 = vpop.permute.xlu0 %1595
  %vm1597 = vcmp.eq.s32.totalorder %v1587, %v49
  %vm1598 = vcmp.eq.s32.totalorder %v1590, %v49
  %vm1599 = vcmp.eq.s32.totalorder %v1593, %v49
  %vm1600 = vcmp.eq.s32.totalorder %v1596, %v49
  %v1601 = vsel %vm1597, 1.0, 0.0
  %v1602 = vsel %vm1598, 1.0, 0.0
  %v1603 = vsel %vm1599, 1.0, 0.0
  %v1604 = vsel %vm1600, 1.0, 0.0
  %v1605 = vpack.c.bf16 %v1602, %v1601
  %v1606 = vpack.c.bf16 %v1604, %v1603
  %v1607 = vld [vmem:[%s1] sm:$0xff]
  %v1608 = vld [vmem:[%s1 + $0x8] sm:$0xff]
  %v1609 = vld [vmem:[%s1 + $0x10] sm:$0xff]
  %v1610 = vld [vmem:[%s1 + $0x18] sm:$0xff]
  %1611 = vset.pattern.permute.xlu0 0
  %1612 = vperm.xlu0 %1611, %v1607
  %v1613 = vpop.permute.xlu0 %1612
  %1614 = vset.pattern.permute.xlu0 0
  %1615 = vperm.xlu0 %1614, %v1608
  %v1616 = vpop.permute.xlu0 %1615
  %1617 = vset.pattern.permute.xlu0 0
  %1618 = vperm.xlu0 %1617, %v1609
  %v1619 = vpop.permute.xlu0 %1618
  %1620 = vset.pattern.permute.xlu0 0
  %1621 = vperm.xlu0 %1620, %v1610
  %v1622 = vpop.permute.xlu0 %1621
  %vm1623 = vcmp.eq.s32.totalorder %v1613, %v49
  %vm1624 = vcmp.eq.s32.totalorder %v1616, %v49
  %vm1625 = vcmp.eq.s32.totalorder %v1619, %v49
  %vm1626 = vcmp.eq.s32.totalorder %v1622, %v49
  %v1627 = vsel %vm1623, 1.0, 0.0
  %v1628 = vsel %vm1624, 1.0, 0.0
  %v1629 = vsel %vm1625, 1.0, 0.0
  %v1630 = vsel %vm1626, 1.0, 0.0
  %v1631 = vpack.c.bf16 %v1628, %v1627
  %v1632 = vpack.c.bf16 %v1630, %v1629
  %v1633 = vld [vmem:[%s2] sm:$0x1]
  %v1634 = vlaneseq
  %v1635 = vshrl.u32 %v1634, 7
  %v1636 = vsub.s32 0, %v1635
  %v1637 = vrot.slane %v1633, %v1636
  %vm1638 = vcmp.eq.s32.totalorder %v281, %v1637
  %vm1639 = vcmp.eq.s32.totalorder %v282, %v1637
  %v1640 = vsel %vm1638, 1.0, 0.0
  %v1641 = vsel %vm1639, 1.0, 0.0
  %v1642 = vpack.c.bf16 %v1641, %v1640
  %v1659 = vunpack.c.l.b16 %v1461
  %v1660 = vunpack.c.l.b16 %v1462
  %v1661 = vunpack.c.l.b16 %v1463
  %v1662 = vunpack.c.l.b16 %v1464
  %v1663 = vunpack.c.l.b16 %v1465
  %v1664 = vunpack.c.l.b16 %v1466
  %v1665 = vunpack.c.l.b16 %v1467
  %v1666 = vunpack.c.l.b16 %v1468
  %v1667 = vunpack.c.l.b16 %v1469
  %v1668 = vunpack.c.l.b16 %v1470
  %v1669 = vunpack.c.l.b16 %v1471
  %v1670 = vunpack.c.l.b16 %v1472
  %v1671 = vunpack.c.l.b16 %v1473
  %v1672 = vunpack.c.l.b16 %v1474
  %v1673 = vunpack.c.l.b16 %v1475
  %v1674 = vunpack.c.l.b16 %v1476
  %v1675 = vpack.c.b16 %v1660, %v1659
  %v1676 = vpack.c.b16 %v1662, %v1661
  %v1677 = vpack.c.b16 %v1664, %v1663
  %v1678 = vpack.c.b16 %v1666, %v1665
  %v1679 = vpack.c.b16 %v1668, %v1667
  %v1680 = vpack.c.b16 %v1670, %v1669
  %v1681 = vpack.c.b16 %v1672, %v1671
  %v1682 = vpack.c.b16 %v1674, %v1673
  %1691 = vmatprep.subr.bf16.mxu0 0
  %1692 = vmatpush1.bf16.msra.mxu0 %v1675
  %1693 = vmatprep.subr.bf16.mxu0 0
  %1694 = vmatpush1.bf16.msra.mxu0 %v1676
  %1695 = vmatprep.subr.bf16.mxu0 0
  %1696 = vmatpush1.bf16.msra.mxu0 %v1677
  %1697 = vmatprep.subr.bf16.mxu0 0
  %1698 = vmatpush1.bf16.msra.mxu0 %v1678
  %1699 = vmatprep.subr.bf16.mxu0 0
  %1700 = vmatpush1.bf16.msra.mxu0 %v1679
  %1701 = vmatprep.subr.bf16.mxu0 0
  %1702 = vmatpush1.bf16.msra.mxu0 %v1680
  %1703 = vmatprep.subr.bf16.mxu0 0
  %1704 = vmatpush1.bf16.msra.mxu0 %v1681
  %1705 = vmatprep.subr.bf16.mxu0 0
  %1706 = vmatpush1.bf16.msra.mxu0 %v1682
  %1707 = vmatprep.subr.bf16.mxu0 0
  %1708 = vmatpush1.bf16.msra.mxu0 0
  %1709 = vmatprep.subr.bf16.mxu0 0
  %1710 = vmatpush1.bf16.msra.mxu0 0
  %1711 = vmatprep.subr.bf16.mxu0 0
  %1712 = vmatpush1.bf16.msra.mxu0 0
  %1713 = vmatprep.subr.bf16.mxu0 0
  %1714 = vmatpush1.bf16.msra.mxu0 0
  %1715 = vmatprep.subr.bf16.mxu0 0
  %1716 = vmatpush1.bf16.msra.mxu0 0
  %1717 = vmatprep.subr.bf16.mxu0 0
  %1718 = vmatpush1.bf16.msra.mxu0 0
  %1719 = vmatprep.subr.bf16.mxu0 0
  %1720 = vmatpush1.bf16.msra.mxu0 0
  %1721 = vmatprep.subr.bf16.mxu0 0
  %1722 = vmatpush1.bf16.msra.mxu0 0
  %1723 = vmatprep.mubr.bf16.mxu0 0
  %1724 = vmatmul.mubr.bf16.gmra.mrb[0].mxu0 %v1580
  %v1725 = vpop.f32.mrb[0].mxu0
  %v1726 = vadd.f32 0.0, %v1725
  %v1727 = vpop.f32.mrb[0].mxu0
  %v1728 = vpop.f32.mrb[0].mxu0
  %v1729 = vadd.f32 0.0, %v1728
  %v1730 = vpop.f32.mrb[0].mxu0
  %1731 = vdwg.mxu0
  %v1748 = vunpack.c.l.b16 %v1477
  %v1749 = vunpack.c.l.b16 %v1478
  %v1750 = vunpack.c.l.b16 %v1479
  %v1751 = vunpack.c.l.b16 %v1480
  %v1752 = vunpack.c.l.b16 %v1481
  %v1753 = vunpack.c.l.b16 %v1482
  %v1754 = vunpack.c.l.b16 %v1483
  %v1755 = vunpack.c.l.b16 %v1484
  %v1756 = vunpack.c.l.b16 %v1485
  %v1757 = vunpack.c.l.b16 %v1486
  %v1758 = vunpack.c.l.b16 %v1487
  %v1759 = vunpack.c.l.b16 %v1488
  %v1760 = vunpack.c.l.b16 %v1489
  %v1761 = vunpack.c.l.b16 %v1490
  %v1762 = vunpack.c.l.b16 %v1491
  %v1763 = vunpack.c.l.b16 %v1492
  %v1764 = vpack.c.b16 %v1749, %v1748
  %v1765 = vpack.c.b16 %v1751, %v1750
  %v1766 = vpack.c.b16 %v1753, %v1752
  %v1767 = vpack.c.b16 %v1755, %v1754
  %v1768 = vpack.c.b16 %v1757, %v1756
  %v1769 = vpack.c.b16 %v1759, %v1758
  %v1770 = vpack.c.b16 %v1761, %v1760
  %v1771 = vpack.c.b16 %v1763, %v1762
  %1780 = vmatprep.subr.bf16.mxu0 0
  %1781 = vmatpush1.bf16.msra.mxu0 %v1764
  %1782 = vmatprep.subr.bf16.mxu0 0
  %1783 = vmatpush1.bf16.msra.mxu0 %v1765
  %1784 = vmatprep.subr.bf16.mxu0 0
  %1785 = vmatpush1.bf16.msra.mxu0 %v1766
  %1786 = vmatprep.subr.bf16.mxu0 0
  %1787 = vmatpush1.bf16.msra.mxu0 %v1767
  %1788 = vmatprep.subr.bf16.mxu0 0
  %1789 = vmatpush1.bf16.msra.mxu0 %v1768
  %1790 = vmatprep.subr.bf16.mxu0 0
  %1791 = vmatpush1.bf16.msra.mxu0 %v1769
  %1792 = vmatprep.subr.bf16.mxu0 0
  %1793 = vmatpush1.bf16.msra.mxu0 %v1770
  %1794 = vmatprep.subr.bf16.mxu0 0
  %1795 = vmatpush1.bf16.msra.mxu0 %v1771
  %1796 = vmatprep.subr.bf16.mxu0 0
  %1797 = vmatpush1.bf16.msra.mxu0 0
  %1798 = vmatprep.subr.bf16.mxu0 0
  %1799 = vmatpush1.bf16.msra.mxu0 0
  %1800 = vmatprep.subr.bf16.mxu0 0
  %1801 = vmatpush1.bf16.msra.mxu0 0
  %1802 = vmatprep.subr.bf16.mxu0 0
  %1803 = vmatpush1.bf16.msra.mxu0 0
  %1804 = vmatprep.subr.bf16.mxu0 0
  %1805 = vmatpush1.bf16.msra.mxu0 0
  %1806 = vmatprep.subr.bf16.mxu0 0
  %1807 = vmatpush1.bf16.msra.mxu0 0
  %1808 = vmatprep.subr.bf16.mxu0 0
  %1809 = vmatpush1.bf16.msra.mxu0 0
  %1810 = vmatprep.subr.bf16.mxu0 0
  %1811 = vmatpush1.bf16.msra.mxu0 0
  %1812 = vmatprep.mubr.bf16.mxu0 0
  %1813 = vmatmul.mubr.bf16.gmra.mrb[0].mxu0 %v1580
  %v1814 = vpop.f32.mrb[0].mxu0
  %v1815 = vadd.f32 0.0, %v1814
  %v1816 = vpop.f32.mrb[0].mxu0
  %v1817 = vpop.f32.mrb[0].mxu0
  %v1818 = vadd.f32 0.0, %v1817
  %v1819 = vpop.f32.mrb[0].mxu0
  %1820 = vdwg.mxu0
  %v1821 = vpack.c.bf16 %v1729, %v1726
  %v1822 = vpack.c.bf16 %v1818, %v1815
  %vm1823 = vcmask 130048
  %v1825 = vsel %vm1823, %v1631, 0
  %v1828 = vsel %vm1823, %v1632, 0
  %1830 = vmatprep.subr.bf16.mxu0 0
  %1831 = vmatpush1.bf16.msra.mxu0 %v1822
  %1832 = vmatprep.subr.bf16.mxu0 0
  %1833 = vmatpush1.bf16.msra.mxu0 0
  %1834 = vmatprep.subr.bf16.mxu0 0
  %1835 = vmatpush1.bf16.msra.mxu0 0
  %1836 = vmatprep.subr.bf16.mxu0 0
  %1837 = vmatpush1.bf16.msra.mxu0 0
  %1838 = vmatprep.subr.bf16.mxu0 0
  %1839 = vmatpush1.bf16.msra.mxu0 0
  %1840 = vmatprep.subr.bf16.mxu0 0
  %1841 = vmatpush1.bf16.msra.mxu0 0
  %1842 = vmatprep.subr.bf16.mxu0 0
  %1843 = vmatpush1.bf16.msra.mxu0 0
  %1844 = vmatprep.subr.bf16.mxu0 0
  %1845 = vmatpush1.bf16.msra.mxu0 0
  %1846 = vmatprep.subr.bf16.mxu0 0
  %1847 = vmatpush1.bf16.msra.mxu0 0
  %1848 = vmatprep.subr.bf16.mxu0 0
  %1849 = vmatpush1.bf16.msra.mxu0 0
  %1850 = vmatprep.subr.bf16.mxu0 0
  %1851 = vmatpush1.bf16.msra.mxu0 0
  %1852 = vmatprep.subr.bf16.mxu0 0
  %1853 = vmatpush1.bf16.msra.mxu0 0
  %1854 = vmatprep.subr.bf16.mxu0 0
  %1855 = vmatpush1.bf16.msra.mxu0 0
  %1856 = vmatprep.subr.bf16.mxu0 0
  %1857 = vmatpush1.bf16.msra.mxu0 0
  %1858 = vmatprep.subr.bf16.mxu0 0
  %1859 = vmatpush1.bf16.msra.mxu0 0
  %1860 = vmatprep.subr.bf16.mxu0 0
  %1861 = vmatpush1.bf16.msra.mxu0 0
  %1862 = vmatprep.mubr.bf16.mxu0 0
  %1863 = vmatmul.mubr.bf16.gmra.mrb[0].mxu0 %v1825
  %v1864 = vpop.f32.mrb[0].mxu0
  %v1865 = vadd.f32 0.0, %v1864
  %v1866 = vpop.f32.mrb[0].mxu0
  %v1867 = vpop.f32.mrb[0].mxu0
  %v1868 = vadd.f32 0.0, %v1867
  %v1869 = vpop.f32.mrb[0].mxu0
  %1870 = vmatprep.mubr.bf16.mxu0 0
  %1871 = vmatmul.mubr.bf16.gmra.mrb[0].mxu0 %v1828
  %v1872 = vpop.f32.mrb[0].mxu0
  %v1873 = vadd.f32 0.0, %v1872
  %v1874 = vpop.f32.mrb[0].mxu0
  %v1875 = vpop.f32.mrb[0].mxu0
  %v1876 = vadd.f32 0.0, %v1875
  %v1877 = vpop.f32.mrb[0].mxu0
  %1878 = vdwg.mxu0
  %v1880 = vsel %vm1823, %v1605, 0
  %v1883 = vsel %vm1823, %v1606, 0
  %1885 = vmatprep.subr.bf16.mxu0 0
  %1886 = vmatpush1.bf16.msra.mxu0 %v1821
  %1887 = vmatprep.subr.bf16.mxu0 0
  %1888 = vmatpush1.bf16.msra.mxu0 0
  %1889 = vmatprep.subr.bf16.mxu0 0
  %1890 = vmatpush1.bf16.msra.mxu0 0
  %1891 = vmatprep.subr.bf16.mxu0 0
  %1892 = vmatpush1.bf16.msra.mxu0 0
  %1893 = vmatprep.subr.bf16.mxu0 0
  %1894 = vmatpush1.bf16.msra.mxu0 0
  %1895 = vmatprep.subr.bf16.mxu0 0
  %1896 = vmatpush1.bf16.msra.mxu0 0
  %1897 = vmatprep.subr.bf16.mxu0 0
  %1898 = vmatpush1.bf16.msra.mxu0 0
  %1899 = vmatprep.subr.bf16.mxu0 0
  %1900 = vmatpush1.bf16.msra.mxu0 0
  %1901 = vmatprep.subr.bf16.mxu0 0
  %1902 = vmatpush1.bf16.msra.mxu0 0
  %1903 = vmatprep.subr.bf16.mxu0 0
  %1904 = vmatpush1.bf16.msra.mxu0 0
  %1905 = vmatprep.subr.bf16.mxu0 0
  %1906 = vmatpush1.bf16.msra.mxu0 0
  %1907 = vmatprep.subr.bf16.mxu0 0
  %1908 = vmatpush1.bf16.msra.mxu0 0
  %1909 = vmatprep.subr.bf16.mxu0 0
  %1910 = vmatpush1.bf16.msra.mxu0 0
  %1911 = vmatprep.subr.bf16.mxu0 0
  %1912 = vmatpush1.bf16.msra.mxu0 0
  %1913 = vmatprep.subr.bf16.mxu0 0
  %1914 = vmatpush1.bf16.msra.mxu0 0
  %1915 = vmatprep.subr.bf16.mxu0 0
  %1916 = vmatpush1.bf16.msra.mxu0 0
  %1917 = vmatprep.mubr.bf16.mxu0 0
  %1918 = vmatmul.mubr.bf16.gmra.mrb[0].mxu0 %v1880
  %v1919 = vpop.f32.mrb[0].mxu0
  %v1920 = vadd.f32 %v1865, %v1919
  %v1921 = vpop.f32.mrb[0].mxu0
  %v1922 = vpop.f32.mrb[0].mxu0
  %v1923 = vadd.f32 %v1868, %v1922
  %v1924 = vpop.f32.mrb[0].mxu0
  %1925 = vmatprep.mubr.bf16.mxu0 0
  %1926 = vmatmul.mubr.bf16.gmra.mrb[0].mxu0 %v1883
  %v1927 = vpop.f32.mrb[0].mxu0
  %v1928 = vadd.f32 %v1873, %v1927
  %v1929 = vpop.f32.mrb[0].mxu0
  %v1930 = vpop.f32.mrb[0].mxu0
  %v1931 = vadd.f32 %v1876, %v1930
  %v1932 = vpop.f32.mrb[0].mxu0
  %1933 = vdwg.mxu0
  %v1934 = vpack.c.bf16 %v1577, %v1576
  %v1935 = vpack.c.bf16 %v1579, %v1578
  %v1952 = vunpack.c.l.b16 %v1493
  %v1953 = vunpack.c.l.b16 %v1494
  %v1954 = vunpack.c.l.b16 %v1495
  %v1955 = vunpack.c.l.b16 %v1496
  %v1956 = vunpack.c.l.b16 %v1497
  %v1957 = vunpack.c.l.b16 %v1498
  %v1958 = vunpack.c.l.b16 %v1499
  %v1959 = vunpack.c.l.b16 %v1500
  %v1960 = vunpack.c.l.b16 %v1501
  %v1961 = vunpack.c.l.b16 %v1502
  %v1962 = vunpack.c.l.b16 %v1503
  %v1963 = vunpack.c.l.b16 %v1504
  %v1964 = vunpack.c.l.b16 %v1505
  %v1965 = vunpack.c.l.b16 %v1506
  %v1966 = vunpack.c.l.b16 %v1507
  %v1967 = vunpack.c.l.b16 %v1508
  %v1968 = vpack.c.b16 %v1953, %v1952
  %v1969 = vpack.c.b16 %v1955, %v1954
  %v1970 = vpack.c.b16 %v1957, %v1956
  %v1971 = vpack.c.b16 %v1959, %v1958
  %v1972 = vpack.c.b16 %v1961, %v1960
  %v1973 = vpack.c.b16 %v1963, %v1962
  %v1974 = vpack.c.b16 %v1965, %v1964
  %v1975 = vpack.c.b16 %v1967, %v1966
  %1984 = vmatprep.subr.bf16.mxu0 0
  %1985 = vmatpush1.bf16.msra.mxu0 %v1968
  %1986 = vmatprep.subr.bf16.mxu0 0
  %1987 = vmatpush1.bf16.msra.mxu0 %v1969
  %1988 = vmatprep.subr.bf16.mxu0 0
  %1989 = vmatpush1.bf16.msra.mxu0 %v1970
  %1990 = vmatprep.subr.bf16.mxu0 0
  %1991 = vmatpush1.bf16.msra.mxu0 %v1971
  %1992 = vmatprep.subr.bf16.mxu0 0
  %1993 = vmatpush1.bf16.msra.mxu0 %v1972
  %1994 = vmatprep.subr.bf16.mxu0 0
  %1995 = vmatpush1.bf16.msra.mxu0 %v1973
  %1996 = vmatprep.subr.bf16.mxu0 0
  %1997 = vmatpush1.bf16.msra.mxu0 %v1974
  %1998 = vmatprep.subr.bf16.mxu0 0
  %1999 = vmatpush1.bf16.msra.mxu0 %v1975
  %2000 = vmatprep.subr.bf16.mxu0 0
  %2001 = vmatpush1.bf16.msra.mxu0 0
  %2002 = vmatprep.subr.bf16.mxu0 0
  %2003 = vmatpush1.bf16.msra.mxu0 0
  %2004 = vmatprep.subr.bf16.mxu0 0
  %2005 = vmatpush1.bf16.msra.mxu0 0
  %2006 = vmatprep.subr.bf16.mxu0 0
  %2007 = vmatpush1.bf16.msra.mxu0 0
  %2008 = vmatprep.subr.bf16.mxu0 0
  %2009 = vmatpush1.bf16.msra.mxu0 0
  %2010 = vmatprep.subr.bf16.mxu0 0
  %2011 = vmatpush1.bf16.msra.mxu0 0
  %2012 = vmatprep.subr.bf16.mxu0 0
  %2013 = vmatpush1.bf16.msra.mxu0 0
  %2014 = vmatprep.subr.bf16.mxu0 0
  %2015 = vmatpush1.bf16.msra.mxu0 0
  %2016 = vmatprep.mubr.bf16.mxu0 0
  %2017 = vmatmul.mubr.bf16.gmra.mrb[0].mxu0 %v1934
  %v2018 = vpop.f32.mrb[0].mxu0
  %v2019 = vadd.f32 0.0, %v2018
  %v2020 = vpop.f32.mrb[0].mxu0
  %v2021 = vpop.f32.mrb[0].mxu0
  %v2022 = vadd.f32 0.0, %v2021
  %v2023 = vpop.f32.mrb[0].mxu0
  %2024 = vmatprep.mubr.bf16.mxu0 0
  %2025 = vmatmul.mubr.bf16.gmra.mrb[0].mxu0 %v1935
  %v2026 = vpop.f32.mrb[0].mxu0
  %v2027 = vadd.f32 0.0, %v2026
  %v2028 = vpop.f32.mrb[0].mxu0
  %v2029 = vpop.f32.mrb[0].mxu0
  %v2030 = vadd.f32 0.0, %v2029
  %v2031 = vpop.f32.mrb[0].mxu0
  %2032 = vdwg.mxu0
  %v2033 = vadd.f32 %v1920, %v2019
  %v2034 = vadd.f32 %v1923, %v2022
  %v2035 = vadd.f32 %v1928, %v2027
  %v2036 = vadd.f32 %v1931, %v2030
  %v2037 = vlaneseq
  %v2038 = vshrl.u32 %v2037, 7
  %v2039 = vsub.s32 0, %v2038
  %v2040 = vrot.slane %v1573, %v2039
  %v2041 = vadd.f32 %v2033, %v2040
  %v2042 = vadd.f32 %v2034, %v2040
  %v2043 = vadd.f32 %v2035, %v2040
  %v2044 = vadd.f32 %v2036, %v2040
  %v2045 = vmax.f32 %v2041, 0.0
  %v2046 = vmax.f32 %v2042, 0.0
  %v2047 = vmax.f32 %v2043, 0.0
  %v2048 = vmax.f32 %v2044, 0.0
  %v2049 = vpack.c.bf16 %v2046, %v2045
  %v2050 = vpack.c.bf16 %v2048, %v2047
  %v2051 = vlaneseq
  %v2052 = vshrl.u32 %v2051, 7
  %v2053 = vsub.s32 1, %v2052
  %v2054 = vrot.slane %v1573, %v2053
  %v2071 = vunpack.c.l.b16 %v1509
  %v2072 = vunpack.c.l.b16 %v1510
  %v2073 = vunpack.c.l.b16 %v1511
  %v2074 = vunpack.c.l.b16 %v1512
  %v2075 = vunpack.c.l.b16 %v1513
  %v2076 = vunpack.c.l.b16 %v1514
  %v2077 = vunpack.c.l.b16 %v1515
  %v2078 = vunpack.c.l.b16 %v1516
  %v2079 = vunpack.c.l.b16 %v1517
  %v2080 = vunpack.c.l.b16 %v1518
  %v2081 = vunpack.c.l.b16 %v1519
  %v2082 = vunpack.c.l.b16 %v1520
  %v2083 = vunpack.c.l.b16 %v1521
  %v2084 = vunpack.c.l.b16 %v1522
  %v2085 = vunpack.c.l.b16 %v1523
  %v2086 = vunpack.c.l.b16 %v1524
  %v2087 = vpack.c.b16 %v2072, %v2071
  %v2088 = vpack.c.b16 %v2074, %v2073
  %v2089 = vpack.c.b16 %v2076, %v2075
  %v2090 = vpack.c.b16 %v2078, %v2077
  %v2091 = vpack.c.b16 %v2080, %v2079
  %v2092 = vpack.c.b16 %v2082, %v2081
  %v2093 = vpack.c.b16 %v2084, %v2083
  %v2094 = vpack.c.b16 %v2086, %v2085
  %2103 = vmatprep.subr.bf16.mxu0 0
  %2104 = vmatpush1.bf16.msra.mxu0 %v2087
  %2105 = vmatprep.subr.bf16.mxu0 0
  %2106 = vmatpush1.bf16.msra.mxu0 %v2088
  %2107 = vmatprep.subr.bf16.mxu0 0
  %2108 = vmatpush1.bf16.msra.mxu0 %v2089
  %2109 = vmatprep.subr.bf16.mxu0 0
  %2110 = vmatpush1.bf16.msra.mxu0 %v2090
  %2111 = vmatprep.subr.bf16.mxu0 0
  %2112 = vmatpush1.bf16.msra.mxu0 %v2091
  %2113 = vmatprep.subr.bf16.mxu0 0
  %2114 = vmatpush1.bf16.msra.mxu0 %v2092
  %2115 = vmatprep.subr.bf16.mxu0 0
  %2116 = vmatpush1.bf16.msra.mxu0 %v2093
  %2117 = vmatprep.subr.bf16.mxu0 0
  %2118 = vmatpush1.bf16.msra.mxu0 %v2094
  %2119 = vmatprep.subr.bf16.mxu0 0
  %2120 = vmatpush1.bf16.msra.mxu0 0
  %2121 = vmatprep.subr.bf16.mxu0 0
  %2122 = vmatpush1.bf16.msra.mxu0 0
  %2123 = vmatprep.subr.bf16.mxu0 0
  %2124 = vmatpush1.bf16.msra.mxu0 0
  %2125 = vmatprep.subr.bf16.mxu0 0
  %2126 = vmatpush1.bf16.msra.mxu0 0
  %2127 = vmatprep.subr.bf16.mxu0 0
  %2128 = vmatpush1.bf16.msra.mxu0 0
  %2129 = vmatprep.subr.bf16.mxu0 0
  %2130 = vmatpush1.bf16.msra.mxu0 0
  %2131 = vmatprep.subr.bf16.mxu0 0
  %2132 = vmatpush1.bf16.msra.mxu0 0
  %2133 = vmatprep.subr.bf16.mxu0 0
  %2134 = vmatpush1.bf16.msra.mxu0 0
  %2135 = vmatprep.mubr.bf16.mxu0 0
  %2136 = vmatmul.mubr.bf16.gmra.mrb[0].mxu0 %v2049
  %v2137 = vpop.f32.mrb[0].mxu0
  %v2138 = vadd.f32 %v2054, %v2137
  %v2139 = vpop.f32.mrb[0].mxu0
  %v2140 = vpop.f32.mrb[0].mxu0
  %v2141 = vadd.f32 %v2054, %v2140
  %v2142 = vpop.f32.mrb[0].mxu0
  %2143 = vmatprep.mubr.bf16.mxu0 0
  %2144 = vmatmul.mubr.bf16.gmra.mrb[0].mxu0 %v2050
  %v2145 = vpop.f32.mrb[0].mxu0
  %v2146 = vadd.f32 %v2054, %v2145
  %v2147 = vpop.f32.mrb[0].mxu0
  %v2148 = vpop.f32.mrb[0].mxu0
  %v2149 = vadd.f32 %v2054, %v2148
  %v2150 = vpop.f32.mrb[0].mxu0
  %2151 = vdwg.mxu0
  %2152 = vadd.xlane.f32.xlu0 %v2138
  %v2153 = vpop.xlane.xlu0 %2152
  %2154 = vadd.xlane.f32.xlu0 %v2141
  %v2155 = vpop.xlane.xlu0 %2154
  %2156 = vadd.xlane.f32.xlu0 %v2146
  %v2157 = vpop.xlane.xlu0 %2156
  %2158 = vadd.xlane.f32.xlu0 %v2149
  %v2159 = vpop.xlane.xlu0 %2158
  %v2160 = vmul.f32 %v2153, 0.03125
  %v2161 = vmul.f32 %v2155, 0.03125
  %v2162 = vmul.f32 %v2157, 0.03125
  %v2163 = vmul.f32 %v2159, 0.03125
  %v2164 = vsub.f32 %v2138, %v2160
  %v2165 = vsub.f32 %v2141, %v2161
  %v2166 = vsub.f32 %v2146, %v2162
  %v2167 = vsub.f32 %v2149, %v2163
  %v2168 = vmul.f32 %v2164, %v52
  %v2169 = vmul.f32 %v2165, %v52
  %v2170 = vmul.f32 %v2166, %v52
  %v2171 = vmul.f32 %v2167, %v52
  %v2172 = vmul.f32 %v2168, %v2168
  %v2173 = vmul.f32 %v2169, %v2169
  %v2174 = vmul.f32 %v2170, %v2170
  %v2175 = vmul.f32 %v2171, %v2171
  %2176 = vadd.xlane.f32.xlu0 %v2172
  %v2177 = vpop.xlane.xlu0 %2176
  %2178 = vadd.xlane.f32.xlu0 %v2173
  %v2179 = vpop.xlane.xlu0 %2178
  %2180 = vadd.xlane.f32.xlu0 %v2174
  %v2181 = vpop.xlane.xlu0 %2180
  %2182 = vadd.xlane.f32.xlu0 %v2175
  %v2183 = vpop.xlane.xlu0 %2182
  %v2184 = vmul.f32 %v2177, 0.03125
  %v2185 = vmul.f32 %v2179, 0.03125
  %v2186 = vmul.f32 %v2181, 0.03125
  %v2187 = vmul.f32 %v2183, 0.03125
  %v2188 = vadd.f32 %v2184, 1e-05
  %v2189 = vadd.f32 %v2185, 1e-05
  %v2190 = vadd.f32 %v2186, 1e-05
  %v2191 = vadd.f32 %v2187, 1e-05
  %v2192 = vrsqrt.pop %v2188
  %v2193 = vrsqrt.pop %v2189
  %v2194 = vrsqrt.pop %v2190
  %v2195 = vrsqrt.pop %v2191
  %v2196 = vmul.f32 %v2168, %v2192
  %v2197 = vmul.f32 %v2169, %v2193
  %v2198 = vmul.f32 %v2170, %v2194
  %v2199 = vmul.f32 %v2171, %v2195
  %v2200 = vlaneseq
  %v2201 = vshrl.u32 %v2200, 7
  %v2202 = vsub.s32 2, %v2201
  %v2203 = vrot.slane %v1573, %v2202
  %v2204 = vmul.f32 %v2196, %v2203
  %v2205 = vmul.f32 %v2197, %v2203
  %v2206 = vmul.f32 %v2198, %v2203
  %v2207 = vmul.f32 %v2199, %v2203
  %v2208 = vlaneseq
  %v2209 = vshrl.u32 %v2208, 7
  %v2210 = vsub.s32 3, %v2209
  %v2211 = vrot.slane %v1573, %v2210
  %v2212 = vadd.f32 %v2204, %v2211
  %v2213 = vadd.f32 %v2205, %v2211
  %v2214 = vadd.f32 %v2206, %v2211
  %v2215 = vadd.f32 %v2207, %v2211
  %v2216 = vmul.f32 %v2212, %v1445
  %v2217 = vmul.f32 %v2213, %v1446
  %v2218 = vmul.f32 %v2214, %v1447
  %v2219 = vmul.f32 %v2215, %v1448
  %v2220 = vadd.f32 %v1576, %v2216
  %v2221 = vadd.f32 %v1577, %v2217
  %v2222 = vadd.f32 %v1578, %v2218
  %v2223 = vadd.f32 %v1579, %v2219
  %2224 = vst [vmem:[%s14] sm:$0xff] %v2220
  %2225 = vst [vmem:[%s14 + $0x8] sm:$0xff] %v2221
  %2226 = vst [vmem:[%s14 + $0x10] sm:$0xff] %v2222
  %2227 = vst [vmem:[%s14 + $0x18] sm:$0xff] %v2223
  %v2228 = vpack.c.bf16 %v2221, %v2220
  %v2229 = vpack.c.bf16 %v2223, %v2222
  %v2231 = vsel %vm498, %v1642, 0
  %2233 = vmatprep.subr.bf16.mxu0 0
  %2234 = vmatpush1.bf16.msra.mxu0 %v2228
  %2235 = vmatprep.subr.bf16.mxu0 0
  %2236 = vmatpush1.bf16.msra.mxu0 %v2229
  %2237 = vmatprep.subr.bf16.mxu0 0
  %2238 = vmatpush1.bf16.msra.mxu0 0
  %2239 = vmatprep.subr.bf16.mxu0 0
  %2240 = vmatpush1.bf16.msra.mxu0 0
  %2241 = vmatprep.subr.bf16.mxu0 0
  %2242 = vmatpush1.bf16.msra.mxu0 0
  %2243 = vmatprep.subr.bf16.mxu0 0
  %2244 = vmatpush1.bf16.msra.mxu0 0
  %2245 = vmatprep.subr.bf16.mxu0 0
  %2246 = vmatpush1.bf16.msra.mxu0 0
  %2247 = vmatprep.subr.bf16.mxu0 0
  %2248 = vmatpush1.bf16.msra.mxu0 0
  %2249 = vmatprep.subr.bf16.mxu0 0
  %2250 = vmatpush1.bf16.msra.mxu0 0
  %2251 = vmatprep.subr.bf16.mxu0 0
  %2252 = vmatpush1.bf16.msra.mxu0 0
  %2253 = vmatprep.subr.bf16.mxu0 0
  %2254 = vmatpush1.bf16.msra.mxu0 0
  %2255 = vmatprep.subr.bf16.mxu0 0
  %2256 = vmatpush1.bf16.msra.mxu0 0
  %2257 = vmatprep.subr.bf16.mxu0 0
  %2258 = vmatpush1.bf16.msra.mxu0 0
  %2259 = vmatprep.subr.bf16.mxu0 0
  %2260 = vmatpush1.bf16.msra.mxu0 0
  %2261 = vmatprep.subr.bf16.mxu0 0
  %2262 = vmatpush1.bf16.msra.mxu0 0
  %2263 = vmatprep.subr.bf16.mxu0 0
  %2264 = vmatpush1.bf16.msra.mxu0 0
  %2265 = vmatprep.mubr.bf16.mxu0 0
  %2266 = vmatmul.mubr.bf16.gmra.mrb[0].mxu0 %v2231
  %v2267 = vpop.f32.mrb[0].mxu0
  %v2268 = vadd.f32 0.0, %v2267
  %v2269 = vpop.f32.mrb[0].mxu0
  %v2270 = vpop.f32.mrb[0].mxu0
  %v2271 = vadd.f32 0.0, %v2270
  %v2272 = vpop.f32.mrb[0].mxu0
  %2273 = vdwg.mxu0
  %v2274 = vpack.c.bf16 %v2271, %v2268
  %v2291 = vunpack.c.l.b16 %v1541
  %v2292 = vunpack.c.l.b16 %v1542
  %v2293 = vunpack.c.l.b16 %v1543
  %v2294 = vunpack.c.l.b16 %v1544
  %v2295 = vunpack.c.l.b16 %v1545
  %v2296 = vunpack.c.l.b16 %v1546
  %v2297 = vunpack.c.l.b16 %v1547
  %v2298 = vunpack.c.l.b16 %v1548
  %v2299 = vunpack.c.l.b16 %v1549
  %v2300 = vunpack.c.l.b16 %v1550
  %v2301 = vunpack.c.l.b16 %v1551
  %v2302 = vunpack.c.l.b16 %v1552
  %v2303 = vunpack.c.l.b16 %v1553
  %v2304 = vunpack.c.l.b16 %v1554
  %v2305 = vunpack.c.l.b16 %v1555
  %v2306 = vunpack.c.l.b16 %v1556
  %v2307 = vpack.c.b16 %v2292, %v2291
  %v2308 = vpack.c.b16 %v2294, %v2293
  %v2309 = vpack.c.b16 %v2296, %v2295
  %v2310 = vpack.c.b16 %v2298, %v2297
  %v2311 = vpack.c.b16 %v2300, %v2299
  %v2312 = vpack.c.b16 %v2302, %v2301
  %v2313 = vpack.c.b16 %v2304, %v2303
  %v2314 = vpack.c.b16 %v2306, %v2305
  %2323 = vmatprep.subr.bf16.mxu0 0
  %2324 = vmatpush1.bf16.msra.mxu0 %v2307
  %2325 = vmatprep.subr.bf16.mxu0 0
  %2326 = vmatpush1.bf16.msra.mxu0 %v2308
  %2327 = vmatprep.subr.bf16.mxu0 0
  %2328 = vmatpush1.bf16.msra.mxu0 %v2309
  %2329 = vmatprep.subr.bf16.mxu0 0
  %2330 = vmatpush1.bf16.msra.mxu0 %v2310
  %2331 = vmatprep.subr.bf16.mxu0 0
  %2332 = vmatpush1.bf16.msra.mxu0 %v2311
  %2333 = vmatprep.subr.bf16.mxu0 0
  %2334 = vmatpush1.bf16.msra.mxu0 %v2312
  %2335 = vmatprep.subr.bf16.mxu0 0
  %2336 = vmatpush1.bf16.msra.mxu0 %v2313
  %2337 = vmatprep.subr.bf16.mxu0 0
  %2338 = vmatpush1.bf16.msra.mxu0 %v2314
  %2339 = vmatprep.subr.bf16.mxu0 0
  %2340 = vmatpush1.bf16.msra.mxu0 0
  %2341 = vmatprep.subr.bf16.mxu0 0
  %2342 = vmatpush1.bf16.msra.mxu0 0
  %2343 = vmatprep.subr.bf16.mxu0 0
  %2344 = vmatpush1.bf16.msra.mxu0 0
  %2345 = vmatprep.subr.bf16.mxu0 0
  %2346 = vmatpush1.bf16.msra.mxu0 0
  %2347 = vmatprep.subr.bf16.mxu0 0
  %2348 = vmatpush1.bf16.msra.mxu0 0
  %2349 = vmatprep.subr.bf16.mxu0 0
  %2350 = vmatpush1.bf16.msra.mxu0 0
  %2351 = vmatprep.subr.bf16.mxu0 0
  %2352 = vmatpush1.bf16.msra.mxu0 0
  %2353 = vmatprep.subr.bf16.mxu0 0
  %2354 = vmatpush1.bf16.msra.mxu0 0
  %2355 = vmatprep.mubr.bf16.mxu0 0
  %2356 = vmatmul.mubr.bf16.gmra.mrb[0].mxu0 %v2274
  %v2357 = vpop.f32.mrb[0].mxu0
  %v2358 = vadd.f32 0.0, %v2357
  %v2359 = vpop.f32.mrb[0].mxu0
  %v2360 = vpop.f32.mrb[0].mxu0
  %v2361 = vadd.f32 0.0, %v2360
  %v2362 = vpop.f32.mrb[0].mxu0
  %2363 = vdwg.mxu0
  %v2380 = vunpack.c.l.b16 %v1525
  %v2381 = vunpack.c.l.b16 %v1526
  %v2382 = vunpack.c.l.b16 %v1527
  %v2383 = vunpack.c.l.b16 %v1528
  %v2384 = vunpack.c.l.b16 %v1529
  %v2385 = vunpack.c.l.b16 %v1530
  %v2386 = vunpack.c.l.b16 %v1531
  %v2387 = vunpack.c.l.b16 %v1532
  %v2388 = vunpack.c.l.b16 %v1533
  %v2389 = vunpack.c.l.b16 %v1534
  %v2390 = vunpack.c.l.b16 %v1535
  %v2391 = vunpack.c.l.b16 %v1536
  %v2392 = vunpack.c.l.b16 %v1537
  %v2393 = vunpack.c.l.b16 %v1538
  %v2394 = vunpack.c.l.b16 %v1539
  %v2395 = vunpack.c.l.b16 %v1540
  %v2396 = vpack.c.b16 %v2381, %v2380
  %v2397 = vpack.c.b16 %v2383, %v2382
  %v2398 = vpack.c.b16 %v2385, %v2384
  %v2399 = vpack.c.b16 %v2387, %v2386
  %v2400 = vpack.c.b16 %v2389, %v2388
  %v2401 = vpack.c.b16 %v2391, %v2390
  %v2402 = vpack.c.b16 %v2393, %v2392
  %v2403 = vpack.c.b16 %v2395, %v2394
  %2412 = vmatprep.subr.bf16.mxu0 0
  %2413 = vmatpush1.bf16.msra.mxu0 %v2396
  %2414 = vmatprep.subr.bf16.mxu0 0
  %2415 = vmatpush1.bf16.msra.mxu0 %v2397
  %2416 = vmatprep.subr.bf16.mxu0 0
  %2417 = vmatpush1.bf16.msra.mxu0 %v2398
  %2418 = vmatprep.subr.bf16.mxu0 0
  %2419 = vmatpush1.bf16.msra.mxu0 %v2399
  %2420 = vmatprep.subr.bf16.mxu0 0
  %2421 = vmatpush1.bf16.msra.mxu0 %v2400
  %2422 = vmatprep.subr.bf16.mxu0 0
  %2423 = vmatpush1.bf16.msra.mxu0 %v2401
  %2424 = vmatprep.subr.bf16.mxu0 0
  %2425 = vmatpush1.bf16.msra.mxu0 %v2402
  %2426 = vmatprep.subr.bf16.mxu0 0
  %2427 = vmatpush1.bf16.msra.mxu0 %v2403
  %2428 = vmatprep.subr.bf16.mxu0 0
  %2429 = vmatpush1.bf16.msra.mxu0 0
  %2430 = vmatprep.subr.bf16.mxu0 0
  %2431 = vmatpush1.bf16.msra.mxu0 0
  %2432 = vmatprep.subr.bf16.mxu0 0
  %2433 = vmatpush1.bf16.msra.mxu0 0
  %2434 = vmatprep.subr.bf16.mxu0 0
  %2435 = vmatpush1.bf16.msra.mxu0 0
  %2436 = vmatprep.subr.bf16.mxu0 0
  %2437 = vmatpush1.bf16.msra.mxu0 0
  %2438 = vmatprep.subr.bf16.mxu0 0
  %2439 = vmatpush1.bf16.msra.mxu0 0
  %2440 = vmatprep.subr.bf16.mxu0 0
  %2441 = vmatpush1.bf16.msra.mxu0 0
  %2442 = vmatprep.subr.bf16.mxu0 0
  %2443 = vmatpush1.bf16.msra.mxu0 0
  %2444 = vmatprep.mubr.bf16.mxu0 0
  %2445 = vmatmul.mubr.bf16.gmra.mrb[0].mxu0 %v1580
  %v2446 = vpop.f32.mrb[0].mxu0
  %v2447 = vadd.f32 %v2358, %v2446
  %v2448 = vpop.f32.mrb[0].mxu0
  %v2449 = vpop.f32.mrb[0].mxu0
  %v2450 = vadd.f32 %v2361, %v2449
  %v2451 = vpop.f32.mrb[0].mxu0
  %2452 = vdwg.mxu0
  %v2453 = vlaneseq
  %v2454 = vshrl.u32 %v2453, 7
  %v2455 = vsub.s32 4, %v2454
  %v2456 = vrot.slane %v1573, %v2455
  %v2457 = vadd.f32 %v2447, %v2456
  %v2458 = vadd.f32 %v2450, %v2456
  %v2459 = vmax.f32 %v2457, 0.0
  %v2460 = vmax.f32 %v2458, 0.0
  %v2461 = vpack.c.bf16 %v2460, %v2459
  %v2462 = vlaneseq
  %v2463 = vshrl.u32 %v2462, 7
  %v2464 = vsub.s32 5, %v2463
  %v2465 = vrot.slane %v1573, %v2464
  %v2482 = vunpack.c.l.b16 %v1557
  %v2483 = vunpack.c.l.b16 %v1558
  %v2484 = vunpack.c.l.b16 %v1559
  %v2485 = vunpack.c.l.b16 %v1560
  %v2486 = vunpack.c.l.b16 %v1561
  %v2487 = vunpack.c.l.b16 %v1562
  %v2488 = vunpack.c.l.b16 %v1563
  %v2489 = vunpack.c.l.b16 %v1564
  %v2490 = vunpack.c.l.b16 %v1565
  %v2491 = vunpack.c.l.b16 %v1566
  %v2492 = vunpack.c.l.b16 %v1567
  %v2493 = vunpack.c.l.b16 %v1568
  %v2494 = vunpack.c.l.b16 %v1569
  %v2495 = vunpack.c.l.b16 %v1570
  %v2496 = vunpack.c.l.b16 %v1571
  %v2497 = vunpack.c.l.b16 %v1572
  %v2498 = vpack.c.b16 %v2483, %v2482
  %v2499 = vpack.c.b16 %v2485, %v2484
  %v2500 = vpack.c.b16 %v2487, %v2486
  %v2501 = vpack.c.b16 %v2489, %v2488
  %v2502 = vpack.c.b16 %v2491, %v2490
  %v2503 = vpack.c.b16 %v2493, %v2492
  %v2504 = vpack.c.b16 %v2495, %v2494
  %v2505 = vpack.c.b16 %v2497, %v2496
  %2514 = vmatprep.subr.bf16.mxu0 0
  %2515 = vmatpush1.bf16.msra.mxu0 %v2498
  %2516 = vmatprep.subr.bf16.mxu0 0
  %2517 = vmatpush1.bf16.msra.mxu0 %v2499
  %2518 = vmatprep.subr.bf16.mxu0 0
  %2519 = vmatpush1.bf16.msra.mxu0 %v2500
  %2520 = vmatprep.subr.bf16.mxu0 0
  %2521 = vmatpush1.bf16.msra.mxu0 %v2501
  %2522 = vmatprep.subr.bf16.mxu0 0
  %2523 = vmatpush1.bf16.msra.mxu0 %v2502
  %2524 = vmatprep.subr.bf16.mxu0 0
  %2525 = vmatpush1.bf16.msra.mxu0 %v2503
  %2526 = vmatprep.subr.bf16.mxu0 0
  %2527 = vmatpush1.bf16.msra.mxu0 %v2504
  %2528 = vmatprep.subr.bf16.mxu0 0
  %2529 = vmatpush1.bf16.msra.mxu0 %v2505
  %2530 = vmatprep.subr.bf16.mxu0 0
  %2531 = vmatpush1.bf16.msra.mxu0 0
  %2532 = vmatprep.subr.bf16.mxu0 0
  %2533 = vmatpush1.bf16.msra.mxu0 0
  %2534 = vmatprep.subr.bf16.mxu0 0
  %2535 = vmatpush1.bf16.msra.mxu0 0
  %2536 = vmatprep.subr.bf16.mxu0 0
  %2537 = vmatpush1.bf16.msra.mxu0 0
  %2538 = vmatprep.subr.bf16.mxu0 0
  %2539 = vmatpush1.bf16.msra.mxu0 0
  %2540 = vmatprep.subr.bf16.mxu0 0
  %2541 = vmatpush1.bf16.msra.mxu0 0
  %2542 = vmatprep.subr.bf16.mxu0 0
  %2543 = vmatpush1.bf16.msra.mxu0 0
  %2544 = vmatprep.subr.bf16.mxu0 0
  %2545 = vmatpush1.bf16.msra.mxu0 0
  %2546 = vmatprep.mubr.bf16.mxu0 0
  %2547 = vmatmul.mubr.bf16.gmra.mrb[0].mxu0 %v2461
  %v2548 = vpop.f32.mrb[0].mxu0
  %v2549 = vadd.f32 %v2465, %v2548
  %v2550 = vpop.f32.mrb[0].mxu0
  %v2551 = vpop.f32.mrb[0].mxu0
  %v2552 = vadd.f32 %v2465, %v2551
  %v2553 = vpop.f32.mrb[0].mxu0
  %2554 = vdwg.mxu0
  %2555 = vadd.xlane.f32.xlu0 %v2549
  %v2556 = vpop.xlane.xlu0 %2555
  %2557 = vadd.xlane.f32.xlu0 %v2552
  %v2558 = vpop.xlane.xlu0 %2557
  %v2559 = vmul.f32 %v2556, 0.03125
  %v2560 = vmul.f32 %v2558, 0.03125
  %v2561 = vsub.f32 %v2549, %v2559
  %v2562 = vsub.f32 %v2552, %v2560
  %v2563 = vmul.f32 %v2561, %v52
  %v2564 = vmul.f32 %v2562, %v52
  %v2565 = vmul.f32 %v2563, %v2563
  %v2566 = vmul.f32 %v2564, %v2564
  %2567 = vadd.xlane.f32.xlu0 %v2565
  %v2568 = vpop.xlane.xlu0 %2567
  %2569 = vadd.xlane.f32.xlu0 %v2566
  %v2570 = vpop.xlane.xlu0 %2569
  %v2571 = vmul.f32 %v2568, 0.03125
  %v2572 = vmul.f32 %v2570, 0.03125
  %v2573 = vadd.f32 %v2571, 1e-05
  %v2574 = vadd.f32 %v2572, 1e-05
  %v2575 = vrsqrt.pop %v2573
  %v2576 = vrsqrt.pop %v2574
  %v2577 = vmul.f32 %v2563, %v2575
  %v2578 = vmul.f32 %v2564, %v2576
  %v2579 = vlaneseq
  %v2580 = vshrl.u32 %v2579, 7
  %v2581 = vsub.s32 6, %v2580
  %v2582 = vrot.slane %v1573, %v2581
  %v2583 = vmul.f32 %v2577, %v2582
  %v2584 = vmul.f32 %v2578, %v2582
  %v2585 = vlaneseq
  %v2586 = vshrl.u32 %v2585, 7
  %v2587 = vsub.s32 7, %v2586
  %v2588 = vrot.slane %v1573, %v2587
  %v2589 = vadd.f32 %v2583, %v2588
  %v2590 = vadd.f32 %v2584, %v2588
  %vm2591 = vcmp.lt.s32.totalorder %v281, 16
  %vm2592 = vcmp.lt.s32.totalorder %v282, 16
  %v2593 = vsel %vm2591, 1, 0
  %v2594 = vsel %vm2592, 1, 0
  %v2595 = vcvt.s32.f32 %v2593
  %v2596 = vcvt.s32.f32 %v2594
  %v2597 = vmul.f32 %v2589, %v2595
  %v2598 = vmul.f32 %v2590, %v2596
  %v2599 = vadd.f32 %v1574, %v2597
  %v2600 = vadd.f32 %v1575, %v2598
  %2601 = vst [vmem:[%s13] sm:$0xff] %v2599
  %2602 = vst [vmem:[%s13 + $0x8] sm:$0xff] %v2600
  %s2603 = scalar_lea.vmem %s11, 448
  %v2604 = vld [vmem:[%s2603] sm:$0xf]
  %v2605 = vld [vmem:[%s2603 + $0x4] sm:$0xf]
  %v2606 = vld [vmem:[%s2603 + $0x8] sm:$0xf]
  %v2607 = vld [vmem:[%s2603 + $0xc] sm:$0xf]
  %v2608 = vld [vmem:[%s2603 + $0x10] sm:$0xf]
  %v2609 = vld [vmem:[%s2603 + $0x14] sm:$0xf]
  %v2610 = vld [vmem:[%s2603 + $0x18] sm:$0xf]
  %v2611 = vld [vmem:[%s2603 + $0x1c] sm:$0xf]
  %v2612 = vld [vmem:[%s2603 + $0x20] sm:$0xf]
  %v2613 = vld [vmem:[%s2603 + $0x24] sm:$0xf]
  %v2614 = vld [vmem:[%s2603 + $0x28] sm:$0xf]
  %v2615 = vld [vmem:[%s2603 + $0x2c] sm:$0xf]
  %v2616 = vld [vmem:[%s2603 + $0x30] sm:$0xf]
  %v2617 = vld [vmem:[%s2603 + $0x34] sm:$0xf]
  %v2618 = vld [vmem:[%s2603 + $0x38] sm:$0xf]
  %v2619 = vld [vmem:[%s2603 + $0x3c] sm:$0xf]
  %v2620 = vld [vmem:[%s2603 + $0x40] sm:$0xf]
  %v2621 = vld [vmem:[%s2603 + $0x44] sm:$0xf]
  %v2622 = vld [vmem:[%s2603 + $0x48] sm:$0xf]
  %v2623 = vld [vmem:[%s2603 + $0x4c] sm:$0xf]
  %v2624 = vld [vmem:[%s2603 + $0x50] sm:$0xf]
  %v2625 = vld [vmem:[%s2603 + $0x54] sm:$0xf]
  %v2626 = vld [vmem:[%s2603 + $0x58] sm:$0xf]
  %v2627 = vld [vmem:[%s2603 + $0x5c] sm:$0xf]
  %v2628 = vld [vmem:[%s2603 + $0x60] sm:$0xf]
  %v2629 = vld [vmem:[%s2603 + $0x64] sm:$0xf]
  %v2630 = vld [vmem:[%s2603 + $0x68] sm:$0xf]
  %v2631 = vld [vmem:[%s2603 + $0x6c] sm:$0xf]
  %v2632 = vld [vmem:[%s2603 + $0x70] sm:$0xf]
  %v2633 = vld [vmem:[%s2603 + $0x74] sm:$0xf]
  %v2634 = vld [vmem:[%s2603 + $0x78] sm:$0xf]
  %v2635 = vld [vmem:[%s2603 + $0x7c] sm:$0xf]
  %v2636 = vld [vmem:[%s2603 + $0x80] sm:$0xf]
  %v2637 = vld [vmem:[%s2603 + $0x84] sm:$0xf]
  %v2638 = vld [vmem:[%s2603 + $0x88] sm:$0xf]
  %v2639 = vld [vmem:[%s2603 + $0x8c] sm:$0xf]
  %v2640 = vld [vmem:[%s2603 + $0x90] sm:$0xf]
  %v2641 = vld [vmem:[%s2603 + $0x94] sm:$0xf]
  %v2642 = vld [vmem:[%s2603 + $0x98] sm:$0xf]
  %v2643 = vld [vmem:[%s2603 + $0x9c] sm:$0xf]
  %v2644 = vld [vmem:[%s2603 + $0xa0] sm:$0xf]
  %v2645 = vld [vmem:[%s2603 + $0xa4] sm:$0xf]
  %v2646 = vld [vmem:[%s2603 + $0xa8] sm:$0xf]
  %v2647 = vld [vmem:[%s2603 + $0xac] sm:$0xf]
  %v2648 = vld [vmem:[%s2603 + $0xb0] sm:$0xf]
  %v2649 = vld [vmem:[%s2603 + $0xb4] sm:$0xf]
  %v2650 = vld [vmem:[%s2603 + $0xb8] sm:$0xf]
  %v2651 = vld [vmem:[%s2603 + $0xbc] sm:$0xf]
  %v2652 = vld [vmem:[%s2603 + $0xc0] sm:$0xf]
  %v2653 = vld [vmem:[%s2603 + $0xc4] sm:$0xf]
  %v2654 = vld [vmem:[%s2603 + $0xc8] sm:$0xf]
  %v2655 = vld [vmem:[%s2603 + $0xcc] sm:$0xf]
  %v2656 = vld [vmem:[%s2603 + $0xd0] sm:$0xf]
  %v2657 = vld [vmem:[%s2603 + $0xd4] sm:$0xf]
  %v2658 = vld [vmem:[%s2603 + $0xd8] sm:$0xf]
  %v2659 = vld [vmem:[%s2603 + $0xdc] sm:$0xf]
  %v2660 = vld [vmem:[%s2603 + $0xe0] sm:$0xf]
  %v2661 = vld [vmem:[%s2603 + $0xe4] sm:$0xf]
  %v2662 = vld [vmem:[%s2603 + $0xe8] sm:$0xf]
  %v2663 = vld [vmem:[%s2603 + $0xec] sm:$0xf]
  %v2664 = vld [vmem:[%s2603 + $0xf0] sm:$0xf]
  %v2665 = vld [vmem:[%s2603 + $0xf4] sm:$0xf]
  %v2666 = vld [vmem:[%s2603 + $0xf8] sm:$0xf]
  %v2667 = vld [vmem:[%s2603 + $0xfc] sm:$0xf]
  %v2668 = vld [vmem:[%s2603 + $0x100] sm:$0xf]
  %v2669 = vld [vmem:[%s2603 + $0x104] sm:$0xf]
  %v2670 = vld [vmem:[%s2603 + $0x108] sm:$0xf]
  %v2671 = vld [vmem:[%s2603 + $0x10c] sm:$0xf]
  %v2672 = vld [vmem:[%s2603 + $0x110] sm:$0xf]
  %v2673 = vld [vmem:[%s2603 + $0x114] sm:$0xf]
  %v2674 = vld [vmem:[%s2603 + $0x118] sm:$0xf]
  %v2675 = vld [vmem:[%s2603 + $0x11c] sm:$0xf]
  %v2676 = vld [vmem:[%s2603 + $0x120] sm:$0xf]
  %v2677 = vld [vmem:[%s2603 + $0x124] sm:$0xf]
  %v2678 = vld [vmem:[%s2603 + $0x128] sm:$0xf]
  %v2679 = vld [vmem:[%s2603 + $0x12c] sm:$0xf]
  %v2680 = vld [vmem:[%s2603 + $0x130] sm:$0xf]
  %v2681 = vld [vmem:[%s2603 + $0x134] sm:$0xf]
  %v2682 = vld [vmem:[%s2603 + $0x138] sm:$0xf]
  %v2683 = vld [vmem:[%s2603 + $0x13c] sm:$0xf]
  %v2684 = vld [vmem:[%s2603 + $0x140] sm:$0xf]
  %v2685 = vld [vmem:[%s2603 + $0x144] sm:$0xf]
  %v2686 = vld [vmem:[%s2603 + $0x148] sm:$0xf]
  %v2687 = vld [vmem:[%s2603 + $0x14c] sm:$0xf]
  %v2688 = vld [vmem:[%s2603 + $0x150] sm:$0xf]
  %v2689 = vld [vmem:[%s2603 + $0x154] sm:$0xf]
  %v2690 = vld [vmem:[%s2603 + $0x158] sm:$0xf]
  %v2691 = vld [vmem:[%s2603 + $0x15c] sm:$0xf]
  %v2692 = vld [vmem:[%s2603 + $0x160] sm:$0xf]
  %v2693 = vld [vmem:[%s2603 + $0x164] sm:$0xf]
  %v2694 = vld [vmem:[%s2603 + $0x168] sm:$0xf]
  %v2695 = vld [vmem:[%s2603 + $0x16c] sm:$0xf]
  %v2696 = vld [vmem:[%s2603 + $0x170] sm:$0xf]
  %v2697 = vld [vmem:[%s2603 + $0x174] sm:$0xf]
  %v2698 = vld [vmem:[%s2603 + $0x178] sm:$0xf]
  %v2699 = vld [vmem:[%s2603 + $0x17c] sm:$0xf]
  %v2700 = vld [vmem:[%s2603 + $0x180] sm:$0xf]
  %v2701 = vld [vmem:[%s2603 + $0x184] sm:$0xf]
  %v2702 = vld [vmem:[%s2603 + $0x188] sm:$0xf]
  %v2703 = vld [vmem:[%s2603 + $0x18c] sm:$0xf]
  %v2704 = vld [vmem:[%s2603 + $0x190] sm:$0xf]
  %v2705 = vld [vmem:[%s2603 + $0x194] sm:$0xf]
  %v2706 = vld [vmem:[%s2603 + $0x198] sm:$0xf]
  %v2707 = vld [vmem:[%s2603 + $0x19c] sm:$0xf]
  %v2708 = vld [vmem:[%s2603 + $0x1a0] sm:$0xf]
  %v2709 = vld [vmem:[%s2603 + $0x1a4] sm:$0xf]
  %v2710 = vld [vmem:[%s2603 + $0x1a8] sm:$0xf]
  %v2711 = vld [vmem:[%s2603 + $0x1ac] sm:$0xf]
  %v2712 = vld [vmem:[%s2603 + $0x1b0] sm:$0xf]
  %v2713 = vld [vmem:[%s2603 + $0x1b4] sm:$0xf]
  %v2714 = vld [vmem:[%s2603 + $0x1b8] sm:$0xf]
  %v2715 = vld [vmem:[%s2603 + $0x1bc] sm:$0xf]
  %s2716 = scalar_lea.vmem %s12, 8
  %v2717 = vld [vmem:[%s2716] sm:$0xff]
  %v2718 = vld [vmem:[%s14] sm:$0xff]
  %v2719 = vld [vmem:[%s14 + $0x8] sm:$0xff]
  %v2720 = vld [vmem:[%s14 + $0x10] sm:$0xff]
  %v2721 = vld [vmem:[%s14 + $0x18] sm:$0xff]
  %v2722 = vld [vmem:[%s15] sm:$0xff]
  %v2723 = vld [vmem:[%s15 + $0x8] sm:$0xff]
  %v2724 = vld [vmem:[%s15 + $0x10] sm:$0xff]
  %v2725 = vld [vmem:[%s15 + $0x18] sm:$0xff]
  %v2726 = vld [vmem:[%s15 + $0x20] sm:$0xff]
  %v2727 = vld [vmem:[%s15 + $0x28] sm:$0xff]
  %v2728 = vpack.c.bf16 %v2719, %v2718
  %v2729 = vpack.c.bf16 %v2721, %v2720
  %v2730 = vld [vmem:[%s3] sm:$0xff]
  %v2731 = vld [vmem:[%s3 + $0x8] sm:$0xff]
  %v2732 = vld [vmem:[%s3 + $0x10] sm:$0xff]
  %v2733 = vld [vmem:[%s3 + $0x18] sm:$0xff]
  %v2734 = vld [vmem:[%s3 + $0x20] sm:$0xff]
  %v2735 = vld [vmem:[%s3 + $0x28] sm:$0xff]
  %2736 = vset.pattern.permute.xlu0 0
  %2737 = vperm.xlu0 %2736, %v2730
  %v2738 = vpop.permute.xlu0 %2737
  %2739 = vset.pattern.permute.xlu0 0
  %2740 = vperm.xlu0 %2739, %v2731
  %v2741 = vpop.permute.xlu0 %2740
  %2742 = vset.pattern.permute.xlu0 0
  %2743 = vperm.xlu0 %2742, %v2732
  %v2744 = vpop.permute.xlu0 %2743
  %2745 = vset.pattern.permute.xlu0 0
  %2746 = vperm.xlu0 %2745, %v2733
  %v2747 = vpop.permute.xlu0 %2746
  %2748 = vset.pattern.permute.xlu0 0
  %2749 = vperm.xlu0 %2748, %v2734
  %v2750 = vpop.permute.xlu0 %2749
  %2751 = vset.pattern.permute.xlu0 0
  %2752 = vperm.xlu0 %2751, %v2735
  %v2753 = vpop.permute.xlu0 %2752
  %vm2754 = vcmp.eq.s32.totalorder %v2738, %v49
  %vm2755 = vcmp.eq.s32.totalorder %v2741, %v49
  %vm2756 = vcmp.eq.s32.totalorder %v2744, %v49
  %vm2757 = vcmp.eq.s32.totalorder %v2747, %v49
  %vm2758 = vcmp.eq.s32.totalorder %v2750, %v49
  %vm2759 = vcmp.eq.s32.totalorder %v2753, %v49
  %v2760 = vsel %vm2754, 1.0, 0.0
  %v2761 = vsel %vm2755, 1.0, 0.0
  %v2762 = vsel %vm2756, 1.0, 0.0
  %v2763 = vsel %vm2757, 1.0, 0.0
  %v2764 = vsel %vm2758, 1.0, 0.0
  %v2765 = vsel %vm2759, 1.0, 0.0
  %v2766 = vpack.c.bf16 %v2761, %v2760
  %v2767 = vpack.c.bf16 %v2763, %v2762
  %v2768 = vpack.c.bf16 %v2765, %v2764
  %v2769 = vld [vmem:[%s4] sm:$0xff]
  %v2770 = vld [vmem:[%s4 + $0x8] sm:$0xff]
  %v2771 = vld [vmem:[%s4 + $0x10] sm:$0xff]
  %v2772 = vld [vmem:[%s4 + $0x18] sm:$0xff]
  %v2773 = vld [vmem:[%s4 + $0x20] sm:$0xff]
  %v2774 = vld [vmem:[%s4 + $0x28] sm:$0xff]
  %2775 = vset.pattern.permute.xlu0 0
  %2776 = vperm.xlu0 %2775, %v2769
  %v2777 = vpop.permute.xlu0 %2776
  %2778 = vset.pattern.permute.xlu0 0
  %2779 = vperm.xlu0 %2778, %v2770
  %v2780 = vpop.permute.xlu0 %2779
  %2781 = vset.pattern.permute.xlu0 0
  %2782 = vperm.xlu0 %2781, %v2771
  %v2783 = vpop.permute.xlu0 %2782
  %2784 = vset.pattern.permute.xlu0 0
  %2785 = vperm.xlu0 %2784, %v2772
  %v2786 = vpop.permute.xlu0 %2785
  %2787 = vset.pattern.permute.xlu0 0
  %2788 = vperm.xlu0 %2787, %v2773
  %v2789 = vpop.permute.xlu0 %2788
  %2790 = vset.pattern.permute.xlu0 0
  %2791 = vperm.xlu0 %2790, %v2774
  %v2792 = vpop.permute.xlu0 %2791
  %vm2793 = vcmp.eq.s32.totalorder %v2777, %v49
  %vm2794 = vcmp.eq.s32.totalorder %v2780, %v49
  %vm2795 = vcmp.eq.s32.totalorder %v2783, %v49
  %vm2796 = vcmp.eq.s32.totalorder %v2786, %v49
  %vm2797 = vcmp.eq.s32.totalorder %v2789, %v49
  %vm2798 = vcmp.eq.s32.totalorder %v2792, %v49
  %v2799 = vsel %vm2793, 1.0, 0.0
  %v2800 = vsel %vm2794, 1.0, 0.0
  %v2801 = vsel %vm2795, 1.0, 0.0
  %v2802 = vsel %vm2796, 1.0, 0.0
  %v2803 = vsel %vm2797, 1.0, 0.0
  %v2804 = vsel %vm2798, 1.0, 0.0
  %v2805 = vpack.c.bf16 %v2800, %v2799
  %v2806 = vpack.c.bf16 %v2802, %v2801
  %v2807 = vpack.c.bf16 %v2804, %v2803
  %v2808 = vld [vmem:[%s5] sm:$0x1]
  %v2809 = vlaneseq
  %v2810 = vshrl.u32 %v2809, 7
  %v2811 = vsub.s32 0, %v2810
  %v2812 = vrot.slane %v2808, %v2811
  %vm2813 = vcmp.eq.s32.totalorder %v281, %v2812
  %vm2814 = vcmp.eq.s32.totalorder %v282, %v2812
  %vm2815 = vcmp.eq.s32.totalorder %v283, %v2812
  %vm2816 = vcmp.eq.s32.totalorder %v284, %v2812
  %v2817 = vsel %vm2813, 1.0, 0.0
  %v2818 = vsel %vm2814, 1.0, 0.0
  %v2819 = vsel %vm2815, 1.0, 0.0
  %v2820 = vsel %vm2816, 1.0, 0.0
  %v2821 = vpack.c.bf16 %v2818, %v2817
  %v2822 = vpack.c.bf16 %v2820, %v2819
  %v2839 = vunpack.c.l.b16 %v2604
  %v2840 = vunpack.c.l.b16 %v2605
  %v2841 = vunpack.c.l.b16 %v2606
  %v2842 = vunpack.c.l.b16 %v2607
  %v2843 = vunpack.c.l.b16 %v2608
  %v2844 = vunpack.c.l.b16 %v2609
  %v2845 = vunpack.c.l.b16 %v2610
  %v2846 = vunpack.c.l.b16 %v2611
  %v2847 = vunpack.c.l.b16 %v2612
  %v2848 = vunpack.c.l.b16 %v2613
  %v2849 = vunpack.c.l.b16 %v2614
  %v2850 = vunpack.c.l.b16 %v2615
  %v2851 = vunpack.c.l.b16 %v2616
  %v2852 = vunpack.c.l.b16 %v2617
  %v2853 = vunpack.c.l.b16 %v2618
  %v2854 = vunpack.c.l.b16 %v2619
  %v2855 = vpack.c.b16 %v2840, %v2839
  %v2856 = vpack.c.b16 %v2842, %v2841
  %v2857 = vpack.c.b16 %v2844, %v2843
  %v2858 = vpack.c.b16 %v2846, %v2845
  %v2859 = vpack.c.b16 %v2848, %v2847
  %v2860 = vpack.c.b16 %v2850, %v2849
  %v2861 = vpack.c.b16 %v2852, %v2851
  %v2862 = vpack.c.b16 %v2854, %v2853
  %2871 = vmatprep.subr.bf16.mxu0 0
  %2872 = vmatpush1.bf16.msra.mxu0 %v2855
  %2873 = vmatprep.subr.bf16.mxu0 0
  %2874 = vmatpush1.bf16.msra.mxu0 %v2856
  %2875 = vmatprep.subr.bf16.mxu0 0
  %2876 = vmatpush1.bf16.msra.mxu0 %v2857
  %2877 = vmatprep.subr.bf16.mxu0 0
  %2878 = vmatpush1.bf16.msra.mxu0 %v2858
  %2879 = vmatprep.subr.bf16.mxu0 0
  %2880 = vmatpush1.bf16.msra.mxu0 %v2859
  %2881 = vmatprep.subr.bf16.mxu0 0
  %2882 = vmatpush1.bf16.msra.mxu0 %v2860
  %2883 = vmatprep.subr.bf16.mxu0 0
  %2884 = vmatpush1.bf16.msra.mxu0 %v2861
  %2885 = vmatprep.subr.bf16.mxu0 0
  %2886 = vmatpush1.bf16.msra.mxu0 %v2862
  %2887 = vmatprep.subr.bf16.mxu0 0
  %2888 = vmatpush1.bf16.msra.mxu0 0
  %2889 = vmatprep.subr.bf16.mxu0 0
  %2890 = vmatpush1.bf16.msra.mxu0 0
  %2891 = vmatprep.subr.bf16.mxu0 0
  %2892 = vmatpush1.bf16.msra.mxu0 0
  %2893 = vmatprep.subr.bf16.mxu0 0
  %2894 = vmatpush1.bf16.msra.mxu0 0
  %2895 = vmatprep.subr.bf16.mxu0 0
  %2896 = vmatpush1.bf16.msra.mxu0 0
  %2897 = vmatprep.subr.bf16.mxu0 0
  %2898 = vmatpush1.bf16.msra.mxu0 0
  %2899 = vmatprep.subr.bf16.mxu0 0
  %2900 = vmatpush1.bf16.msra.mxu0 0
  %2901 = vmatprep.subr.bf16.mxu0 0
  %2902 = vmatpush1.bf16.msra.mxu0 0
  %2903 = vmatprep.mubr.bf16.mxu0 0
  %2904 = vmatmul.mubr.bf16.gmra.mrb[0].mxu0 %v2728
  %v2905 = vpop.f32.mrb[0].mxu0
  %v2906 = vadd.f32 0.0, %v2905
  %v2907 = vpop.f32.mrb[0].mxu0
  %v2908 = vpop.f32.mrb[0].mxu0
  %v2909 = vadd.f32 0.0, %v2908
  %v2910 = vpop.f32.mrb[0].mxu0
  %2911 = vmatprep.mubr.bf16.mxu0 0
  %2912 = vmatmul.mubr.bf16.gmra.mrb[0].mxu0 %v2729
  %v2913 = vpop.f32.mrb[0].mxu0
  %v2914 = vadd.f32 0.0, %v2913
  %v2915 = vpop.f32.mrb[0].mxu0
  %v2916 = vpop.f32.mrb[0].mxu0
  %v2917 = vadd.f32 0.0, %v2916
  %v2918 = vpop.f32.mrb[0].mxu0
  %2919 = vdwg.mxu0
  %v2936 = vunpack.c.l.b16 %v2620
  %v2937 = vunpack.c.l.b16 %v2621
  %v2938 = vunpack.c.l.b16 %v2622
  %v2939 = vunpack.c.l.b16 %v2623
  %v2940 = vunpack.c.l.b16 %v2624
  %v2941 = vunpack.c.l.b16 %v2625
  %v2942 = vunpack.c.l.b16 %v2626
  %v2943 = vunpack.c.l.b16 %v2627
  %v2944 = vunpack.c.l.b16 %v2628
  %v2945 = vunpack.c.l.b16 %v2629
  %v2946 = vunpack.c.l.b16 %v2630
  %v2947 = vunpack.c.l.b16 %v2631
  %v2948 = vunpack.c.l.b16 %v2632
  %v2949 = vunpack.c.l.b16 %v2633
  %v2950 = vunpack.c.l.b16 %v2634
  %v2951 = vunpack.c.l.b16 %v2635
  %v2952 = vpack.c.b16 %v2937, %v2936
  %v2953 = vpack.c.b16 %v2939, %v2938
  %v2954 = vpack.c.b16 %v2941, %v2940
  %v2955 = vpack.c.b16 %v2943, %v2942
  %v2956 = vpack.c.b16 %v2945, %v2944
  %v2957 = vpack.c.b16 %v2947, %v2946
  %v2958 = vpack.c.b16 %v2949, %v2948
  %v2959 = vpack.c.b16 %v2951, %v2950
  %2968 = vmatprep.subr.bf16.mxu0 0
  %2969 = vmatpush1.bf16.msra.mxu0 %v2952
  %2970 = vmatprep.subr.bf16.mxu0 0
  %2971 = vmatpush1.bf16.msra.mxu0 %v2953
  %2972 = vmatprep.subr.bf16.mxu0 0
  %2973 = vmatpush1.bf16.msra.mxu0 %v2954
  %2974 = vmatprep.subr.bf16.mxu0 0
  %2975 = vmatpush1.bf16.msra.mxu0 %v2955
  %2976 = vmatprep.subr.bf16.mxu0 0
  %2977 = vmatpush1.bf16.msra.mxu0 %v2956
  %2978 = vmatprep.subr.bf16.mxu0 0
  %2979 = vmatpush1.bf16.msra.mxu0 %v2957
  %2980 = vmatprep.subr.bf16.mxu0 0
  %2981 = vmatpush1.bf16.msra.mxu0 %v2958
  %2982 = vmatprep.subr.bf16.mxu0 0
  %2983 = vmatpush1.bf16.msra.mxu0 %v2959
  %2984 = vmatprep.subr.bf16.mxu0 0
  %2985 = vmatpush1.bf16.msra.mxu0 0
  %2986 = vmatprep.subr.bf16.mxu0 0
  %2987 = vmatpush1.bf16.msra.mxu0 0
  %2988 = vmatprep.subr.bf16.mxu0 0
  %2989 = vmatpush1.bf16.msra.mxu0 0
  %2990 = vmatprep.subr.bf16.mxu0 0
  %2991 = vmatpush1.bf16.msra.mxu0 0
  %2992 = vmatprep.subr.bf16.mxu0 0
  %2993 = vmatpush1.bf16.msra.mxu0 0
  %2994 = vmatprep.subr.bf16.mxu0 0
  %2995 = vmatpush1.bf16.msra.mxu0 0
  %2996 = vmatprep.subr.bf16.mxu0 0
  %2997 = vmatpush1.bf16.msra.mxu0 0
  %2998 = vmatprep.subr.bf16.mxu0 0
  %2999 = vmatpush1.bf16.msra.mxu0 0
  %3000 = vmatprep.mubr.bf16.mxu0 0
  %3001 = vmatmul.mubr.bf16.gmra.mrb[0].mxu0 %v2728
  %v3002 = vpop.f32.mrb[0].mxu0
  %v3003 = vadd.f32 0.0, %v3002
  %v3004 = vpop.f32.mrb[0].mxu0
  %v3005 = vpop.f32.mrb[0].mxu0
  %v3006 = vadd.f32 0.0, %v3005
  %v3007 = vpop.f32.mrb[0].mxu0
  %3008 = vmatprep.mubr.bf16.mxu0 0
  %3009 = vmatmul.mubr.bf16.gmra.mrb[0].mxu0 %v2729
  %v3010 = vpop.f32.mrb[0].mxu0
  %v3011 = vadd.f32 0.0, %v3010
  %v3012 = vpop.f32.mrb[0].mxu0
  %v3013 = vpop.f32.mrb[0].mxu0
  %v3014 = vadd.f32 0.0, %v3013
  %v3015 = vpop.f32.mrb[0].mxu0
  %3016 = vdwg.mxu0
  %v3017 = vpack.c.bf16 %v2909, %v2906
  %v3018 = vpack.c.bf16 %v2917, %v2914
  %v3019 = vpack.c.bf16 %v3006, %v3003
  %v3020 = vpack.c.bf16 %v3014, %v3011
  %v3022 = vsel %vm498, %v2805, 0
  %v3025 = vsel %vm498, %v2806, 0
  %v3028 = vsel %vm498, %v2807, 0
  %3030 = vmatprep.subr.bf16.mxu0 0
  %3031 = vmatpush1.bf16.msra.mxu0 %v3019
  %3032 = vmatprep.subr.bf16.mxu0 0
  %3033 = vmatpush1.bf16.msra.mxu0 %v3020
  %3034 = vmatprep.subr.bf16.mxu0 0
  %3035 = vmatpush1.bf16.msra.mxu0 0
  %3036 = vmatprep.subr.bf16.mxu0 0
  %3037 = vmatpush1.bf16.msra.mxu0 0
  %3038 = vmatprep.subr.bf16.mxu0 0
  %3039 = vmatpush1.bf16.msra.mxu0 0
  %3040 = vmatprep.subr.bf16.mxu0 0
  %3041 = vmatpush1.bf16.msra.mxu0 0
  %3042 = vmatprep.subr.bf16.mxu0 0
  %3043 = vmatpush1.bf16.msra.mxu0 0
  %3044 = vmatprep.subr.bf16.mxu0 0
  %3045 = vmatpush1.bf16.msra.mxu0 0
  %3046 = vmatprep.subr.bf16.mxu0 0
  %3047 = vmatpush1.bf16.msra.mxu0 0
  %3048 = vmatprep.subr.bf16.mxu0 0
  %3049 = vmatpush1.bf16.msra.mxu0 0
  %3050 = vmatprep.subr.bf16.mxu0 0
  %3051 = vmatpush1.bf16.msra.mxu0 0
  %3052 = vmatprep.subr.bf16.mxu0 0
  %3053 = vmatpush1.bf16.msra.mxu0 0
  %3054 = vmatprep.subr.bf16.mxu0 0
  %3055 = vmatpush1.bf16.msra.mxu0 0
  %3056 = vmatprep.subr.bf16.mxu0 0
  %3057 = vmatpush1.bf16.msra.mxu0 0
  %3058 = vmatprep.subr.bf16.mxu0 0
  %3059 = vmatpush1.bf16.msra.mxu0 0
  %3060 = vmatprep.subr.bf16.mxu0 0
  %3061 = vmatpush1.bf16.msra.mxu0 0
  %3062 = vmatprep.mubr.bf16.mxu0 0
  %3063 = vmatmul.mubr.bf16.gmra.mrb[0].mxu0 %v3022
  %v3064 = vpop.f32.mrb[0].mxu0
  %v3065 = vadd.f32 0.0, %v3064
  %v3066 = vpop.f32.mrb[0].mxu0
  %v3067 = vpop.f32.mrb[0].mxu0
  %v3068 = vadd.f32 0.0, %v3067
  %v3069 = vpop.f32.mrb[0].mxu0
  %3070 = vmatprep.mubr.bf16.mxu0 0
  %3071 = vmatmul.mubr.bf16.gmra.mrb[0].mxu0 %v3025
  %v3072 = vpop.f32.mrb[0].mxu0
  %v3073 = vadd.f32 0.0, %v3072
  %v3074 = vpop.f32.mrb[0].mxu0
  %v3075 = vpop.f32.mrb[0].mxu0
  %v3076 = vadd.f32 0.0, %v3075
  %v3077 = vpop.f32.mrb[0].mxu0
  %3078 = vmatprep.mubr.bf16.mxu0 0
  %3079 = vmatmul.mubr.bf16.gmra.mrb[0].mxu0 %v3028
  %v3080 = vpop.f32.mrb[0].mxu0
  %v3081 = vadd.f32 0.0, %v3080
  %v3082 = vpop.f32.mrb[0].mxu0
  %v3083 = vpop.f32.mrb[0].mxu0
  %v3084 = vadd.f32 0.0, %v3083
  %v3085 = vpop.f32.mrb[0].mxu0
  %3086 = vdwg.mxu0
  %v3088 = vsel %vm498, %v2766, 0
  %v3091 = vsel %vm498, %v2767, 0
  %v3094 = vsel %vm498, %v2768, 0
  %3096 = vmatprep.subr.bf16.mxu0 0
  %3097 = vmatpush1.bf16.msra.mxu0 %v3017
  %3098 = vmatprep.subr.bf16.mxu0 0
  %3099 = vmatpush1.bf16.msra.mxu0 %v3018
  %3100 = vmatprep.subr.bf16.mxu0 0
  %3101 = vmatpush1.bf16.msra.mxu0 0
  %3102 = vmatprep.subr.bf16.mxu0 0
  %3103 = vmatpush1.bf16.msra.mxu0 0
  %3104 = vmatprep.subr.bf16.mxu0 0
  %3105 = vmatpush1.bf16.msra.mxu0 0
  %3106 = vmatprep.subr.bf16.mxu0 0
  %3107 = vmatpush1.bf16.msra.mxu0 0
  %3108 = vmatprep.subr.bf16.mxu0 0
  %3109 = vmatpush1.bf16.msra.mxu0 0
  %3110 = vmatprep.subr.bf16.mxu0 0
  %3111 = vmatpush1.bf16.msra.mxu0 0
  %3112 = vmatprep.subr.bf16.mxu0 0
  %3113 = vmatpush1.bf16.msra.mxu0 0
  %3114 = vmatprep.subr.bf16.mxu0 0
  %3115 = vmatpush1.bf16.msra.mxu0 0
  %3116 = vmatprep.subr.bf16.mxu0 0
  %3117 = vmatpush1.bf16.msra.mxu0 0
  %3118 = vmatprep.subr.bf16.mxu0 0
  %3119 = vmatpush1.bf16.msra.mxu0 0
  %3120 = vmatprep.subr.bf16.mxu0 0
  %3121 = vmatpush1.bf16.msra.mxu0 0
  %3122 = vmatprep.subr.bf16.mxu0 0
  %3123 = vmatpush1.bf16.msra.mxu0 0
  %3124 = vmatprep.subr.bf16.mxu0 0
  %3125 = vmatpush1.bf16.msra.mxu0 0
  %3126 = vmatprep.subr.bf16.mxu0 0
  %3127 = vmatpush1.bf16.msra.mxu0 0
  %3128 = vmatprep.mubr.bf16.mxu0 0
  %3129 = vmatmul.mubr.bf16.gmra.mrb[0].mxu0 %v3088
  %v3130 = vpop.f32.mrb[0].mxu0
  %v3131 = vadd.f32 %v3065, %v3130
  %v3132 = vpop.f32.mrb[0].mxu0
  %v3133 = vpop.f32.mrb[0].mxu0
  %v3134 = vadd.f32 %v3068, %v3133
  %v3135 = vpop.f32.mrb[0].mxu0
  %3136 = vmatprep.mubr.bf16.mxu0 0
  %3137 = vmatmul.mubr.bf16.gmra.mrb[0].mxu0 %v3091
  %v3138 = vpop.f32.mrb[0].mxu0
  %v3139 = vadd.f32 %v3073, %v3138
  %v3140 = vpop.f32.mrb[0].mxu0
  %v3141 = vpop.f32.mrb[0].mxu0
  %v3142 = vadd.f32 %v3076, %v3141
  %v3143 = vpop.f32.mrb[0].mxu0
  %3144 = vmatprep.mubr.bf16.mxu0 0
  %3145 = vmatmul.mubr.bf16.gmra.mrb[0].mxu0 %v3094
  %v3146 = vpop.f32.mrb[0].mxu0
  %v3147 = vadd.f32 %v3081, %v3146
  %v3148 = vpop.f32.mrb[0].mxu0
  %v3149 = vpop.f32.mrb[0].mxu0
  %v3150 = vadd.f32 %v3084, %v3149
  %v3151 = vpop.f32.mrb[0].mxu0
  %3152 = vdwg.mxu0
  %v3153 = vpack.c.bf16 %v2723, %v2722
  %v3154 = vpack.c.bf16 %v2725, %v2724
  %v3155 = vpack.c.bf16 %v2727, %v2726
  %v3172 = vunpack.c.l.b16 %v2636
  %v3173 = vunpack.c.l.b16 %v2637
  %v3174 = vunpack.c.l.b16 %v2638
  %v3175 = vunpack.c.l.b16 %v2639
  %v3176 = vunpack.c.l.b16 %v2640
  %v3177 = vunpack.c.l.b16 %v2641
  %v3178 = vunpack.c.l.b16 %v2642
  %v3179 = vunpack.c.l.b16 %v2643
  %v3180 = vunpack.c.l.b16 %v2644
  %v3181 = vunpack.c.l.b16 %v2645
  %v3182 = vunpack.c.l.b16 %v2646
  %v3183 = vunpack.c.l.b16 %v2647
  %v3184 = vunpack.c.l.b16 %v2648
  %v3185 = vunpack.c.l.b16 %v2649
  %v3186 = vunpack.c.l.b16 %v2650
  %v3187 = vunpack.c.l.b16 %v2651
  %v3188 = vpack.c.b16 %v3173, %v3172
  %v3189 = vpack.c.b16 %v3175, %v3174
  %v3190 = vpack.c.b16 %v3177, %v3176
  %v3191 = vpack.c.b16 %v3179, %v3178
  %v3192 = vpack.c.b16 %v3181, %v3180
  %v3193 = vpack.c.b16 %v3183, %v3182
  %v3194 = vpack.c.b16 %v3185, %v3184
  %v3195 = vpack.c.b16 %v3187, %v3186
  %3204 = vmatprep.subr.bf16.mxu0 0
  %3205 = vmatpush1.bf16.msra.mxu0 %v3188
  %3206 = vmatprep.subr.bf16.mxu0 0
  %3207 = vmatpush1.bf16.msra.mxu0 %v3189
  %3208 = vmatprep.subr.bf16.mxu0 0
  %3209 = vmatpush1.bf16.msra.mxu0 %v3190
  %3210 = vmatprep.subr.bf16.mxu0 0
  %3211 = vmatpush1.bf16.msra.mxu0 %v3191
  %3212 = vmatprep.subr.bf16.mxu0 0
  %3213 = vmatpush1.bf16.msra.mxu0 %v3192
  %3214 = vmatprep.subr.bf16.mxu0 0
  %3215 = vmatpush1.bf16.msra.mxu0 %v3193
  %3216 = vmatprep.subr.bf16.mxu0 0
  %3217 = vmatpush1.bf16.msra.mxu0 %v3194
  %3218 = vmatprep.subr.bf16.mxu0 0
  %3219 = vmatpush1.bf16.msra.mxu0 %v3195
  %3220 = vmatprep.subr.bf16.mxu0 0
  %3221 = vmatpush1.bf16.msra.mxu0 0
  %3222 = vmatprep.subr.bf16.mxu0 0
  %3223 = vmatpush1.bf16.msra.mxu0 0
  %3224 = vmatprep.subr.bf16.mxu0 0
  %3225 = vmatpush1.bf16.msra.mxu0 0
  %3226 = vmatprep.subr.bf16.mxu0 0
  %3227 = vmatpush1.bf16.msra.mxu0 0
  %3228 = vmatprep.subr.bf16.mxu0 0
  %3229 = vmatpush1.bf16.msra.mxu0 0
  %3230 = vmatprep.subr.bf16.mxu0 0
  %3231 = vmatpush1.bf16.msra.mxu0 0
  %3232 = vmatprep.subr.bf16.mxu0 0
  %3233 = vmatpush1.bf16.msra.mxu0 0
  %3234 = vmatprep.subr.bf16.mxu0 0
  %3235 = vmatpush1.bf16.msra.mxu0 0
  %3236 = vmatprep.mubr.bf16.mxu0 0
  %3237 = vmatmul.mubr.bf16.gmra.mrb[0].mxu0 %v3153
  %v3238 = vpop.f32.mrb[0].mxu0
  %v3239 = vadd.f32 0.0, %v3238
  %v3240 = vpop.f32.mrb[0].mxu0
  %v3241 = vpop.f32.mrb[0].mxu0
  %v3242 = vadd.f32 0.0, %v3241
  %v3243 = vpop.f32.mrb[0].mxu0
  %3244 = vmatprep.mubr.bf16.mxu0 0
  %3245 = vmatmul.mubr.bf16.gmra.mrb[0].mxu0 %v3154
  %v3246 = vpop.f32.mrb[0].mxu0
  %v3247 = vadd.f32 0.0, %v3246
  %v3248 = vpop.f32.mrb[0].mxu0
  %v3249 = vpop.f32.mrb[0].mxu0
  %v3250 = vadd.f32 0.0, %v3249
  %v3251 = vpop.f32.mrb[0].mxu0
  %3252 = vmatprep.mubr.bf16.mxu0 0
  %3253 = vmatmul.mubr.bf16.gmra.mrb[0].mxu0 %v3155
  %v3254 = vpop.f32.mrb[0].mxu0
  %v3255 = vadd.f32 0.0, %v3254
  %v3256 = vpop.f32.mrb[0].mxu0
  %v3257 = vpop.f32.mrb[0].mxu0
  %v3258 = vadd.f32 0.0, %v3257
  %v3259 = vpop.f32.mrb[0].mxu0
  %3260 = vdwg.mxu0
  %v3261 = vadd.f32 %v3131, %v3239
  %v3262 = vadd.f32 %v3134, %v3242
  %v3263 = vadd.f32 %v3139, %v3247
  %v3264 = vadd.f32 %v3142, %v3250
  %v3265 = vadd.f32 %v3147, %v3255
  %v3266 = vadd.f32 %v3150, %v3258
  %v3267 = vlaneseq
  %v3268 = vshrl.u32 %v3267, 7
  %v3269 = vsub.s32 0, %v3268
  %v3270 = vrot.slane %v2717, %v3269
  %v3271 = vadd.f32 %v3261, %v3270
  %v3272 = vadd.f32 %v3262, %v3270
  %v3273 = vadd.f32 %v3263, %v3270
  %v3274 = vadd.f32 %v3264, %v3270
  %v3275 = vadd.f32 %v3265, %v3270
  %v3276 = vadd.f32 %v3266, %v3270
  %v3277 = vmax.f32 %v3271, 0.0
  %v3278 = vmax.f32 %v3272, 0.0
  %v3279 = vmax.f32 %v3273, 0.0
  %v3280 = vmax.f32 %v3274, 0.0
  %v3281 = vmax.f32 %v3275, 0.0
  %v3282 = vmax.f32 %v3276, 0.0
  %v3283 = vpack.c.bf16 %v3278, %v3277
  %v3284 = vpack.c.bf16 %v3280, %v3279
  %v3285 = vpack.c.bf16 %v3282, %v3281
  %v3286 = vlaneseq
  %v3287 = vshrl.u32 %v3286, 7
  %v3288 = vsub.s32 1, %v3287
  %v3289 = vrot.slane %v2717, %v3288
  %v3306 = vunpack.c.l.b16 %v2652
  %v3307 = vunpack.c.l.b16 %v2653
  %v3308 = vunpack.c.l.b16 %v2654
  %v3309 = vunpack.c.l.b16 %v2655
  %v3310 = vunpack.c.l.b16 %v2656
  %v3311 = vunpack.c.l.b16 %v2657
  %v3312 = vunpack.c.l.b16 %v2658
  %v3313 = vunpack.c.l.b16 %v2659
  %v3314 = vunpack.c.l.b16 %v2660
  %v3315 = vunpack.c.l.b16 %v2661
  %v3316 = vunpack.c.l.b16 %v2662
  %v3317 = vunpack.c.l.b16 %v2663
  %v3318 = vunpack.c.l.b16 %v2664
  %v3319 = vunpack.c.l.b16 %v2665
  %v3320 = vunpack.c.l.b16 %v2666
  %v3321 = vunpack.c.l.b16 %v2667
  %v3322 = vpack.c.b16 %v3307, %v3306
  %v3323 = vpack.c.b16 %v3309, %v3308
  %v3324 = vpack.c.b16 %v3311, %v3310
  %v3325 = vpack.c.b16 %v3313, %v3312
  %v3326 = vpack.c.b16 %v3315, %v3314
  %v3327 = vpack.c.b16 %v3317, %v3316
  %v3328 = vpack.c.b16 %v3319, %v3318
  %v3329 = vpack.c.b16 %v3321, %v3320
  %3338 = vmatprep.subr.bf16.mxu0 0
  %3339 = vmatpush1.bf16.msra.mxu0 %v3322
  %3340 = vmatprep.subr.bf16.mxu0 0
  %3341 = vmatpush1.bf16.msra.mxu0 %v3323
  %3342 = vmatprep.subr.bf16.mxu0 0
  %3343 = vmatpush1.bf16.msra.mxu0 %v3324
  %3344 = vmatprep.subr.bf16.mxu0 0
  %3345 = vmatpush1.bf16.msra.mxu0 %v3325
  %3346 = vmatprep.subr.bf16.mxu0 0
  %3347 = vmatpush1.bf16.msra.mxu0 %v3326
  %3348 = vmatprep.subr.bf16.mxu0 0
  %3349 = vmatpush1.bf16.msra.mxu0 %v3327
  %3350 = vmatprep.subr.bf16.mxu0 0
  %3351 = vmatpush1.bf16.msra.mxu0 %v3328
  %3352 = vmatprep.subr.bf16.mxu0 0
  %3353 = vmatpush1.bf16.msra.mxu0 %v3329
  %3354 = vmatprep.subr.bf16.mxu0 0
  %3355 = vmatpush1.bf16.msra.mxu0 0
  %3356 = vmatprep.subr.bf16.mxu0 0
  %3357 = vmatpush1.bf16.msra.mxu0 0
  %3358 = vmatprep.subr.bf16.mxu0 0
  %3359 = vmatpush1.bf16.msra.mxu0 0
  %3360 = vmatprep.subr.bf16.mxu0 0
  %3361 = vmatpush1.bf16.msra.mxu0 0
  %3362 = vmatprep.subr.bf16.mxu0 0
  %3363 = vmatpush1.bf16.msra.mxu0 0
  %3364 = vmatprep.subr.bf16.mxu0 0
  %3365 = vmatpush1.bf16.msra.mxu0 0
  %3366 = vmatprep.subr.bf16.mxu0 0
  %3367 = vmatpush1.bf16.msra.mxu0 0
  %3368 = vmatprep.subr.bf16.mxu0 0
  %3369 = vmatpush1.bf16.msra.mxu0 0
  %3370 = vmatprep.mubr.bf16.mxu0 0
  %3371 = vmatmul.mubr.bf16.gmra.mrb[0].mxu0 %v3283
  %v3372 = vpop.f32.mrb[0].mxu0
  %v3373 = vadd.f32 %v3289, %v3372
  %v3374 = vpop.f32.mrb[0].mxu0
  %v3375 = vpop.f32.mrb[0].mxu0
  %v3376 = vadd.f32 %v3289, %v3375
  %v3377 = vpop.f32.mrb[0].mxu0
  %3378 = vmatprep.mubr.bf16.mxu0 0
  %3379 = vmatmul.mubr.bf16.gmra.mrb[0].mxu0 %v3284
  %v3380 = vpop.f32.mrb[0].mxu0
  %v3381 = vadd.f32 %v3289, %v3380
  %v3382 = vpop.f32.mrb[0].mxu0
  %v3383 = vpop.f32.mrb[0].mxu0
  %v3384 = vadd.f32 %v3289, %v3383
  %v3385 = vpop.f32.mrb[0].mxu0
  %3386 = vmatprep.mubr.bf16.mxu0 0
  %3387 = vmatmul.mubr.bf16.gmra.mrb[0].mxu0 %v3285
  %v3388 = vpop.f32.mrb[0].mxu0
  %v3389 = vadd.f32 %v3289, %v3388
  %v3390 = vpop.f32.mrb[0].mxu0
  %v3391 = vpop.f32.mrb[0].mxu0
  %v3392 = vadd.f32 %v3289, %v3391
  %v3393 = vpop.f32.mrb[0].mxu0
  %3394 = vdwg.mxu0
  %3395 = vadd.xlane.f32.xlu0 %v3373
  %v3396 = vpop.xlane.xlu0 %3395
  %3397 = vadd.xlane.f32.xlu0 %v3376
  %v3398 = vpop.xlane.xlu0 %3397
  %3399 = vadd.xlane.f32.xlu0 %v3381
  %v3400 = vpop.xlane.xlu0 %3399
  %3401 = vadd.xlane.f32.xlu0 %v3384
  %v3402 = vpop.xlane.xlu0 %3401
  %3403 = vadd.xlane.f32.xlu0 %v3389
  %v3404 = vpop.xlane.xlu0 %3403
  %3405 = vadd.xlane.f32.xlu0 %v3392
  %v3406 = vpop.xlane.xlu0 %3405
  %v3407 = vmul.f32 %v3396, 0.03125
  %v3408 = vmul.f32 %v3398, 0.03125
  %v3409 = vmul.f32 %v3400, 0.03125
  %v3410 = vmul.f32 %v3402, 0.03125
  %v3411 = vmul.f32 %v3404, 0.03125
  %v3412 = vmul.f32 %v3406, 0.03125
  %v3413 = vsub.f32 %v3373, %v3407
  %v3414 = vsub.f32 %v3376, %v3408
  %v3415 = vsub.f32 %v3381, %v3409
  %v3416 = vsub.f32 %v3384, %v3410
  %v3417 = vsub.f32 %v3389, %v3411
  %v3418 = vsub.f32 %v3392, %v3412
  %v3419 = vmul.f32 %v3413, %v52
  %v3420 = vmul.f32 %v3414, %v52
  %v3421 = vmul.f32 %v3415, %v52
  %v3422 = vmul.f32 %v3416, %v52
  %v3423 = vmul.f32 %v3417, %v52
  %v3424 = vmul.f32 %v3418, %v52
  %v3425 = vmul.f32 %v3419, %v3419
  %v3426 = vmul.f32 %v3420, %v3420
  %v3427 = vmul.f32 %v3421, %v3421
  %v3428 = vmul.f32 %v3422, %v3422
  %v3429 = vmul.f32 %v3423, %v3423
  %v3430 = vmul.f32 %v3424, %v3424
  %3431 = vadd.xlane.f32.xlu0 %v3425
  %v3432 = vpop.xlane.xlu0 %3431
  %3433 = vadd.xlane.f32.xlu0 %v3426
  %v3434 = vpop.xlane.xlu0 %3433
  %3435 = vadd.xlane.f32.xlu0 %v3427
  %v3436 = vpop.xlane.xlu0 %3435
  %3437 = vadd.xlane.f32.xlu0 %v3428
  %v3438 = vpop.xlane.xlu0 %3437
  %3439 = vadd.xlane.f32.xlu0 %v3429
  %v3440 = vpop.xlane.xlu0 %3439
  %3441 = vadd.xlane.f32.xlu0 %v3430
  %v3442 = vpop.xlane.xlu0 %3441
  %v3443 = vmul.f32 %v3432, 0.03125
  %v3444 = vmul.f32 %v3434, 0.03125
  %v3445 = vmul.f32 %v3436, 0.03125
  %v3446 = vmul.f32 %v3438, 0.03125
  %v3447 = vmul.f32 %v3440, 0.03125
  %v3448 = vmul.f32 %v3442, 0.03125
  %v3449 = vadd.f32 %v3443, 1e-05
  %v3450 = vadd.f32 %v3444, 1e-05
  %v3451 = vadd.f32 %v3445, 1e-05
  %v3452 = vadd.f32 %v3446, 1e-05
  %v3453 = vadd.f32 %v3447, 1e-05
  %v3454 = vadd.f32 %v3448, 1e-05
  %v3455 = vrsqrt.pop %v3449
  %v3456 = vrsqrt.pop %v3450
  %v3457 = vrsqrt.pop %v3451
  %v3458 = vrsqrt.pop %v3452
  %v3459 = vrsqrt.pop %v3453
  %v3460 = vrsqrt.pop %v3454
  %v3461 = vmul.f32 %v3419, %v3455
  %v3462 = vmul.f32 %v3420, %v3456
  %v3463 = vmul.f32 %v3421, %v3457
  %v3464 = vmul.f32 %v3422, %v3458
  %v3465 = vmul.f32 %v3423, %v3459
  %v3466 = vmul.f32 %v3424, %v3460
  %v3467 = vlaneseq
  %v3468 = vshrl.u32 %v3467, 7
  %v3469 = vsub.s32 2, %v3468
  %v3470 = vrot.slane %v2717, %v3469
  %v3471 = vmul.f32 %v3461, %v3470
  %v3472 = vmul.f32 %v3462, %v3470
  %v3473 = vmul.f32 %v3463, %v3470
  %v3474 = vmul.f32 %v3464, %v3470
  %v3475 = vmul.f32 %v3465, %v3470
  %v3476 = vmul.f32 %v3466, %v3470
  %v3477 = vlaneseq
  %v3478 = vshrl.u32 %v3477, 7
  %v3479 = vsub.s32 3, %v3478
  %v3480 = vrot.slane %v2717, %v3479
  %v3481 = vadd.f32 %v3471, %v3480
  %v3482 = vadd.f32 %v3472, %v3480
  %v3483 = vadd.f32 %v3473, %v3480
  %v3484 = vadd.f32 %v3474, %v3480
  %v3485 = vadd.f32 %v3475, %v3480
  %v3486 = vadd.f32 %v3476, %v3480
  %v3487 = vmul.f32 %v3481, %v979
  %v3488 = vmul.f32 %v3482, %v980
  %v3489 = vmul.f32 %v3483, %v981
  %v3490 = vmul.f32 %v3484, %v982
  %v3491 = vmul.f32 %v3485, %v983
  %v3492 = vmul.f32 %v3486, %v984
  %v3493 = vadd.f32 %v2722, %v3487
  %v3494 = vadd.f32 %v2723, %v3488
  %v3495 = vadd.f32 %v2724, %v3489
  %v3496 = vadd.f32 %v2725, %v3490
  %v3497 = vadd.f32 %v2726, %v3491
  %v3498 = vadd.f32 %v2727, %v3492
  %3499 = vst [vmem:[%s15] sm:$0xff] %v3493
  %3500 = vst [vmem:[%s15 + $0x8] sm:$0xff] %v3494
  %3501 = vst [vmem:[%s15 + $0x10] sm:$0xff] %v3495
  %3502 = vst [vmem:[%s15 + $0x18] sm:$0xff] %v3496
  %3503 = vst [vmem:[%s15 + $0x20] sm:$0xff] %v3497
  %3504 = vst [vmem:[%s15 + $0x28] sm:$0xff] %v3498
  %v3505 = vpack.c.bf16 %v3494, %v3493
  %v3506 = vpack.c.bf16 %v3496, %v3495
  %v3507 = vpack.c.bf16 %v3498, %v3497
  %v3509 = vsel %vm1006, %v2821, 0
  %v3512 = vsel %vm1006, %v2822, 0
  %3514 = vmatprep.subr.bf16.mxu0 0
  %3515 = vmatpush1.bf16.msra.mxu0 %v3505
  %3516 = vmatprep.subr.bf16.mxu0 0
  %3517 = vmatpush1.bf16.msra.mxu0 %v3506
  %3518 = vmatprep.subr.bf16.mxu0 0
  %3519 = vmatpush1.bf16.msra.mxu0 %v3507
  %3520 = vmatprep.subr.bf16.mxu0 0
  %3521 = vmatpush1.bf16.msra.mxu0 0
  %3522 = vmatprep.subr.bf16.mxu0 0
  %3523 = vmatpush1.bf16.msra.mxu0 0
  %3524 = vmatprep.subr.bf16.mxu0 0
  %3525 = vmatpush1.bf16.msra.mxu0 0
  %3526 = vmatprep.subr.bf16.mxu0 0
  %3527 = vmatpush1.bf16.msra.mxu0 0
  %3528 = vmatprep.subr.bf16.mxu0 0
  %3529 = vmatpush1.bf16.msra.mxu0 0
  %3530 = vmatprep.subr.bf16.mxu0 0
  %3531 = vmatpush1.bf16.msra.mxu0 0
  %3532 = vmatprep.subr.bf16.mxu0 0
  %3533 = vmatpush1.bf16.msra.mxu0 0
  %3534 = vmatprep.subr.bf16.mxu0 0
  %3535 = vmatpush1.bf16.msra.mxu0 0
  %3536 = vmatprep.subr.bf16.mxu0 0
  %3537 = vmatpush1.bf16.msra.mxu0 0
  %3538 = vmatprep.subr.bf16.mxu0 0
  %3539 = vmatpush1.bf16.msra.mxu0 0
  %3540 = vmatprep.subr.bf16.mxu0 0
  %3541 = vmatpush1.bf16.msra.mxu0 0
  %3542 = vmatprep.subr.bf16.mxu0 0
  %3543 = vmatpush1.bf16.msra.mxu0 0
  %3544 = vmatprep.subr.bf16.mxu0 0
  %3545 = vmatpush1.bf16.msra.mxu0 0
  %3546 = vmatprep.mubr.bf16.mxu0 0
  %3547 = vmatmul.mubr.bf16.gmra.mrb[0].mxu0 %v3509
  %v3548 = vpop.f32.mrb[0].mxu0
  %v3549 = vadd.f32 0.0, %v3548
  %v3550 = vpop.f32.mrb[0].mxu0
  %v3551 = vpop.f32.mrb[0].mxu0
  %v3552 = vadd.f32 0.0, %v3551
  %v3553 = vpop.f32.mrb[0].mxu0
  %3554 = vmatprep.mubr.bf16.mxu0 0
  %3555 = vmatmul.mubr.bf16.gmra.mrb[0].mxu0 %v3512
  %v3556 = vpop.f32.mrb[0].mxu0
  %v3557 = vadd.f32 0.0, %v3556
  %v3558 = vpop.f32.mrb[0].mxu0
  %v3559 = vpop.f32.mrb[0].mxu0
  %v3560 = vadd.f32 0.0, %v3559
  %v3561 = vpop.f32.mrb[0].mxu0
  %3562 = vdwg.mxu0
  %v3563 = vpack.c.bf16 %v3552, %v3549
  %v3564 = vpack.c.bf16 %v3560, %v3557
  %v3581 = vunpack.c.l.b16 %v2684
  %v3582 = vunpack.c.l.b16 %v2685
  %v3583 = vunpack.c.l.b16 %v2686
  %v3584 = vunpack.c.l.b16 %v2687
  %v3585 = vunpack.c.l.b16 %v2688
  %v3586 = vunpack.c.l.b16 %v2689
  %v3587 = vunpack.c.l.b16 %v2690
  %v3588 = vunpack.c.l.b16 %v2691
  %v3589 = vunpack.c.l.b16 %v2692
  %v3590 = vunpack.c.l.b16 %v2693
  %v3591 = vunpack.c.l.b16 %v2694
  %v3592 = vunpack.c.l.b16 %v2695
  %v3593 = vunpack.c.l.b16 %v2696
  %v3594 = vunpack.c.l.b16 %v2697
  %v3595 = vunpack.c.l.b16 %v2698
  %v3596 = vunpack.c.l.b16 %v2699
  %v3597 = vpack.c.b16 %v3582, %v3581
  %v3598 = vpack.c.b16 %v3584, %v3583
  %v3599 = vpack.c.b16 %v3586, %v3585
  %v3600 = vpack.c.b16 %v3588, %v3587
  %v3601 = vpack.c.b16 %v3590, %v3589
  %v3602 = vpack.c.b16 %v3592, %v3591
  %v3603 = vpack.c.b16 %v3594, %v3593
  %v3604 = vpack.c.b16 %v3596, %v3595
  %3613 = vmatprep.subr.bf16.mxu0 0
  %3614 = vmatpush1.bf16.msra.mxu0 %v3597
  %3615 = vmatprep.subr.bf16.mxu0 0
  %3616 = vmatpush1.bf16.msra.mxu0 %v3598
  %3617 = vmatprep.subr.bf16.mxu0 0
  %3618 = vmatpush1.bf16.msra.mxu0 %v3599
  %3619 = vmatprep.subr.bf16.mxu0 0
  %3620 = vmatpush1.bf16.msra.mxu0 %v3600
  %3621 = vmatprep.subr.bf16.mxu0 0
  %3622 = vmatpush1.bf16.msra.mxu0 %v3601
  %3623 = vmatprep.subr.bf16.mxu0 0
  %3624 = vmatpush1.bf16.msra.mxu0 %v3602
  %3625 = vmatprep.subr.bf16.mxu0 0
  %3626 = vmatpush1.bf16.msra.mxu0 %v3603
  %3627 = vmatprep.subr.bf16.mxu0 0
  %3628 = vmatpush1.bf16.msra.mxu0 %v3604
  %3629 = vmatprep.subr.bf16.mxu0 0
  %3630 = vmatpush1.bf16.msra.mxu0 0
  %3631 = vmatprep.subr.bf16.mxu0 0
  %3632 = vmatpush1.bf16.msra.mxu0 0
  %3633 = vmatprep.subr.bf16.mxu0 0
  %3634 = vmatpush1.bf16.msra.mxu0 0
  %3635 = vmatprep.subr.bf16.mxu0 0
  %3636 = vmatpush1.bf16.msra.mxu0 0
  %3637 = vmatprep.subr.bf16.mxu0 0
  %3638 = vmatpush1.bf16.msra.mxu0 0
  %3639 = vmatprep.subr.bf16.mxu0 0
  %3640 = vmatpush1.bf16.msra.mxu0 0
  %3641 = vmatprep.subr.bf16.mxu0 0
  %3642 = vmatpush1.bf16.msra.mxu0 0
  %3643 = vmatprep.subr.bf16.mxu0 0
  %3644 = vmatpush1.bf16.msra.mxu0 0
  %3645 = vmatprep.mubr.bf16.mxu0 0
  %3646 = vmatmul.mubr.bf16.gmra.mrb[0].mxu0 %v3563
  %v3647 = vpop.f32.mrb[0].mxu0
  %v3648 = vadd.f32 0.0, %v3647
  %v3649 = vpop.f32.mrb[0].mxu0
  %v3650 = vpop.f32.mrb[0].mxu0
  %v3651 = vadd.f32 0.0, %v3650
  %v3652 = vpop.f32.mrb[0].mxu0
  %3653 = vmatprep.mubr.bf16.mxu0 0
  %3654 = vmatmul.mubr.bf16.gmra.mrb[0].mxu0 %v3564
  %v3655 = vpop.f32.mrb[0].mxu0
  %v3656 = vadd.f32 0.0, %v3655
  %v3657 = vpop.f32.mrb[0].mxu0
  %v3658 = vpop.f32.mrb[0].mxu0
  %v3659 = vadd.f32 0.0, %v3658
  %v3660 = vpop.f32.mrb[0].mxu0
  %3661 = vdwg.mxu0
  %v3678 = vunpack.c.l.b16 %v2668
  %v3679 = vunpack.c.l.b16 %v2669
  %v3680 = vunpack.c.l.b16 %v2670
  %v3681 = vunpack.c.l.b16 %v2671
  %v3682 = vunpack.c.l.b16 %v2672
  %v3683 = vunpack.c.l.b16 %v2673
  %v3684 = vunpack.c.l.b16 %v2674
  %v3685 = vunpack.c.l.b16 %v2675
  %v3686 = vunpack.c.l.b16 %v2676
  %v3687 = vunpack.c.l.b16 %v2677
  %v3688 = vunpack.c.l.b16 %v2678
  %v3689 = vunpack.c.l.b16 %v2679
  %v3690 = vunpack.c.l.b16 %v2680
  %v3691 = vunpack.c.l.b16 %v2681
  %v3692 = vunpack.c.l.b16 %v2682
  %v3693 = vunpack.c.l.b16 %v2683
  %v3694 = vpack.c.b16 %v3679, %v3678
  %v3695 = vpack.c.b16 %v3681, %v3680
  %v3696 = vpack.c.b16 %v3683, %v3682
  %v3697 = vpack.c.b16 %v3685, %v3684
  %v3698 = vpack.c.b16 %v3687, %v3686
  %v3699 = vpack.c.b16 %v3689, %v3688
  %v3700 = vpack.c.b16 %v3691, %v3690
  %v3701 = vpack.c.b16 %v3693, %v3692
  %3710 = vmatprep.subr.bf16.mxu0 0
  %3711 = vmatpush1.bf16.msra.mxu0 %v3694
  %3712 = vmatprep.subr.bf16.mxu0 0
  %3713 = vmatpush1.bf16.msra.mxu0 %v3695
  %3714 = vmatprep.subr.bf16.mxu0 0
  %3715 = vmatpush1.bf16.msra.mxu0 %v3696
  %3716 = vmatprep.subr.bf16.mxu0 0
  %3717 = vmatpush1.bf16.msra.mxu0 %v3697
  %3718 = vmatprep.subr.bf16.mxu0 0
  %3719 = vmatpush1.bf16.msra.mxu0 %v3698
  %3720 = vmatprep.subr.bf16.mxu0 0
  %3721 = vmatpush1.bf16.msra.mxu0 %v3699
  %3722 = vmatprep.subr.bf16.mxu0 0
  %3723 = vmatpush1.bf16.msra.mxu0 %v3700
  %3724 = vmatprep.subr.bf16.mxu0 0
  %3725 = vmatpush1.bf16.msra.mxu0 %v3701
  %3726 = vmatprep.subr.bf16.mxu0 0
  %3727 = vmatpush1.bf16.msra.mxu0 0
  %3728 = vmatprep.subr.bf16.mxu0 0
  %3729 = vmatpush1.bf16.msra.mxu0 0
  %3730 = vmatprep.subr.bf16.mxu0 0
  %3731 = vmatpush1.bf16.msra.mxu0 0
  %3732 = vmatprep.subr.bf16.mxu0 0
  %3733 = vmatpush1.bf16.msra.mxu0 0
  %3734 = vmatprep.subr.bf16.mxu0 0
  %3735 = vmatpush1.bf16.msra.mxu0 0
  %3736 = vmatprep.subr.bf16.mxu0 0
  %3737 = vmatpush1.bf16.msra.mxu0 0
  %3738 = vmatprep.subr.bf16.mxu0 0
  %3739 = vmatpush1.bf16.msra.mxu0 0
  %3740 = vmatprep.subr.bf16.mxu0 0
  %3741 = vmatpush1.bf16.msra.mxu0 0
  %3742 = vmatprep.mubr.bf16.mxu0 0
  %3743 = vmatmul.mubr.bf16.gmra.mrb[0].mxu0 %v2728
  %v3744 = vpop.f32.mrb[0].mxu0
  %v3745 = vadd.f32 %v3648, %v3744
  %v3746 = vpop.f32.mrb[0].mxu0
  %v3747 = vpop.f32.mrb[0].mxu0
  %v3748 = vadd.f32 %v3651, %v3747
  %v3749 = vpop.f32.mrb[0].mxu0
  %3750 = vmatprep.mubr.bf16.mxu0 0
  %3751 = vmatmul.mubr.bf16.gmra.mrb[0].mxu0 %v2729
  %v3752 = vpop.f32.mrb[0].mxu0
  %v3753 = vadd.f32 %v3656, %v3752
  %v3754 = vpop.f32.mrb[0].mxu0
  %v3755 = vpop.f32.mrb[0].mxu0
  %v3756 = vadd.f32 %v3659, %v3755
  %v3757 = vpop.f32.mrb[0].mxu0
  %3758 = vdwg.mxu0
  %v3759 = vlaneseq
  %v3760 = vshrl.u32 %v3759, 7
  %v3761 = vsub.s32 4, %v3760
  %v3762 = vrot.slane %v2717, %v3761
  %v3763 = vadd.f32 %v3745, %v3762
  %v3764 = vadd.f32 %v3748, %v3762
  %v3765 = vadd.f32 %v3753, %v3762
  %v3766 = vadd.f32 %v3756, %v3762
  %v3767 = vmax.f32 %v3763, 0.0
  %v3768 = vmax.f32 %v3764, 0.0
  %v3769 = vmax.f32 %v3765, 0.0
  %v3770 = vmax.f32 %v3766, 0.0
  %v3771 = vpack.c.bf16 %v3768, %v3767
  %v3772 = vpack.c.bf16 %v3770, %v3769
  %v3773 = vlaneseq
  %v3774 = vshrl.u32 %v3773, 7
  %v3775 = vsub.s32 5, %v3774
  %v3776 = vrot.slane %v2717, %v3775
  %v3793 = vunpack.c.l.b16 %v2700
  %v3794 = vunpack.c.l.b16 %v2701
  %v3795 = vunpack.c.l.b16 %v2702
  %v3796 = vunpack.c.l.b16 %v2703
  %v3797 = vunpack.c.l.b16 %v2704
  %v3798 = vunpack.c.l.b16 %v2705
  %v3799 = vunpack.c.l.b16 %v2706
  %v3800 = vunpack.c.l.b16 %v2707
  %v3801 = vunpack.c.l.b16 %v2708
  %v3802 = vunpack.c.l.b16 %v2709
  %v3803 = vunpack.c.l.b16 %v2710
  %v3804 = vunpack.c.l.b16 %v2711
  %v3805 = vunpack.c.l.b16 %v2712
  %v3806 = vunpack.c.l.b16 %v2713
  %v3807 = vunpack.c.l.b16 %v2714
  %v3808 = vunpack.c.l.b16 %v2715
  %v3809 = vpack.c.b16 %v3794, %v3793
  %v3810 = vpack.c.b16 %v3796, %v3795
  %v3811 = vpack.c.b16 %v3798, %v3797
  %v3812 = vpack.c.b16 %v3800, %v3799
  %v3813 = vpack.c.b16 %v3802, %v3801
  %v3814 = vpack.c.b16 %v3804, %v3803
  %v3815 = vpack.c.b16 %v3806, %v3805
  %v3816 = vpack.c.b16 %v3808, %v3807
  %3825 = vmatprep.subr.bf16.mxu0 0
  %3826 = vmatpush1.bf16.msra.mxu0 %v3809
  %3827 = vmatprep.subr.bf16.mxu0 0
  %3828 = vmatpush1.bf16.msra.mxu0 %v3810
  %3829 = vmatprep.subr.bf16.mxu0 0
  %3830 = vmatpush1.bf16.msra.mxu0 %v3811
  %3831 = vmatprep.subr.bf16.mxu0 0
  %3832 = vmatpush1.bf16.msra.mxu0 %v3812
  %3833 = vmatprep.subr.bf16.mxu0 0
  %3834 = vmatpush1.bf16.msra.mxu0 %v3813
  %3835 = vmatprep.subr.bf16.mxu0 0
  %3836 = vmatpush1.bf16.msra.mxu0 %v3814
  %3837 = vmatprep.subr.bf16.mxu0 0
  %3838 = vmatpush1.bf16.msra.mxu0 %v3815
  %3839 = vmatprep.subr.bf16.mxu0 0
  %3840 = vmatpush1.bf16.msra.mxu0 %v3816
  %3841 = vmatprep.subr.bf16.mxu0 0
  %3842 = vmatpush1.bf16.msra.mxu0 0
  %3843 = vmatprep.subr.bf16.mxu0 0
  %3844 = vmatpush1.bf16.msra.mxu0 0
  %3845 = vmatprep.subr.bf16.mxu0 0
  %3846 = vmatpush1.bf16.msra.mxu0 0
  %3847 = vmatprep.subr.bf16.mxu0 0
  %3848 = vmatpush1.bf16.msra.mxu0 0
  %3849 = vmatprep.subr.bf16.mxu0 0
  %3850 = vmatpush1.bf16.msra.mxu0 0
  %3851 = vmatprep.subr.bf16.mxu0 0
  %3852 = vmatpush1.bf16.msra.mxu0 0
  %3853 = vmatprep.subr.bf16.mxu0 0
  %3854 = vmatpush1.bf16.msra.mxu0 0
  %3855 = vmatprep.subr.bf16.mxu0 0
  %3856 = vmatpush1.bf16.msra.mxu0 0
  %3857 = vmatprep.mubr.bf16.mxu0 0
  %3858 = vmatmul.mubr.bf16.gmra.mrb[0].mxu0 %v3771
  %v3859 = vpop.f32.mrb[0].mxu0
  %v3860 = vadd.f32 %v3776, %v3859
  %v3861 = vpop.f32.mrb[0].mxu0
  %v3862 = vpop.f32.mrb[0].mxu0
  %v3863 = vadd.f32 %v3776, %v3862
  %v3864 = vpop.f32.mrb[0].mxu0
  %3865 = vmatprep.mubr.bf16.mxu0 0
  %3866 = vmatmul.mubr.bf16.gmra.mrb[0].mxu0 %v3772
  %v3867 = vpop.f32.mrb[0].mxu0
  %v3868 = vadd.f32 %v3776, %v3867
  %v3869 = vpop.f32.mrb[0].mxu0
  %v3870 = vpop.f32.mrb[0].mxu0
  %v3871 = vadd.f32 %v3776, %v3870
  %v3872 = vpop.f32.mrb[0].mxu0
  %3873 = vdwg.mxu0
  %3874 = vadd.xlane.f32.xlu0 %v3860
  %v3875 = vpop.xlane.xlu0 %3874
  %3876 = vadd.xlane.f32.xlu0 %v3863
  %v3877 = vpop.xlane.xlu0 %3876
  %3878 = vadd.xlane.f32.xlu0 %v3868
  %v3879 = vpop.xlane.xlu0 %3878
  %3880 = vadd.xlane.f32.xlu0 %v3871
  %v3881 = vpop.xlane.xlu0 %3880
  %v3882 = vmul.f32 %v3875, 0.03125
  %v3883 = vmul.f32 %v3877, 0.03125
  %v3884 = vmul.f32 %v3879, 0.03125
  %v3885 = vmul.f32 %v3881, 0.03125
  %v3886 = vsub.f32 %v3860, %v3882
  %v3887 = vsub.f32 %v3863, %v3883
  %v3888 = vsub.f32 %v3868, %v3884
  %v3889 = vsub.f32 %v3871, %v3885
  %v3890 = vmul.f32 %v3886, %v52
  %v3891 = vmul.f32 %v3887, %v52
  %v3892 = vmul.f32 %v3888, %v52
  %v3893 = vmul.f32 %v3889, %v52
  %v3894 = vmul.f32 %v3890, %v3890
  %v3895 = vmul.f32 %v3891, %v3891
  %v3896 = vmul.f32 %v3892, %v3892
  %v3897 = vmul.f32 %v3893, %v3893
  %3898 = vadd.xlane.f32.xlu0 %v3894
  %v3899 = vpop.xlane.xlu0 %3898
  %3900 = vadd.xlane.f32.xlu0 %v3895
  %v3901 = vpop.xlane.xlu0 %3900
  %3902 = vadd.xlane.f32.xlu0 %v3896
  %v3903 = vpop.xlane.xlu0 %3902
  %3904 = vadd.xlane.f32.xlu0 %v3897
  %v3905 = vpop.xlane.xlu0 %3904
  %v3906 = vmul.f32 %v3899, 0.03125
  %v3907 = vmul.f32 %v3901, 0.03125
  %v3908 = vmul.f32 %v3903, 0.03125
  %v3909 = vmul.f32 %v3905, 0.03125
  %v3910 = vadd.f32 %v3906, 1e-05
  %v3911 = vadd.f32 %v3907, 1e-05
  %v3912 = vadd.f32 %v3908, 1e-05
  %v3913 = vadd.f32 %v3909, 1e-05
  %v3914 = vrsqrt.pop %v3910
  %v3915 = vrsqrt.pop %v3911
  %v3916 = vrsqrt.pop %v3912
  %v3917 = vrsqrt.pop %v3913
  %v3918 = vmul.f32 %v3890, %v3914
  %v3919 = vmul.f32 %v3891, %v3915
  %v3920 = vmul.f32 %v3892, %v3916
  %v3921 = vmul.f32 %v3893, %v3917
  %v3922 = vlaneseq
  %v3923 = vshrl.u32 %v3922, 7
  %v3924 = vsub.s32 6, %v3923
  %v3925 = vrot.slane %v2717, %v3924
  %v3926 = vmul.f32 %v3918, %v3925
  %v3927 = vmul.f32 %v3919, %v3925
  %v3928 = vmul.f32 %v3920, %v3925
  %v3929 = vmul.f32 %v3921, %v3925
  %v3930 = vlaneseq
  %v3931 = vshrl.u32 %v3930, 7
  %v3932 = vsub.s32 7, %v3931
  %v3933 = vrot.slane %v2717, %v3932
  %v3934 = vadd.f32 %v3926, %v3933
  %v3935 = vadd.f32 %v3927, %v3933
  %v3936 = vadd.f32 %v3928, %v3933
  %v3937 = vadd.f32 %v3929, %v3933
  %v3938 = vmul.f32 %v3934, %v1445
  %v3939 = vmul.f32 %v3935, %v1446
  %v3940 = vmul.f32 %v3936, %v1447
  %v3941 = vmul.f32 %v3937, %v1448
  %v3942 = vadd.f32 %v2718, %v3938
  %v3943 = vadd.f32 %v2719, %v3939
  %v3944 = vadd.f32 %v2720, %v3940
  %v3945 = vadd.f32 %v2721, %v3941
  %3946 = vst [vmem:[%s14] sm:$0xff] %v3942
  %3947 = vst [vmem:[%s14 + $0x8] sm:$0xff] %v3943
  %3948 = vst [vmem:[%s14 + $0x10] sm:$0xff] %v3944
  %3949 = vst [vmem:[%s14 + $0x18] sm:$0xff] %v3945
  %s3950 = scalar_lea.vmem %s9, 448
  %v3951 = vld [vmem:[%s3950] sm:$0xf]
  %v3952 = vld [vmem:[%s3950 + $0x4] sm:$0xf]
  %v3953 = vld [vmem:[%s3950 + $0x8] sm:$0xf]
  %v3954 = vld [vmem:[%s3950 + $0xc] sm:$0xf]
  %v3955 = vld [vmem:[%s3950 + $0x10] sm:$0xf]
  %v3956 = vld [vmem:[%s3950 + $0x14] sm:$0xf]
  %v3957 = vld [vmem:[%s3950 + $0x18] sm:$0xf]
  %v3958 = vld [vmem:[%s3950 + $0x1c] sm:$0xf]
  %v3959 = vld [vmem:[%s3950 + $0x20] sm:$0xf]
  %v3960 = vld [vmem:[%s3950 + $0x24] sm:$0xf]
  %v3961 = vld [vmem:[%s3950 + $0x28] sm:$0xf]
  %v3962 = vld [vmem:[%s3950 + $0x2c] sm:$0xf]
  %v3963 = vld [vmem:[%s3950 + $0x30] sm:$0xf]
  %v3964 = vld [vmem:[%s3950 + $0x34] sm:$0xf]
  %v3965 = vld [vmem:[%s3950 + $0x38] sm:$0xf]
  %v3966 = vld [vmem:[%s3950 + $0x3c] sm:$0xf]
  %v3967 = vld [vmem:[%s3950 + $0x40] sm:$0xf]
  %v3968 = vld [vmem:[%s3950 + $0x44] sm:$0xf]
  %v3969 = vld [vmem:[%s3950 + $0x48] sm:$0xf]
  %v3970 = vld [vmem:[%s3950 + $0x4c] sm:$0xf]
  %v3971 = vld [vmem:[%s3950 + $0x50] sm:$0xf]
  %v3972 = vld [vmem:[%s3950 + $0x54] sm:$0xf]
  %v3973 = vld [vmem:[%s3950 + $0x58] sm:$0xf]
  %v3974 = vld [vmem:[%s3950 + $0x5c] sm:$0xf]
  %v3975 = vld [vmem:[%s3950 + $0x60] sm:$0xf]
  %v3976 = vld [vmem:[%s3950 + $0x64] sm:$0xf]
  %v3977 = vld [vmem:[%s3950 + $0x68] sm:$0xf]
  %v3978 = vld [vmem:[%s3950 + $0x6c] sm:$0xf]
  %v3979 = vld [vmem:[%s3950 + $0x70] sm:$0xf]
  %v3980 = vld [vmem:[%s3950 + $0x74] sm:$0xf]
  %v3981 = vld [vmem:[%s3950 + $0x78] sm:$0xf]
  %v3982 = vld [vmem:[%s3950 + $0x7c] sm:$0xf]
  %v3983 = vld [vmem:[%s3950 + $0x80] sm:$0xf]
  %v3984 = vld [vmem:[%s3950 + $0x84] sm:$0xf]
  %v3985 = vld [vmem:[%s3950 + $0x88] sm:$0xf]
  %v3986 = vld [vmem:[%s3950 + $0x8c] sm:$0xf]
  %v3987 = vld [vmem:[%s3950 + $0x90] sm:$0xf]
  %v3988 = vld [vmem:[%s3950 + $0x94] sm:$0xf]
  %v3989 = vld [vmem:[%s3950 + $0x98] sm:$0xf]
  %v3990 = vld [vmem:[%s3950 + $0x9c] sm:$0xf]
  %v3991 = vld [vmem:[%s3950 + $0xa0] sm:$0xf]
  %v3992 = vld [vmem:[%s3950 + $0xa4] sm:$0xf]
  %v3993 = vld [vmem:[%s3950 + $0xa8] sm:$0xf]
  %v3994 = vld [vmem:[%s3950 + $0xac] sm:$0xf]
  %v3995 = vld [vmem:[%s3950 + $0xb0] sm:$0xf]
  %v3996 = vld [vmem:[%s3950 + $0xb4] sm:$0xf]
  %v3997 = vld [vmem:[%s3950 + $0xb8] sm:$0xf]
  %v3998 = vld [vmem:[%s3950 + $0xbc] sm:$0xf]
  %v3999 = vld [vmem:[%s3950 + $0xc0] sm:$0xf]
  %v4000 = vld [vmem:[%s3950 + $0xc4] sm:$0xf]
  %v4001 = vld [vmem:[%s3950 + $0xc8] sm:$0xf]
  %v4002 = vld [vmem:[%s3950 + $0xcc] sm:$0xf]
  %v4003 = vld [vmem:[%s3950 + $0xd0] sm:$0xf]
  %v4004 = vld [vmem:[%s3950 + $0xd4] sm:$0xf]
  %v4005 = vld [vmem:[%s3950 + $0xd8] sm:$0xf]
  %v4006 = vld [vmem:[%s3950 + $0xdc] sm:$0xf]
  %v4007 = vld [vmem:[%s3950 + $0xe0] sm:$0xf]
  %v4008 = vld [vmem:[%s3950 + $0xe4] sm:$0xf]
  %v4009 = vld [vmem:[%s3950 + $0xe8] sm:$0xf]
  %v4010 = vld [vmem:[%s3950 + $0xec] sm:$0xf]
  %v4011 = vld [vmem:[%s3950 + $0xf0] sm:$0xf]
  %v4012 = vld [vmem:[%s3950 + $0xf4] sm:$0xf]
  %v4013 = vld [vmem:[%s3950 + $0xf8] sm:$0xf]
  %v4014 = vld [vmem:[%s3950 + $0xfc] sm:$0xf]
  %v4015 = vld [vmem:[%s3950 + $0x100] sm:$0xf]
  %v4016 = vld [vmem:[%s3950 + $0x104] sm:$0xf]
  %v4017 = vld [vmem:[%s3950 + $0x108] sm:$0xf]
  %v4018 = vld [vmem:[%s3950 + $0x10c] sm:$0xf]
  %v4019 = vld [vmem:[%s3950 + $0x110] sm:$0xf]
  %v4020 = vld [vmem:[%s3950 + $0x114] sm:$0xf]
  %v4021 = vld [vmem:[%s3950 + $0x118] sm:$0xf]
  %v4022 = vld [vmem:[%s3950 + $0x11c] sm:$0xf]
  %v4023 = vld [vmem:[%s3950 + $0x120] sm:$0xf]
  %v4024 = vld [vmem:[%s3950 + $0x124] sm:$0xf]
  %v4025 = vld [vmem:[%s3950 + $0x128] sm:$0xf]
  %v4026 = vld [vmem:[%s3950 + $0x12c] sm:$0xf]
  %v4027 = vld [vmem:[%s3950 + $0x130] sm:$0xf]
  %v4028 = vld [vmem:[%s3950 + $0x134] sm:$0xf]
  %v4029 = vld [vmem:[%s3950 + $0x138] sm:$0xf]
  %v4030 = vld [vmem:[%s3950 + $0x13c] sm:$0xf]
  %v4031 = vld [vmem:[%s3950 + $0x140] sm:$0xf]
  %v4032 = vld [vmem:[%s3950 + $0x144] sm:$0xf]
  %v4033 = vld [vmem:[%s3950 + $0x148] sm:$0xf]
  %v4034 = vld [vmem:[%s3950 + $0x14c] sm:$0xf]
  %v4035 = vld [vmem:[%s3950 + $0x150] sm:$0xf]
  %v4036 = vld [vmem:[%s3950 + $0x154] sm:$0xf]
  %v4037 = vld [vmem:[%s3950 + $0x158] sm:$0xf]
  %v4038 = vld [vmem:[%s3950 + $0x15c] sm:$0xf]
  %v4039 = vld [vmem:[%s3950 + $0x160] sm:$0xf]
  %v4040 = vld [vmem:[%s3950 + $0x164] sm:$0xf]
  %v4041 = vld [vmem:[%s3950 + $0x168] sm:$0xf]
  %v4042 = vld [vmem:[%s3950 + $0x16c] sm:$0xf]
  %v4043 = vld [vmem:[%s3950 + $0x170] sm:$0xf]
  %v4044 = vld [vmem:[%s3950 + $0x174] sm:$0xf]
  %v4045 = vld [vmem:[%s3950 + $0x178] sm:$0xf]
  %v4046 = vld [vmem:[%s3950 + $0x17c] sm:$0xf]
  %v4047 = vld [vmem:[%s3950 + $0x180] sm:$0xf]
  %v4048 = vld [vmem:[%s3950 + $0x184] sm:$0xf]
  %v4049 = vld [vmem:[%s3950 + $0x188] sm:$0xf]
  %v4050 = vld [vmem:[%s3950 + $0x18c] sm:$0xf]
  %v4051 = vld [vmem:[%s3950 + $0x190] sm:$0xf]
  %v4052 = vld [vmem:[%s3950 + $0x194] sm:$0xf]
  %v4053 = vld [vmem:[%s3950 + $0x198] sm:$0xf]
  %v4054 = vld [vmem:[%s3950 + $0x19c] sm:$0xf]
  %v4055 = vld [vmem:[%s3950 + $0x1a0] sm:$0xf]
  %v4056 = vld [vmem:[%s3950 + $0x1a4] sm:$0xf]
  %v4057 = vld [vmem:[%s3950 + $0x1a8] sm:$0xf]
  %v4058 = vld [vmem:[%s3950 + $0x1ac] sm:$0xf]
  %v4059 = vld [vmem:[%s3950 + $0x1b0] sm:$0xf]
  %v4060 = vld [vmem:[%s3950 + $0x1b4] sm:$0xf]
  %v4061 = vld [vmem:[%s3950 + $0x1b8] sm:$0xf]
  %v4062 = vld [vmem:[%s3950 + $0x1bc] sm:$0xf]
  %s4063 = scalar_lea.vmem %s10, 8
  %v4064 = vld [vmem:[%s4063] sm:$0xff]
  %v4065 = vld [vmem:[%s13] sm:$0xff]
  %v4066 = vld [vmem:[%s13 + $0x8] sm:$0xff]
  %v4067 = vld [vmem:[%s14] sm:$0xff]
  %v4068 = vld [vmem:[%s14 + $0x8] sm:$0xff]
  %v4069 = vld [vmem:[%s14 + $0x10] sm:$0xff]
  %v4070 = vld [vmem:[%s14 + $0x18] sm:$0xff]
  %v4071 = vpack.c.bf16 %v4066, %v4065
  %v4072 = vld [vmem:[%s0] sm:$0xff]
  %v4073 = vld [vmem:[%s0 + $0x8] sm:$0xff]
  %v4074 = vld [vmem:[%s0 + $0x10] sm:$0xff]
  %v4075 = vld [vmem:[%s0 + $0x18] sm:$0xff]
  %4076 = vset.pattern.permute.xlu0 0
  %4077 = vperm.xlu0 %4076, %v4072
  %v4078 = vpop.permute.xlu0 %4077
  %4079 = vset.pattern.permute.xlu0 0
  %4080 = vperm.xlu0 %4079, %v4073
  %v4081 = vpop.permute.xlu0 %4080
  %4082 = vset.pattern.permute.xlu0 0
  %4083 = vperm.xlu0 %4082, %v4074
  %v4084 = vpop.permute.xlu0 %4083
  %4085 = vset.pattern.permute.xlu0 0
  %4086 = vperm.xlu0 %4085, %v4075
  %v4087 = vpop.permute.xlu0 %4086
  %vm4088 = vcmp.eq.s32.totalorder %v4078, %v49
  %vm4089 = vcmp.eq.s32.totalorder %v4081, %v49
  %vm4090 = vcmp.eq.s32.totalorder %v4084, %v49
  %vm4091 = vcmp.eq.s32.totalorder %v4087, %v49
  %v4092 = vsel %vm4088, 1.0, 0.0
  %v4093 = vsel %vm4089, 1.0, 0.0
  %v4094 = vsel %vm4090, 1.0, 0.0
  %v4095 = vsel %vm4091, 1.0, 0.0
  %v4096 = vpack.c.bf16 %v4093, %v4092
  %v4097 = vpack.c.bf16 %v4095, %v4094
  %v4098 = vld [vmem:[%s1] sm:$0xff]
  %v4099 = vld [vmem:[%s1 + $0x8] sm:$0xff]
  %v4100 = vld [vmem:[%s1 + $0x10] sm:$0xff]
  %v4101 = vld [vmem:[%s1 + $0x18] sm:$0xff]
  %4102 = vset.pattern.permute.xlu0 0
  %4103 = vperm.xlu0 %4102, %v4098
  %v4104 = vpop.permute.xlu0 %4103
  %4105 = vset.pattern.permute.xlu0 0
  %4106 = vperm.xlu0 %4105, %v4099
  %v4107 = vpop.permute.xlu0 %4106
  %4108 = vset.pattern.permute.xlu0 0
  %4109 = vperm.xlu0 %4108, %v4100
  %v4110 = vpop.permute.xlu0 %4109
  %4111 = vset.pattern.permute.xlu0 0
  %4112 = vperm.xlu0 %4111, %v4101
  %v4113 = vpop.permute.xlu0 %4112
  %vm4114 = vcmp.eq.s32.totalorder %v4104, %v49
  %vm4115 = vcmp.eq.s32.totalorder %v4107, %v49
  %vm4116 = vcmp.eq.s32.totalorder %v4110, %v49
  %vm4117 = vcmp.eq.s32.totalorder %v4113, %v49
  %v4118 = vsel %vm4114, 1.0, 0.0
  %v4119 = vsel %vm4115, 1.0, 0.0
  %v4120 = vsel %vm4116, 1.0, 0.0
  %v4121 = vsel %vm4117, 1.0, 0.0
  %v4122 = vpack.c.bf16 %v4119, %v4118
  %v4123 = vpack.c.bf16 %v4121, %v4120
  %v4124 = vld [vmem:[%s2] sm:$0x1]
  %v4125 = vlaneseq
  %v4126 = vshrl.u32 %v4125, 7
  %v4127 = vsub.s32 0, %v4126
  %v4128 = vrot.slane %v4124, %v4127
  %vm4129 = vcmp.eq.s32.totalorder %v281, %v4128
  %vm4130 = vcmp.eq.s32.totalorder %v282, %v4128
  %v4131 = vsel %vm4129, 1.0, 0.0
  %v4132 = vsel %vm4130, 1.0, 0.0
  %v4133 = vpack.c.bf16 %v4132, %v4131
  %v4150 = vunpack.c.l.b16 %v3951
  %v4151 = vunpack.c.l.b16 %v3952
  %v4152 = vunpack.c.l.b16 %v3953
  %v4153 = vunpack.c.l.b16 %v3954
  %v4154 = vunpack.c.l.b16 %v3955
  %v4155 = vunpack.c.l.b16 %v3956
  %v4156 = vunpack.c.l.b16 %v3957
  %v4157 = vunpack.c.l.b16 %v3958
  %v4158 = vunpack.c.l.b16 %v3959
  %v4159 = vunpack.c.l.b16 %v3960
  %v4160 = vunpack.c.l.b16 %v3961
  %v4161 = vunpack.c.l.b16 %v3962
  %v4162 = vunpack.c.l.b16 %v3963
  %v4163 = vunpack.c.l.b16 %v3964
  %v4164 = vunpack.c.l.b16 %v3965
  %v4165 = vunpack.c.l.b16 %v3966
  %v4166 = vpack.c.b16 %v4151, %v4150
  %v4167 = vpack.c.b16 %v4153, %v4152
  %v4168 = vpack.c.b16 %v4155, %v4154
  %v4169 = vpack.c.b16 %v4157, %v4156
  %v4170 = vpack.c.b16 %v4159, %v4158
  %v4171 = vpack.c.b16 %v4161, %v4160
  %v4172 = vpack.c.b16 %v4163, %v4162
  %v4173 = vpack.c.b16 %v4165, %v4164
  %4182 = vmatprep.subr.bf16.mxu0 0
  %4183 = vmatpush1.bf16.msra.mxu0 %v4166
  %4184 = vmatprep.subr.bf16.mxu0 0
  %4185 = vmatpush1.bf16.msra.mxu0 %v4167
  %4186 = vmatprep.subr.bf16.mxu0 0
  %4187 = vmatpush1.bf16.msra.mxu0 %v4168
  %4188 = vmatprep.subr.bf16.mxu0 0
  %4189 = vmatpush1.bf16.msra.mxu0 %v4169
  %4190 = vmatprep.subr.bf16.mxu0 0
  %4191 = vmatpush1.bf16.msra.mxu0 %v4170
  %4192 = vmatprep.subr.bf16.mxu0 0
  %4193 = vmatpush1.bf16.msra.mxu0 %v4171
  %4194 = vmatprep.subr.bf16.mxu0 0
  %4195 = vmatpush1.bf16.msra.mxu0 %v4172
  %4196 = vmatprep.subr.bf16.mxu0 0
  %4197 = vmatpush1.bf16.msra.mxu0 %v4173
  %4198 = vmatprep.subr.bf16.mxu0 0
  %4199 = vmatpush1.bf16.msra.mxu0 0
  %4200 = vmatprep.subr.bf16.mxu0 0
  %4201 = vmatpush1.bf16.msra.mxu0 0
  %4202 = vmatprep.subr.bf16.mxu0 0
  %4203 = vmatpush1.bf16.msra.mxu0 0
  %4204 = vmatprep.subr.bf16.mxu0 0
  %4205 = vmatpush1.bf16.msra.mxu0 0
  %4206 = vmatprep.subr.bf16.mxu0 0
  %4207 = vmatpush1.bf16.msra.mxu0 0
  %4208 = vmatprep.subr.bf16.mxu0 0
  %4209 = vmatpush1.bf16.msra.mxu0 0
  %4210 = vmatprep.subr.bf16.mxu0 0
  %4211 = vmatpush1.bf16.msra.mxu0 0
  %4212 = vmatprep.subr.bf16.mxu0 0
  %4213 = vmatpush1.bf16.msra.mxu0 0
  %4214 = vmatprep.mubr.bf16.mxu0 0
  %4215 = vmatmul.mubr.bf16.gmra.mrb[0].mxu0 %v4071
  %v4216 = vpop.f32.mrb[0].mxu0
  %v4217 = vadd.f32 0.0, %v4216
  %v4218 = vpop.f32.mrb[0].mxu0
  %v4219 = vpop.f32.mrb[0].mxu0
  %v4220 = vadd.f32 0.0, %v4219
  %v4221 = vpop.f32.mrb[0].mxu0
  %4222 = vdwg.mxu0
  %v4239 = vunpack.c.l.b16 %v3967
  %v4240 = vunpack.c.l.b16 %v3968
  %v4241 = vunpack.c.l.b16 %v3969
  %v4242 = vunpack.c.l.b16 %v3970
  %v4243 = vunpack.c.l.b16 %v3971
  %v4244 = vunpack.c.l.b16 %v3972
  %v4245 = vunpack.c.l.b16 %v3973
  %v4246 = vunpack.c.l.b16 %v3974
  %v4247 = vunpack.c.l.b16 %v3975
  %v4248 = vunpack.c.l.b16 %v3976
  %v4249 = vunpack.c.l.b16 %v3977
  %v4250 = vunpack.c.l.b16 %v3978
  %v4251 = vunpack.c.l.b16 %v3979
  %v4252 = vunpack.c.l.b16 %v3980
  %v4253 = vunpack.c.l.b16 %v3981
  %v4254 = vunpack.c.l.b16 %v3982
  %v4255 = vpack.c.b16 %v4240, %v4239
  %v4256 = vpack.c.b16 %v4242, %v4241
  %v4257 = vpack.c.b16 %v4244, %v4243
  %v4258 = vpack.c.b16 %v4246, %v4245
  %v4259 = vpack.c.b16 %v4248, %v4247
  %v4260 = vpack.c.b16 %v4250, %v4249
  %v4261 = vpack.c.b16 %v4252, %v4251
  %v4262 = vpack.c.b16 %v4254, %v4253
  %4271 = vmatprep.subr.bf16.mxu0 0
  %4272 = vmatpush1.bf16.msra.mxu0 %v4255
  %4273 = vmatprep.subr.bf16.mxu0 0
  %4274 = vmatpush1.bf16.msra.mxu0 %v4256
  %4275 = vmatprep.subr.bf16.mxu0 0
  %4276 = vmatpush1.bf16.msra.mxu0 %v4257
  %4277 = vmatprep.subr.bf16.mxu0 0
  %4278 = vmatpush1.bf16.msra.mxu0 %v4258
  %4279 = vmatprep.subr.bf16.mxu0 0
  %4280 = vmatpush1.bf16.msra.mxu0 %v4259
  %4281 = vmatprep.subr.bf16.mxu0 0
  %4282 = vmatpush1.bf16.msra.mxu0 %v4260
  %4283 = vmatprep.subr.bf16.mxu0 0
  %4284 = vmatpush1.bf16.msra.mxu0 %v4261
  %4285 = vmatprep.subr.bf16.mxu0 0
  %4286 = vmatpush1.bf16.msra.mxu0 %v4262
  %4287 = vmatprep.subr.bf16.mxu0 0
  %4288 = vmatpush1.bf16.msra.mxu0 0
  %4289 = vmatprep.subr.bf16.mxu0 0
  %4290 = vmatpush1.bf16.msra.mxu0 0
  %4291 = vmatprep.subr.bf16.mxu0 0
  %4292 = vmatpush1.bf16.msra.mxu0 0
  %4293 = vmatprep.subr.bf16.mxu0 0
  %4294 = vmatpush1.bf16.msra.mxu0 0
  %4295 = vmatprep.subr.bf16.mxu0 0
  %4296 = vmatpush1.bf16.msra.mxu0 0
  %4297 = vmatprep.subr.bf16.mxu0 0
  %4298 = vmatpush1.bf16.msra.mxu0 0
  %4299 = vmatprep.subr.bf16.mxu0 0
  %4300 = vmatpush1.bf16.msra.mxu0 0
  %4301 = vmatprep.subr.bf16.mxu0 0
  %4302 = vmatpush1.bf16.msra.mxu0 0
  %4303 = vmatprep.mubr.bf16.mxu0 0
  %4304 = vmatmul.mubr.bf16.gmra.mrb[0].mxu0 %v4071
  %v4305 = vpop.f32.mrb[0].mxu0
  %v4306 = vadd.f32 0.0, %v4305
  %v4307 = vpop.f32.mrb[0].mxu0
  %v4308 = vpop.f32.mrb[0].mxu0
  %v4309 = vadd.f32 0.0, %v4308
  %v4310 = vpop.f32.mrb[0].mxu0
  %4311 = vdwg.mxu0
  %v4312 = vpack.c.bf16 %v4220, %v4217
  %v4313 = vpack.c.bf16 %v4309, %v4306
  %v4315 = vsel %vm1823, %v4122, 0
  %v4318 = vsel %vm1823, %v4123, 0
  %4320 = vmatprep.subr.bf16.mxu0 0
  %4321 = vmatpush1.bf16.msra.mxu0 %v4313
  %4322 = vmatprep.subr.bf16.mxu0 0
  %4323 = vmatpush1.bf16.msra.mxu0 0
  %4324 = vmatprep.subr.bf16.mxu0 0
  %4325 = vmatpush1.bf16.msra.mxu0 0
  %4326 = vmatprep.subr.bf16.mxu0 0
  %4327 = vmatpush1.bf16.msra.mxu0 0
  %4328 = vmatprep.subr.bf16.mxu0 0
  %4329 = vmatpush1.bf16.msra.mxu0 0
  %4330 = vmatprep.subr.bf16.mxu0 0
  %4331 = vmatpush1.bf16.msra.mxu0 0
  %4332 = vmatprep.subr.bf16.mxu0 0
  %4333 = vmatpush1.bf16.msra.mxu0 0
  %4334 = vmatprep.subr.bf16.mxu0 0
  %4335 = vmatpush1.bf16.msra.mxu0 0
  %4336 = vmatprep.subr.bf16.mxu0 0
  %4337 = vmatpush1.bf16.msra.mxu0 0
  %4338 = vmatprep.subr.bf16.mxu0 0
  %4339 = vmatpush1.bf16.msra.mxu0 0
  %4340 = vmatprep.subr.bf16.mxu0 0
  %4341 = vmatpush1.bf16.msra.mxu0 0
  %4342 = vmatprep.subr.bf16.mxu0 0
  %4343 = vmatpush1.bf16.msra.mxu0 0
  %4344 = vmatprep.subr.bf16.mxu0 0
  %4345 = vmatpush1.bf16.msra.mxu0 0
  %4346 = vmatprep.subr.bf16.mxu0 0
  %4347 = vmatpush1.bf16.msra.mxu0 0
  %4348 = vmatprep.subr.bf16.mxu0 0
  %4349 = vmatpush1.bf16.msra.mxu0 0
  %4350 = vmatprep.subr.bf16.mxu0 0
  %4351 = vmatpush1.bf16.msra.mxu0 0
  %4352 = vmatprep.mubr.bf16.mxu0 0
  %4353 = vmatmul.mubr.bf16.gmra.mrb[0].mxu0 %v4315
  %v4354 = vpop.f32.mrb[0].mxu0
  %v4355 = vadd.f32 0.0, %v4354
  %v4356 = vpop.f32.mrb[0].mxu0
  %v4357 = vpop.f32.mrb[0].mxu0
  %v4358 = vadd.f32 0.0, %v4357
  %v4359 = vpop.f32.mrb[0].mxu0
  %4360 = vmatprep.mubr.bf16.mxu0 0
  %4361 = vmatmul.mubr.bf16.gmra.mrb[0].mxu0 %v4318
  %v4362 = vpop.f32.mrb[0].mxu0
  %v4363 = vadd.f32 0.0, %v4362
  %v4364 = vpop.f32.mrb[0].mxu0
  %v4365 = vpop.f32.mrb[0].mxu0
  %v4366 = vadd.f32 0.0, %v4365
  %v4367 = vpop.f32.mrb[0].mxu0
  %4368 = vdwg.mxu0
  %v4370 = vsel %vm1823, %v4096, 0
  %v4373 = vsel %vm1823, %v4097, 0
  %4375 = vmatprep.subr.bf16.mxu0 0
  %4376 = vmatpush1.bf16.msra.mxu0 %v4312
  %4377 = vmatprep.subr.bf16.mxu0 0
  %4378 = vmatpush1.bf16.msra.mxu0 0
  %4379 = vmatprep.subr.bf16.mxu0 0
  %4380 = vmatpush1.bf16.msra.mxu0 0
  %4381 = vmatprep.subr.bf16.mxu0 0
  %4382 = vmatpush1.bf16.msra.mxu0 0
  %4383 = vmatprep.subr.bf16.mxu0 0
  %4384 = vmatpush1.bf16.msra.mxu0 0
  %4385 = vmatprep.subr.bf16.mxu0 0
  %4386 = vmatpush1.bf16.msra.mxu0 0
  %4387 = vmatprep.subr.bf16.mxu0 0
  %4388 = vmatpush1.bf16.msra.mxu0 0
  %4389 = vmatprep.subr.bf16.mxu0 0
  %4390 = vmatpush1.bf16.msra.mxu0 0
  %4391 = vmatprep.subr.bf16.mxu0 0
  %4392 = vmatpush1.bf16.msra.mxu0 0
  %4393 = vmatprep.subr.bf16.mxu0 0
  %4394 = vmatpush1.bf16.msra.mxu0 0
  %4395 = vmatprep.subr.bf16.mxu0 0
  %4396 = vmatpush1.bf16.msra.mxu0 0
  %4397 = vmatprep.subr.bf16.mxu0 0
  %4398 = vmatpush1.bf16.msra.mxu0 0
  %4399 = vmatprep.subr.bf16.mxu0 0
  %4400 = vmatpush1.bf16.msra.mxu0 0
  %4401 = vmatprep.subr.bf16.mxu0 0
  %4402 = vmatpush1.bf16.msra.mxu0 0
  %4403 = vmatprep.subr.bf16.mxu0 0
  %4404 = vmatpush1.bf16.msra.mxu0 0
  %4405 = vmatprep.subr.bf16.mxu0 0
  %4406 = vmatpush1.bf16.msra.mxu0 0
  %4407 = vmatprep.mubr.bf16.mxu0 0
  %4408 = vmatmul.mubr.bf16.gmra.mrb[0].mxu0 %v4370
  %v4409 = vpop.f32.mrb[0].mxu0
  %v4410 = vadd.f32 %v4355, %v4409
  %v4411 = vpop.f32.mrb[0].mxu0
  %v4412 = vpop.f32.mrb[0].mxu0
  %v4413 = vadd.f32 %v4358, %v4412
  %v4414 = vpop.f32.mrb[0].mxu0
  %4415 = vmatprep.mubr.bf16.mxu0 0
  %4416 = vmatmul.mubr.bf16.gmra.mrb[0].mxu0 %v4373
  %v4417 = vpop.f32.mrb[0].mxu0
  %v4418 = vadd.f32 %v4363, %v4417
  %v4419 = vpop.f32.mrb[0].mxu0
  %v4420 = vpop.f32.mrb[0].mxu0
  %v4421 = vadd.f32 %v4366, %v4420
  %v4422 = vpop.f32.mrb[0].mxu0
  %4423 = vdwg.mxu0
  %v4424 = vpack.c.bf16 %v4068, %v4067
  %v4425 = vpack.c.bf16 %v4070, %v4069
  %v4442 = vunpack.c.l.b16 %v3983
  %v4443 = vunpack.c.l.b16 %v3984
  %v4444 = vunpack.c.l.b16 %v3985
  %v4445 = vunpack.c.l.b16 %v3986
  %v4446 = vunpack.c.l.b16 %v3987
  %v4447 = vunpack.c.l.b16 %v3988
  %v4448 = vunpack.c.l.b16 %v3989
  %v4449 = vunpack.c.l.b16 %v3990
  %v4450 = vunpack.c.l.b16 %v3991
  %v4451 = vunpack.c.l.b16 %v3992
  %v4452 = vunpack.c.l.b16 %v3993
  %v4453 = vunpack.c.l.b16 %v3994
  %v4454 = vunpack.c.l.b16 %v3995
  %v4455 = vunpack.c.l.b16 %v3996
  %v4456 = vunpack.c.l.b16 %v3997
  %v4457 = vunpack.c.l.b16 %v3998
  %v4458 = vpack.c.b16 %v4443, %v4442
  %v4459 = vpack.c.b16 %v4445, %v4444
  %v4460 = vpack.c.b16 %v4447, %v4446
  %v4461 = vpack.c.b16 %v4449, %v4448
  %v4462 = vpack.c.b16 %v4451, %v4450
  %v4463 = vpack.c.b16 %v4453, %v4452
  %v4464 = vpack.c.b16 %v4455, %v4454
  %v4465 = vpack.c.b16 %v4457, %v4456
  %4474 = vmatprep.subr.bf16.mxu0 0
  %4475 = vmatpush1.bf16.msra.mxu0 %v4458
  %4476 = vmatprep.subr.bf16.mxu0 0
  %4477 = vmatpush1.bf16.msra.mxu0 %v4459
  %4478 = vmatprep.subr.bf16.mxu0 0
  %4479 = vmatpush1.bf16.msra.mxu0 %v4460
  %4480 = vmatprep.subr.bf16.mxu0 0
  %4481 = vmatpush1.bf16.msra.mxu0 %v4461
  %4482 = vmatprep.subr.bf16.mxu0 0
  %4483 = vmatpush1.bf16.msra.mxu0 %v4462
  %4484 = vmatprep.subr.bf16.mxu0 0
  %4485 = vmatpush1.bf16.msra.mxu0 %v4463
  %4486 = vmatprep.subr.bf16.mxu0 0
  %4487 = vmatpush1.bf16.msra.mxu0 %v4464
  %4488 = vmatprep.subr.bf16.mxu0 0
  %4489 = vmatpush1.bf16.msra.mxu0 %v4465
  %4490 = vmatprep.subr.bf16.mxu0 0
  %4491 = vmatpush1.bf16.msra.mxu0 0
  %4492 = vmatprep.subr.bf16.mxu0 0
  %4493 = vmatpush1.bf16.msra.mxu0 0
  %4494 = vmatprep.subr.bf16.mxu0 0
  %4495 = vmatpush1.bf16.msra.mxu0 0
  %4496 = vmatprep.subr.bf16.mxu0 0
  %4497 = vmatpush1.bf16.msra.mxu0 0
  %4498 = vmatprep.subr.bf16.mxu0 0
  %4499 = vmatpush1.bf16.msra.mxu0 0
  %4500 = vmatprep.subr.bf16.mxu0 0
  %4501 = vmatpush1.bf16.msra.mxu0 0
  %4502 = vmatprep.subr.bf16.mxu0 0
  %4503 = vmatpush1.bf16.msra.mxu0 0
  %4504 = vmatprep.subr.bf16.mxu0 0
  %4505 = vmatpush1.bf16.msra.mxu0 0
  %4506 = vmatprep.mubr.bf16.mxu0 0
  %4507 = vmatmul.mubr.bf16.gmra.mrb[0].mxu0 %v4424
  %v4508 = vpop.f32.mrb[0].mxu0
  %v4509 = vadd.f32 0.0, %v4508
  %v4510 = vpop.f32.mrb[0].mxu0
  %v4511 = vpop.f32.mrb[0].mxu0
  %v4512 = vadd.f32 0.0, %v4511
  %v4513 = vpop.f32.mrb[0].mxu0
  %4514 = vmatprep.mubr.bf16.mxu0 0
  %4515 = vmatmul.mubr.bf16.gmra.mrb[0].mxu0 %v4425
  %v4516 = vpop.f32.mrb[0].mxu0
  %v4517 = vadd.f32 0.0, %v4516
  %v4518 = vpop.f32.mrb[0].mxu0
  %v4519 = vpop.f32.mrb[0].mxu0
  %v4520 = vadd.f32 0.0, %v4519
  %v4521 = vpop.f32.mrb[0].mxu0
  %4522 = vdwg.mxu0
  %v4523 = vadd.f32 %v4410, %v4509
  %v4524 = vadd.f32 %v4413, %v4512
  %v4525 = vadd.f32 %v4418, %v4517
  %v4526 = vadd.f32 %v4421, %v4520
  %v4527 = vlaneseq
  %v4528 = vshrl.u32 %v4527, 7
  %v4529 = vsub.s32 0, %v4528
  %v4530 = vrot.slane %v4064, %v4529
  %v4531 = vadd.f32 %v4523, %v4530
  %v4532 = vadd.f32 %v4524, %v4530
  %v4533 = vadd.f32 %v4525, %v4530
  %v4534 = vadd.f32 %v4526, %v4530
  %v4535 = vmax.f32 %v4531, 0.0
  %v4536 = vmax.f32 %v4532, 0.0
  %v4537 = vmax.f32 %v4533, 0.0
  %v4538 = vmax.f32 %v4534, 0.0
  %v4539 = vpack.c.bf16 %v4536, %v4535
  %v4540 = vpack.c.bf16 %v4538, %v4537
  %v4541 = vlaneseq
  %v4542 = vshrl.u32 %v4541, 7
  %v4543 = vsub.s32 1, %v4542
  %v4544 = vrot.slane %v4064, %v4543
  %v4561 = vunpack.c.l.b16 %v3999
  %v4562 = vunpack.c.l.b16 %v4000
  %v4563 = vunpack.c.l.b16 %v4001
  %v4564 = vunpack.c.l.b16 %v4002
  %v4565 = vunpack.c.l.b16 %v4003
  %v4566 = vunpack.c.l.b16 %v4004
  %v4567 = vunpack.c.l.b16 %v4005
  %v4568 = vunpack.c.l.b16 %v4006
  %v4569 = vunpack.c.l.b16 %v4007
  %v4570 = vunpack.c.l.b16 %v4008
  %v4571 = vunpack.c.l.b16 %v4009
  %v4572 = vunpack.c.l.b16 %v4010
  %v4573 = vunpack.c.l.b16 %v4011
  %v4574 = vunpack.c.l.b16 %v4012
  %v4575 = vunpack.c.l.b16 %v4013
  %v4576 = vunpack.c.l.b16 %v4014
  %v4577 = vpack.c.b16 %v4562, %v4561
  %v4578 = vpack.c.b16 %v4564, %v4563
  %v4579 = vpack.c.b16 %v4566, %v4565
  %v4580 = vpack.c.b16 %v4568, %v4567
  %v4581 = vpack.c.b16 %v4570, %v4569
  %v4582 = vpack.c.b16 %v4572, %v4571
  %v4583 = vpack.c.b16 %v4574, %v4573
  %v4584 = vpack.c.b16 %v4576, %v4575
  %4593 = vmatprep.subr.bf16.mxu0 0
  %4594 = vmatpush1.bf16.msra.mxu0 %v4577
  %4595 = vmatprep.subr.bf16.mxu0 0
  %4596 = vmatpush1.bf16.msra.mxu0 %v4578
  %4597 = vmatprep.subr.bf16.mxu0 0
  %4598 = vmatpush1.bf16.msra.mxu0 %v4579
  %4599 = vmatprep.subr.bf16.mxu0 0
  %4600 = vmatpush1.bf16.msra.mxu0 %v4580
  %4601 = vmatprep.subr.bf16.mxu0 0
  %4602 = vmatpush1.bf16.msra.mxu0 %v4581
  %4603 = vmatprep.subr.bf16.mxu0 0
  %4604 = vmatpush1.bf16.msra.mxu0 %v4582
  %4605 = vmatprep.subr.bf16.mxu0 0
  %4606 = vmatpush1.bf16.msra.mxu0 %v4583
  %4607 = vmatprep.subr.bf16.mxu0 0
  %4608 = vmatpush1.bf16.msra.mxu0 %v4584
  %4609 = vmatprep.subr.bf16.mxu0 0
  %4610 = vmatpush1.bf16.msra.mxu0 0
  %4611 = vmatprep.subr.bf16.mxu0 0
  %4612 = vmatpush1.bf16.msra.mxu0 0
  %4613 = vmatprep.subr.bf16.mxu0 0
  %4614 = vmatpush1.bf16.msra.mxu0 0
  %4615 = vmatprep.subr.bf16.mxu0 0
  %4616 = vmatpush1.bf16.msra.mxu0 0
  %4617 = vmatprep.subr.bf16.mxu0 0
  %4618 = vmatpush1.bf16.msra.mxu0 0
  %4619 = vmatprep.subr.bf16.mxu0 0
  %4620 = vmatpush1.bf16.msra.mxu0 0
  %4621 = vmatprep.subr.bf16.mxu0 0
  %4622 = vmatpush1.bf16.msra.mxu0 0
  %4623 = vmatprep.subr.bf16.mxu0 0
  %4624 = vmatpush1.bf16.msra.mxu0 0
  %4625 = vmatprep.mubr.bf16.mxu0 0
  %4626 = vmatmul.mubr.bf16.gmra.mrb[0].mxu0 %v4539
  %v4627 = vpop.f32.mrb[0].mxu0
  %v4628 = vadd.f32 %v4544, %v4627
  %v4629 = vpop.f32.mrb[0].mxu0
  %v4630 = vpop.f32.mrb[0].mxu0
  %v4631 = vadd.f32 %v4544, %v4630
  %v4632 = vpop.f32.mrb[0].mxu0
  %4633 = vmatprep.mubr.bf16.mxu0 0
  %4634 = vmatmul.mubr.bf16.gmra.mrb[0].mxu0 %v4540
  %v4635 = vpop.f32.mrb[0].mxu0
  %v4636 = vadd.f32 %v4544, %v4635
  %v4637 = vpop.f32.mrb[0].mxu0
  %v4638 = vpop.f32.mrb[0].mxu0
  %v4639 = vadd.f32 %v4544, %v4638
  %v4640 = vpop.f32.mrb[0].mxu0
  %4641 = vdwg.mxu0
  %4642 = vadd.xlane.f32.xlu0 %v4628
  %v4643 = vpop.xlane.xlu0 %4642
  %4644 = vadd.xlane.f32.xlu0 %v4631
  %v4645 = vpop.xlane.xlu0 %4644
  %4646 = vadd.xlane.f32.xlu0 %v4636
  %v4647 = vpop.xlane.xlu0 %4646
  %4648 = vadd.xlane.f32.xlu0 %v4639
  %v4649 = vpop.xlane.xlu0 %4648
  %v4650 = vmul.f32 %v4643, 0.03125
  %v4651 = vmul.f32 %v4645, 0.03125
  %v4652 = vmul.f32 %v4647, 0.03125
  %v4653 = vmul.f32 %v4649, 0.03125
  %v4654 = vsub.f32 %v4628, %v4650
  %v4655 = vsub.f32 %v4631, %v4651
  %v4656 = vsub.f32 %v4636, %v4652
  %v4657 = vsub.f32 %v4639, %v4653
  %v4658 = vmul.f32 %v4654, %v52
  %v4659 = vmul.f32 %v4655, %v52
  %v4660 = vmul.f32 %v4656, %v52
  %v4661 = vmul.f32 %v4657, %v52
  %v4662 = vmul.f32 %v4658, %v4658
  %v4663 = vmul.f32 %v4659, %v4659
  %v4664 = vmul.f32 %v4660, %v4660
  %v4665 = vmul.f32 %v4661, %v4661
  %4666 = vadd.xlane.f32.xlu0 %v4662
  %v4667 = vpop.xlane.xlu0 %4666
  %4668 = vadd.xlane.f32.xlu0 %v4663
  %v4669 = vpop.xlane.xlu0 %4668
  %4670 = vadd.xlane.f32.xlu0 %v4664
  %v4671 = vpop.xlane.xlu0 %4670
  %4672 = vadd.xlane.f32.xlu0 %v4665
  %v4673 = vpop.xlane.xlu0 %4672
  %v4674 = vmul.f32 %v4667, 0.03125
  %v4675 = vmul.f32 %v4669, 0.03125
  %v4676 = vmul.f32 %v4671, 0.03125
  %v4677 = vmul.f32 %v4673, 0.03125
  %v4678 = vadd.f32 %v4674, 1e-05
  %v4679 = vadd.f32 %v4675, 1e-05
  %v4680 = vadd.f32 %v4676, 1e-05
  %v4681 = vadd.f32 %v4677, 1e-05
  %v4682 = vrsqrt.pop %v4678
  %v4683 = vrsqrt.pop %v4679
  %v4684 = vrsqrt.pop %v4680
  %v4685 = vrsqrt.pop %v4681
  %v4686 = vmul.f32 %v4658, %v4682
  %v4687 = vmul.f32 %v4659, %v4683
  %v4688 = vmul.f32 %v4660, %v4684
  %v4689 = vmul.f32 %v4661, %v4685
  %v4690 = vlaneseq
  %v4691 = vshrl.u32 %v4690, 7
  %v4692 = vsub.s32 2, %v4691
  %v4693 = vrot.slane %v4064, %v4692
  %v4694 = vmul.f32 %v4686, %v4693
  %v4695 = vmul.f32 %v4687, %v4693
  %v4696 = vmul.f32 %v4688, %v4693
  %v4697 = vmul.f32 %v4689, %v4693
  %v4698 = vlaneseq
  %v4699 = vshrl.u32 %v4698, 7
  %v4700 = vsub.s32 3, %v4699
  %v4701 = vrot.slane %v4064, %v4700
  %v4702 = vadd.f32 %v4694, %v4701
  %v4703 = vadd.f32 %v4695, %v4701
  %v4704 = vadd.f32 %v4696, %v4701
  %v4705 = vadd.f32 %v4697, %v4701
  %v4706 = vmul.f32 %v4702, %v1445
  %v4707 = vmul.f32 %v4703, %v1446
  %v4708 = vmul.f32 %v4704, %v1447
  %v4709 = vmul.f32 %v4705, %v1448
  %v4710 = vadd.f32 %v4067, %v4706
  %v4711 = vadd.f32 %v4068, %v4707
  %v4712 = vadd.f32 %v4069, %v4708
  %v4713 = vadd.f32 %v4070, %v4709
  %4714 = vst [vmem:[%s14] sm:$0xff] %v4710
  %4715 = vst [vmem:[%s14 + $0x8] sm:$0xff] %v4711
  %4716 = vst [vmem:[%s14 + $0x10] sm:$0xff] %v4712
  %4717 = vst [vmem:[%s14 + $0x18] sm:$0xff] %v4713
  %v4718 = vpack.c.bf16 %v4711, %v4710
  %v4719 = vpack.c.bf16 %v4713, %v4712
  %v4721 = vsel %vm498, %v4133, 0
  %4723 = vmatprep.subr.bf16.mxu0 0
  %4724 = vmatpush1.bf16.msra.mxu0 %v4718
  %4725 = vmatprep.subr.bf16.mxu0 0
  %4726 = vmatpush1.bf16.msra.mxu0 %v4719
  %4727 = vmatprep.subr.bf16.mxu0 0
  %4728 = vmatpush1.bf16.msra.mxu0 0
  %4729 = vmatprep.subr.bf16.mxu0 0
  %4730 = vmatpush1.bf16.msra.mxu0 0
  %4731 = vmatprep.subr.bf16.mxu0 0
  %4732 = vmatpush1.bf16.msra.mxu0 0
  %4733 = vmatprep.subr.bf16.mxu0 0
  %4734 = vmatpush1.bf16.msra.mxu0 0
  %4735 = vmatprep.subr.bf16.mxu0 0
  %4736 = vmatpush1.bf16.msra.mxu0 0
  %4737 = vmatprep.subr.bf16.mxu0 0
  %4738 = vmatpush1.bf16.msra.mxu0 0
  %4739 = vmatprep.subr.bf16.mxu0 0
  %4740 = vmatpush1.bf16.msra.mxu0 0
  %4741 = vmatprep.subr.bf16.mxu0 0
  %4742 = vmatpush1.bf16.msra.mxu0 0
  %4743 = vmatprep.subr.bf16.mxu0 0
  %4744 = vmatpush1.bf16.msra.mxu0 0
  %4745 = vmatprep.subr.bf16.mxu0 0
  %4746 = vmatpush1.bf16.msra.mxu0 0
  %4747 = vmatprep.subr.bf16.mxu0 0
  %4748 = vmatpush1.bf16.msra.mxu0 0
  %4749 = vmatprep.subr.bf16.mxu0 0
  %4750 = vmatpush1.bf16.msra.mxu0 0
  %4751 = vmatprep.subr.bf16.mxu0 0
  %4752 = vmatpush1.bf16.msra.mxu0 0
  %4753 = vmatprep.subr.bf16.mxu0 0
  %4754 = vmatpush1.bf16.msra.mxu0 0
  %4755 = vmatprep.mubr.bf16.mxu0 0
  %4756 = vmatmul.mubr.bf16.gmra.mrb[0].mxu0 %v4721
  %v4757 = vpop.f32.mrb[0].mxu0
  %v4758 = vadd.f32 0.0, %v4757
  %v4759 = vpop.f32.mrb[0].mxu0
  %v4760 = vpop.f32.mrb[0].mxu0
  %v4761 = vadd.f32 0.0, %v4760
  %v4762 = vpop.f32.mrb[0].mxu0
  %4763 = vdwg.mxu0
  %v4764 = vpack.c.bf16 %v4761, %v4758
  %v4781 = vunpack.c.l.b16 %v4031
  %v4782 = vunpack.c.l.b16 %v4032
  %v4783 = vunpack.c.l.b16 %v4033
  %v4784 = vunpack.c.l.b16 %v4034
  %v4785 = vunpack.c.l.b16 %v4035
  %v4786 = vunpack.c.l.b16 %v4036
  %v4787 = vunpack.c.l.b16 %v4037
  %v4788 = vunpack.c.l.b16 %v4038
  %v4789 = vunpack.c.l.b16 %v4039
  %v4790 = vunpack.c.l.b16 %v4040
  %v4791 = vunpack.c.l.b16 %v4041
  %v4792 = vunpack.c.l.b16 %v4042
  %v4793 = vunpack.c.l.b16 %v4043
  %v4794 = vunpack.c.l.b16 %v4044
  %v4795 = vunpack.c.l.b16 %v4045
  %v4796 = vunpack.c.l.b16 %v4046
  %v4797 = vpack.c.b16 %v4782, %v4781
  %v4798 = vpack.c.b16 %v4784, %v4783
  %v4799 = vpack.c.b16 %v4786, %v4785
  %v4800 = vpack.c.b16 %v4788, %v4787
  %v4801 = vpack.c.b16 %v4790, %v4789
  %v4802 = vpack.c.b16 %v4792, %v4791
  %v4803 = vpack.c.b16 %v4794, %v4793
  %v4804 = vpack.c.b16 %v4796, %v4795
  %4813 = vmatprep.subr.bf16.mxu0 0
  %4814 = vmatpush1.bf16.msra.mxu0 %v4797
  %4815 = vmatprep.subr.bf16.mxu0 0
  %4816 = vmatpush1.bf16.msra.mxu0 %v4798
  %4817 = vmatprep.subr.bf16.mxu0 0
  %4818 = vmatpush1.bf16.msra.mxu0 %v4799
  %4819 = vmatprep.subr.bf16.mxu0 0
  %4820 = vmatpush1.bf16.msra.mxu0 %v4800
  %4821 = vmatprep.subr.bf16.mxu0 0
  %4822 = vmatpush1.bf16.msra.mxu0 %v4801
  %4823 = vmatprep.subr.bf16.mxu0 0
  %4824 = vmatpush1.bf16.msra.mxu0 %v4802
  %4825 = vmatprep.subr.bf16.mxu0 0
  %4826 = vmatpush1.bf16.msra.mxu0 %v4803
  %4827 = vmatprep.subr.bf16.mxu0 0
  %4828 = vmatpush1.bf16.msra.mxu0 %v4804
  %4829 = vmatprep.subr.bf16.mxu0 0
  %4830 = vmatpush1.bf16.msra.mxu0 0
  %4831 = vmatprep.subr.bf16.mxu0 0
  %4832 = vmatpush1.bf16.msra.mxu0 0
  %4833 = vmatprep.subr.bf16.mxu0 0
  %4834 = vmatpush1.bf16.msra.mxu0 0
  %4835 = vmatprep.subr.bf16.mxu0 0
  %4836 = vmatpush1.bf16.msra.mxu0 0
  %4837 = vmatprep.subr.bf16.mxu0 0
  %4838 = vmatpush1.bf16.msra.mxu0 0
  %4839 = vmatprep.subr.bf16.mxu0 0
  %4840 = vmatpush1.bf16.msra.mxu0 0
  %4841 = vmatprep.subr.bf16.mxu0 0
  %4842 = vmatpush1.bf16.msra.mxu0 0
  %4843 = vmatprep.subr.bf16.mxu0 0
  %4844 = vmatpush1.bf16.msra.mxu0 0
  %4845 = vmatprep.mubr.bf16.mxu0 0
  %4846 = vmatmul.mubr.bf16.gmra.mrb[0].mxu0 %v4764
  %v4847 = vpop.f32.mrb[0].mxu0
  %v4848 = vadd.f32 0.0, %v4847
  %v4849 = vpop.f32.mrb[0].mxu0
  %v4850 = vpop.f32.mrb[0].mxu0
  %v4851 = vadd.f32 0.0, %v4850
  %v4852 = vpop.f32.mrb[0].mxu0
  %4853 = vdwg.mxu0
  %v4870 = vunpack.c.l.b16 %v4015
  %v4871 = vunpack.c.l.b16 %v4016
  %v4872 = vunpack.c.l.b16 %v4017
  %v4873 = vunpack.c.l.b16 %v4018
  %v4874 = vunpack.c.l.b16 %v4019
  %v4875 = vunpack.c.l.b16 %v4020
  %v4876 = vunpack.c.l.b16 %v4021
  %v4877 = vunpack.c.l.b16 %v4022
  %v4878 = vunpack.c.l.b16 %v4023
  %v4879 = vunpack.c.l.b16 %v4024
  %v4880 = vunpack.c.l.b16 %v4025
  %v4881 = vunpack.c.l.b16 %v4026
  %v4882 = vunpack.c.l.b16 %v4027
  %v4883 = vunpack.c.l.b16 %v4028
  %v4884 = vunpack.c.l.b16 %v4029
  %v4885 = vunpack.c.l.b16 %v4030
  %v4886 = vpack.c.b16 %v4871, %v4870
  %v4887 = vpack.c.b16 %v4873, %v4872
  %v4888 = vpack.c.b16 %v4875, %v4874
  %v4889 = vpack.c.b16 %v4877, %v4876
  %v4890 = vpack.c.b16 %v4879, %v4878
  %v4891 = vpack.c.b16 %v4881, %v4880
  %v4892 = vpack.c.b16 %v4883, %v4882
  %v4893 = vpack.c.b16 %v4885, %v4884
  %4902 = vmatprep.subr.bf16.mxu0 0
  %4903 = vmatpush1.bf16.msra.mxu0 %v4886
  %4904 = vmatprep.subr.bf16.mxu0 0
  %4905 = vmatpush1.bf16.msra.mxu0 %v4887
  %4906 = vmatprep.subr.bf16.mxu0 0
  %4907 = vmatpush1.bf16.msra.mxu0 %v4888
  %4908 = vmatprep.subr.bf16.mxu0 0
  %4909 = vmatpush1.bf16.msra.mxu0 %v4889
  %4910 = vmatprep.subr.bf16.mxu0 0
  %4911 = vmatpush1.bf16.msra.mxu0 %v4890
  %4912 = vmatprep.subr.bf16.mxu0 0
  %4913 = vmatpush1.bf16.msra.mxu0 %v4891
  %4914 = vmatprep.subr.bf16.mxu0 0
  %4915 = vmatpush1.bf16.msra.mxu0 %v4892
  %4916 = vmatprep.subr.bf16.mxu0 0
  %4917 = vmatpush1.bf16.msra.mxu0 %v4893
  %4918 = vmatprep.subr.bf16.mxu0 0
  %4919 = vmatpush1.bf16.msra.mxu0 0
  %4920 = vmatprep.subr.bf16.mxu0 0
  %4921 = vmatpush1.bf16.msra.mxu0 0
  %4922 = vmatprep.subr.bf16.mxu0 0
  %4923 = vmatpush1.bf16.msra.mxu0 0
  %4924 = vmatprep.subr.bf16.mxu0 0
  %4925 = vmatpush1.bf16.msra.mxu0 0
  %4926 = vmatprep.subr.bf16.mxu0 0
  %4927 = vmatpush1.bf16.msra.mxu0 0
  %4928 = vmatprep.subr.bf16.mxu0 0
  %4929 = vmatpush1.bf16.msra.mxu0 0
  %4930 = vmatprep.subr.bf16.mxu0 0
  %4931 = vmatpush1.bf16.msra.mxu0 0
  %4932 = vmatprep.subr.bf16.mxu0 0
  %4933 = vmatpush1.bf16.msra.mxu0 0
  %4934 = vmatprep.mubr.bf16.mxu0 0
  %4935 = vmatmul.mubr.bf16.gmra.mrb[0].mxu0 %v4071
  %v4936 = vpop.f32.mrb[0].mxu0
  %v4937 = vadd.f32 %v4848, %v4936
  %v4938 = vpop.f32.mrb[0].mxu0
  %v4939 = vpop.f32.mrb[0].mxu0
  %v4940 = vadd.f32 %v4851, %v4939
  %v4941 = vpop.f32.mrb[0].mxu0
  %4942 = vdwg.mxu0
  %v4943 = vlaneseq
  %v4944 = vshrl.u32 %v4943, 7
  %v4945 = vsub.s32 4, %v4944
  %v4946 = vrot.slane %v4064, %v4945
  %v4947 = vadd.f32 %v4937, %v4946
  %v4948 = vadd.f32 %v4940, %v4946
  %v4949 = vmax.f32 %v4947, 0.0
  %v4950 = vmax.f32 %v4948, 0.0
  %v4951 = vpack.c.bf16 %v4950, %v4949
  %v4952 = vlaneseq
  %v4953 = vshrl.u32 %v4952, 7
  %v4954 = vsub.s32 5, %v4953
  %v4955 = vrot.slane %v4064, %v4954
  %v4972 = vunpack.c.l.b16 %v4047
  %v4973 = vunpack.c.l.b16 %v4048
  %v4974 = vunpack.c.l.b16 %v4049
  %v4975 = vunpack.c.l.b16 %v4050
  %v4976 = vunpack.c.l.b16 %v4051
  %v4977 = vunpack.c.l.b16 %v4052
  %v4978 = vunpack.c.l.b16 %v4053
  %v4979 = vunpack.c.l.b16 %v4054
  %v4980 = vunpack.c.l.b16 %v4055
  %v4981 = vunpack.c.l.b16 %v4056
  %v4982 = vunpack.c.l.b16 %v4057
  %v4983 = vunpack.c.l.b16 %v4058
  %v4984 = vunpack.c.l.b16 %v4059
  %v4985 = vunpack.c.l.b16 %v4060
  %v4986 = vunpack.c.l.b16 %v4061
  %v4987 = vunpack.c.l.b16 %v4062
  %v4988 = vpack.c.b16 %v4973, %v4972
  %v4989 = vpack.c.b16 %v4975, %v4974
  %v4990 = vpack.c.b16 %v4977, %v4976
  %v4991 = vpack.c.b16 %v4979, %v4978
  %v4992 = vpack.c.b16 %v4981, %v4980
  %v4993 = vpack.c.b16 %v4983, %v4982
  %v4994 = vpack.c.b16 %v4985, %v4984
  %v4995 = vpack.c.b16 %v4987, %v4986
  %5004 = vmatprep.subr.bf16.mxu0 0
  %5005 = vmatpush1.bf16.msra.mxu0 %v4988
  %5006 = vmatprep.subr.bf16.mxu0 0
  %5007 = vmatpush1.bf16.msra.mxu0 %v4989
  %5008 = vmatprep.subr.bf16.mxu0 0
  %5009 = vmatpush1.bf16.msra.mxu0 %v4990
  %5010 = vmatprep.subr.bf16.mxu0 0
  %5011 = vmatpush1.bf16.msra.mxu0 %v4991
  %5012 = vmatprep.subr.bf16.mxu0 0
  %5013 = vmatpush1.bf16.msra.mxu0 %v4992
  %5014 = vmatprep.subr.bf16.mxu0 0
  %5015 = vmatpush1.bf16.msra.mxu0 %v4993
  %5016 = vmatprep.subr.bf16.mxu0 0
  %5017 = vmatpush1.bf16.msra.mxu0 %v4994
  %5018 = vmatprep.subr.bf16.mxu0 0
  %5019 = vmatpush1.bf16.msra.mxu0 %v4995
  %5020 = vmatprep.subr.bf16.mxu0 0
  %5021 = vmatpush1.bf16.msra.mxu0 0
  %5022 = vmatprep.subr.bf16.mxu0 0
  %5023 = vmatpush1.bf16.msra.mxu0 0
  %5024 = vmatprep.subr.bf16.mxu0 0
  %5025 = vmatpush1.bf16.msra.mxu0 0
  %5026 = vmatprep.subr.bf16.mxu0 0
  %5027 = vmatpush1.bf16.msra.mxu0 0
  %5028 = vmatprep.subr.bf16.mxu0 0
  %5029 = vmatpush1.bf16.msra.mxu0 0
  %5030 = vmatprep.subr.bf16.mxu0 0
  %5031 = vmatpush1.bf16.msra.mxu0 0
  %5032 = vmatprep.subr.bf16.mxu0 0
  %5033 = vmatpush1.bf16.msra.mxu0 0
  %5034 = vmatprep.subr.bf16.mxu0 0
  %5035 = vmatpush1.bf16.msra.mxu0 0
  %5036 = vmatprep.mubr.bf16.mxu0 0
  %5037 = vmatmul.mubr.bf16.gmra.mrb[0].mxu0 %v4951
  %v5038 = vpop.f32.mrb[0].mxu0
  %v5039 = vadd.f32 %v4955, %v5038
  %v5040 = vpop.f32.mrb[0].mxu0
  %v5041 = vpop.f32.mrb[0].mxu0
  %v5042 = vadd.f32 %v4955, %v5041
  %v5043 = vpop.f32.mrb[0].mxu0
  %5044 = vdwg.mxu0
  %5045 = vadd.xlane.f32.xlu0 %v5039
  %v5046 = vpop.xlane.xlu0 %5045
  %5047 = vadd.xlane.f32.xlu0 %v5042
  %v5048 = vpop.xlane.xlu0 %5047
  %v5049 = vmul.f32 %v5046, 0.03125
  %v5050 = vmul.f32 %v5048, 0.03125
  %v5051 = vsub.f32 %v5039, %v5049
  %v5052 = vsub.f32 %v5042, %v5050
  %v5053 = vmul.f32 %v5051, %v52
  %v5054 = vmul.f32 %v5052, %v52
  %v5055 = vmul.f32 %v5053, %v5053
  %v5056 = vmul.f32 %v5054, %v5054
  %5057 = vadd.xlane.f32.xlu0 %v5055
  %v5058 = vpop.xlane.xlu0 %5057
  %5059 = vadd.xlane.f32.xlu0 %v5056
  %v5060 = vpop.xlane.xlu0 %5059
  %v5061 = vmul.f32 %v5058, 0.03125
  %v5062 = vmul.f32 %v5060, 0.03125
  %v5063 = vadd.f32 %v5061, 1e-05
  %v5064 = vadd.f32 %v5062, 1e-05
  %v5065 = vrsqrt.pop %v5063
  %v5066 = vrsqrt.pop %v5064
  %v5067 = vmul.f32 %v5053, %v5065
  %v5068 = vmul.f32 %v5054, %v5066
  %v5069 = vlaneseq
  %v5070 = vshrl.u32 %v5069, 7
  %v5071 = vsub.s32 6, %v5070
  %v5072 = vrot.slane %v4064, %v5071
  %v5073 = vmul.f32 %v5067, %v5072
  %v5074 = vmul.f32 %v5068, %v5072
  %v5075 = vlaneseq
  %v5076 = vshrl.u32 %v5075, 7
  %v5077 = vsub.s32 7, %v5076
  %v5078 = vrot.slane %v4064, %v5077
  %v5079 = vadd.f32 %v5073, %v5078
  %v5080 = vadd.f32 %v5074, %v5078
  %v5081 = vmul.f32 %v5079, %v2595
  %v5082 = vmul.f32 %v5080, %v2596
  %v5083 = vadd.f32 %v4065, %v5081
  %v5084 = vadd.f32 %v4066, %v5082
  %5085 = vst [vmem:[%s13] sm:$0xff] %v5083
  %5086 = vst [vmem:[%s13 + $0x8] sm:$0xff] %v5084
  // Predicated region
  $region54: #{processor_forward.1} parent=0 // pred_check
    _
  $region55: #{processor_forward.1} parent=0 // pred_check_branch
    %5088 = sbr.rel (0) target = $region57
  $region56: #{processor_forward.1} parent=0 // pred_region
    _
  $region57: #{processor_forward.1} parent=0 // pred_fallthru
    _
  // Predicated region
  $region58: #{processor_forward.1} parent=0 // pred_check
    _
  $region59: #{processor_forward.1} parent=0 // pred_check_branch
    %5090 = sbr.rel (0) target = $region61
  $region60: #{processor_forward.1} parent=0 // pred_region
    _
  $region61: #{processor_forward.1} parent=0 // pred_fallthru
    _
  // Predicated region
  $region62: #{processor_forward.1} parent=0 // pred_check
    _
  $region63: #{processor_forward.1} parent=0 // pred_check_branch
    %5092 = sbr.rel (0) target = $region65
  $region64: #{processor_forward.1} parent=0 // pred_region
    _
  $region65: #{processor_forward.1} parent=0 // pred_fallthru
    _
  // Predicated region
  $region66: #{processor_forward.1} parent=0 // pred_check
    _
  $region67: #{processor_forward.1} parent=0 // pred_check_branch
    %5094 = sbr.rel (0) target = $region69
  $region68: #{processor_forward.1} parent=0 // pred_region
    _
  $region69: #{processor_forward.1} parent=0 // pred_fallthru
    _
  // Predicated region
  $region70: #{processor_forward.1} parent=0 // pred_check
    _
  $region71: #{processor_forward.1} parent=0 // pred_check_branch
    %5096 = sbr.rel (0) target = $region73
  $region72: #{processor_forward.1} parent=0 // pred_region
    _
  $region73: #{processor_forward.1} parent=0 // pred_fallthru
    _
  // Predicated region
  $region74: #{processor_forward.1} parent=0 // pred_check
    _
  $region75: #{processor_forward.1} parent=0 // pred_check_branch
    %5098 = sbr.rel (0) target = $region77
  $region76: #{processor_forward.1} parent=0 // pred_region
    _
  $region77: #{processor_forward.1} parent=0 // pred_fallthru
    _

</llo_original>
